<compile_context>
chip_gen: v7x
topology: tpu7x:2x2x1
jax: 0.10.0
libtpu: 0.0.40
codegen_flags: <defaults>
</compile_context>

<pallas_src>
import functools

import jax
import jax.numpy as jnp
from jax.experimental import pallas as pl
from jax.experimental.pallas import tpu as pltpu


def _log_sigmoid(x):
    # numerically stable logsigmoid(x) = min(x, 0) - log1p(exp(-|x|))
    return jnp.minimum(x, 0.0) - jnp.log1p(jnp.exp(-jnp.abs(x)))


def _skipgram_kernel(TB, K, D, B,
                     cid_ref, pid_ref, nid_ref,        # SMEM (scalar prefetch)
                     in_tab_ref, out_tab_ref,          # HBM refs (pl.ANY)
                     loss_ref,                         # (1, 1) per-tile partial
                     c_buf, p_buf, n_buf,              # VMEM gather buffers
                     c_sem, p_sem, n_sem):             # DMA semaphores
    t = pl.program_id(0)

    # --- Gather: issue all row DMAs for this B-tile, then wait (overlapped).
    copies = []
    for i in range(TB):                                # static unroll
        b = t * TB + i
        cid = cid_ref[b]
        pid = pid_ref[b]
        cp = pltpu.make_async_copy(in_tab_ref.at[pl.ds(cid, 1), :],
                                   c_buf.at[pl.ds(i, 1), :], c_sem.at[i])
        cp.start(); copies.append(cp)
        cp = pltpu.make_async_copy(out_tab_ref.at[pl.ds(pid, 1), :],
                                   p_buf.at[pl.ds(i, 1), :], p_sem.at[i])
        cp.start(); copies.append(cp)
        for k in range(K):
            nid = nid_ref[b, k]
            cp = pltpu.make_async_copy(out_tab_ref.at[pl.ds(nid, 1), :],
                                       n_buf.at[k, pl.ds(i, 1), :],
                                       n_sem.at[k, i])
            cp.start(); copies.append(cp)
    for cp in copies:
        cp.wait()

    # --- Compute: one slab-wide upcast, batched score math over the tile.
    c = c_buf[...].astype(jnp.float32)                       # (TB, D)
    p = p_buf[...].astype(jnp.float32)                       # (TB, D)
    ns = jnp.sum(n_buf[...].astype(jnp.float32), axis=0)     # (TB, D) sum over K

    pos_score = jnp.sum(c * p, axis=-1, keepdims=True)       # (TB, 1)
    neg_score = jnp.sum(c * ns, axis=-1, keepdims=True)      # (TB, 1)
    per_row = _log_sigmoid(pos_score) + _log_sigmoid(-neg_score)

    # Mask rows that are padding (B not a multiple of TB).
    row = t * TB + jax.lax.broadcasted_iota(jnp.int32, (TB, 1), 0)
    per_row = jnp.where(row < B, per_row, 0.0)

    # Partial of loss = -(sum pos_loss + sum neg_loss) for this tile.
    loss_ref[...] = -jnp.sum(per_row, axis=0, keepdims=True)


def skipgram_forward(input_embeds, output_embeds, center_id, pos_context_id,
                     neg_context_ids, *, tile_b=8):
    """Scalar Skipgram loss: -(sum_b logsigmoid(<c_b,p_b>) + logsigmoid(-sum_k <c_b,n_bk>))."""
    B = center_id.shape[0]
    K = neg_context_ids.shape[1]
    V, D = input_embeds.shape

    TB = tile_b                        # 8 for f32 tables; use 16 for bf16 tables
    num_tiles = (B + TB - 1) // TB
    B_pad = num_tiles * TB

    # Pad ids to a whole number of tiles (padded rows use id 0, masked in-kernel).
    cid = jnp.zeros((B_pad,), jnp.int32).at[:B].set(center_id.astype(jnp.int32))
    pid = jnp.zeros((B_pad,), jnp.int32).at[:B].set(pos_context_id.astype(jnp.int32))
    nid = jnp.zeros((B_pad, K), jnp.int32).at[:B].set(neg_context_ids.astype(jnp.int32))

    kernel = functools.partial(_skipgram_kernel, TB, K, D, B)

    grid_spec = pltpu.PrefetchScalarGridSpec(
        num_scalar_prefetch=3,
        grid=(num_tiles,),
        in_specs=[
            pl.BlockSpec(memory_space=pl.ANY),    # input_embeds, stays in HBM
            pl.BlockSpec(memory_space=pl.ANY),    # output_embeds, stays in HBM
        ],
        out_specs=pl.BlockSpec((1, 1), lambda t, cid, pid, nid: (t, 0)),
        scratch_shapes=[
            pltpu.VMEM((TB, D), input_embeds.dtype),     # center rows
            pltpu.VMEM((TB, D), output_embeds.dtype),    # positive-context rows
            pltpu.VMEM((K, TB, D), output_embeds.dtype), # negative-context rows
            pltpu.SemaphoreType.DMA((TB,)),
            pltpu.SemaphoreType.DMA((TB,)),
            pltpu.SemaphoreType.DMA((K, TB)),
        ],
    )

    partials = pl.pallas_call(
        kernel,
        out_shape=jax.ShapeDtypeStruct((num_tiles, 1), jnp.float32),
        grid_spec=grid_spec,
        compiler_params=pltpu.CompilerParams(
            # Per-tile partial losses -> B-tile axis is independent ("parallel");
            # on v7x both TensorCores can take tiles. Partials summed below.
            dimension_semantics=("parallel",)),
    )(cid, pid, nid, input_embeds, output_embeds)

    return jnp.sum(partials)


def _reference_forward(input_embeds, output_embeds, center_id, pos_context_id,
                       neg_context_ids):
    center = input_embeds[center_id].astype(jnp.float32)       # (B, D)
    pos = output_embeds[pos_context_id].astype(jnp.float32)    # (B, D)
    neg = output_embeds[neg_context_ids].astype(jnp.float32)   # (B, K, D)
    pos_score = jnp.sum(center * pos, axis=1)                  # (B,)
    pos_loss = jax.nn.log_sigmoid(pos_score)
    neg_score = jnp.sum(jnp.einsum("bkd,bd->bk", neg, center), axis=1)  # (B,)
    neg_loss = jax.nn.log_sigmoid(-neg_score)
    return -(jnp.sum(pos_loss) + jnp.sum(neg_loss))


if __name__ == "__main__":
    vocab_size = 64
    embed_dim = 128    # lane-dense (multiple of 128)
    batch = 8          # number of (center, pos) pairs
    num_neg = 4        # negative samples per pair

    key = jax.random.PRNGKey(0)
    k_in, k_out, k_c, k_p, k_n = jax.random.split(key, 5)

    initrange = 0.5 / embed_dim
    # PyTorch init: input_embeds ~ U(-initrange, initrange); output_embeds = 0.
    # Zero output embeds give a trivial constant loss, so for a meaningful
    # synthetic check we initialize output_embeds with the same small uniform.
    input_embeds = jax.random.uniform(
        k_in, (vocab_size, embed_dim), jnp.float32, -initrange, initrange)
    output_embeds = jax.random.uniform(
        k_out, (vocab_size, embed_dim), jnp.float32, -initrange, initrange)

    center_id = jax.random.randint(k_c, (batch,), 0, vocab_size, jnp.int32)
    pos_context_id = jax.random.randint(k_p, (batch,), 0, vocab_size, jnp.int32)
    neg_context_ids = jax.random.randint(
        k_n, (batch, num_neg), 0, vocab_size, jnp.int32)

    loss = skipgram_forward(input_embeds, output_embeds, center_id,
                            pos_context_id, neg_context_ids)
    jax.block_until_ready(loss)

    ref = _reference_forward(input_embeds, output_embeds, center_id,
                             pos_context_id, neg_context_ids)
    assert jnp.allclose(loss, ref, rtol=1e-5, atol=1e-5), (loss, ref)

    print("KERNEL_OK")
</pallas_src>

<mosaic_0001>
module attributes {stable_mosaic.version = 11 : i64} {
  func.func @_skipgram_kernel(%arg0: i32, %arg1: memref<8xi32, #tpu.memory_space<smem>>, %arg2: memref<8xi32, #tpu.memory_space<smem>>, %arg3: memref<8x4xi32, #tpu.memory_space<smem>>, %arg4: memref<64x128xf32, #tpu.memory_space<any>>, %arg5: memref<64x128xf32, #tpu.memory_space<any>>, %arg6: memref<1x1xf32, #tpu.memory_space<vmem>>, %arg7: memref<8x128xf32, #tpu.memory_space<vmem>>, %arg8: memref<8x128xf32, #tpu.memory_space<vmem>>, %arg9: memref<4x8x128xf32, #tpu.memory_space<vmem>>, %arg10: memref<8x!tpu.dma_semaphore, #tpu.memory_space<semaphore_mem>>, %arg11: memref<8x!tpu.dma_semaphore, #tpu.memory_space<semaphore_mem>>, %arg12: memref<4x8x!tpu.dma_semaphore, #tpu.memory_space<semaphore_mem>>) attributes {dimension_semantics = [#tpu.dimension_semantics<parallel>], iteration_bounds = array<i64: 1>, scalar_prefetch = 3 : i64, scratch_operands = 6 : i64, tpu.core_type = #tpu.core_type<tc>, window_params = [{}, {}, {transform_indices = @transform_2, window_bounds = array<i64: 1, 1>}]} {
    %c8_i32 = arith.constant 8 : i32
    %0 = arith.muli %arg0, %c8_i32 : i32
    %c0_i32 = arith.constant 0 : i32
    %1 = arith.addi %0, %c0_i32 : i32
    %2 = arith.index_cast %1 : i32 to index
    %3 = memref.load %arg1[%2] : memref<8xi32, #tpu.memory_space<smem>>
    %4 = arith.index_cast %1 : i32 to index
    %5 = memref.load %arg2[%4] : memref<8xi32, #tpu.memory_space<smem>>
    %c0_i32_0 = arith.constant 0 : i32
    %c0_i32_1 = arith.constant 0 : i32
    %6 = tpu.memref_slice %arg4[%3, %c0_i32_1] : memref<64x128xf32, #tpu.memory_space<any>> -> memref<1x128xf32, #tpu.memory_space<any>>
    %c0_i32_2 = arith.constant 0 : i32
    %c0_i32_3 = arith.constant 0 : i32
    %7 = tpu.memref_slice %arg7[%c0_i32_2, %c0_i32_3] : memref<8x128xf32, #tpu.memory_space<vmem>> -> memref<1x128xf32, #tpu.memory_space<vmem>>
    %8 = tpu.memref_slice %arg10[%c0_i32_0] : memref<8x!tpu.dma_semaphore, #tpu.memory_space<semaphore_mem>> -> memref<1x!tpu.dma_semaphore, #tpu.memory_space<semaphore_mem>>
    %9 = tpu.memref_squeeze %8 : memref<1x!tpu.dma_semaphore, #tpu.memory_space<semaphore_mem>> -> memref<!tpu.dma_semaphore, #tpu.memory_space<semaphore_mem>>
    tpu.enqueue_dma source(%6 : memref<1x128xf32, #tpu.memory_space<any>>) target(%7 : memref<1x128xf32, #tpu.memory_space<vmem>>) target_semaphore(%9 : memref<!tpu.dma_semaphore, #tpu.memory_space<semaphore_mem>>)
    %c0_i32_4 = arith.constant 0 : i32
    %c0_i32_5 = arith.constant 0 : i32
    %10 = tpu.memref_slice %arg5[%5, %c0_i32_5] : memref<64x128xf32, #tpu.memory_space<any>> -> memref<1x128xf32, #tpu.memory_space<any>>
    %c0_i32_6 = arith.constant 0 : i32
    %c0_i32_7 = arith.constant 0 : i32
    %11 = tpu.memref_slice %arg8[%c0_i32_6, %c0_i32_7] : memref<8x128xf32, #tpu.memory_space<vmem>> -> memref<1x128xf32, #tpu.memory_space<vmem>>
    %12 = tpu.memref_slice %arg11[%c0_i32_4] : memref<8x!tpu.dma_semaphore, #tpu.memory_space<semaphore_mem>> -> memref<1x!tpu.dma_semaphore, #tpu.memory_space<semaphore_mem>>
    %13 = tpu.memref_squeeze %12 : memref<1x!tpu.dma_semaphore, #tpu.memory_space<semaphore_mem>> -> memref<!tpu.dma_semaphore, #tpu.memory_space<semaphore_mem>>
    tpu.enqueue_dma source(%10 : memref<1x128xf32, #tpu.memory_space<any>>) target(%11 : memref<1x128xf32, #tpu.memory_space<vmem>>) target_semaphore(%13 : memref<!tpu.dma_semaphore, #tpu.memory_space<semaphore_mem>>)
    %14 = arith.index_cast %1 : i32 to index
    %c0 = arith.constant 0 : index
    %15 = memref.load %arg3[%14, %c0] : memref<8x4xi32, #tpu.memory_space<smem>>
    %c0_i32_8 = arith.constant 0 : i32
    %c0_i32_9 = arith.constant 0 : i32
    %c0_i32_10 = arith.constant 0 : i32
    %c0_i32_11 = arith.constant 0 : i32
    %16 = tpu.memref_slice %arg5[%15, %c0_i32_11] : memref<64x128xf32, #tpu.memory_space<any>> -> memref<1x128xf32, #tpu.memory_space<any>>
    %c0_i32_12 = arith.constant 0 : i32
    %c0_i32_13 = arith.constant 0 : i32
    %17 = tpu.memref_slice %arg9[%c0_i32_8, %c0_i32_12, %c0_i32_13] : memref<4x8x128xf32, #tpu.memory_space<vmem>> -> memref<1x1x128xf32, #tpu.memory_space<vmem>>
    %18 = tpu.memref_squeeze %17 : memref<1x1x128xf32, #tpu.memory_space<vmem>> -> memref<1x128xf32, #tpu.memory_space<vmem>>
    %19 = tpu.memref_slice %arg12[%c0_i32_9, %c0_i32_10] : memref<4x8x!tpu.dma_semaphore, #tpu.memory_space<semaphore_mem>> -> memref<1x1x!tpu.dma_semaphore, #tpu.memory_space<semaphore_mem>>
    %20 = tpu.memref_squeeze %19 : memref<1x1x!tpu.dma_semaphore, #tpu.memory_space<semaphore_mem>> -> memref<!tpu.dma_semaphore, #tpu.memory_space<semaphore_mem>>
    tpu.enqueue_dma source(%16 : memref<1x128xf32, #tpu.memory_space<any>>) target(%18 : memref<1x128xf32, #tpu.memory_space<vmem>>) target_semaphore(%20 : memref<!tpu.dma_semaphore, #tpu.memory_space<semaphore_mem>>)
    %21 = arith.index_cast %1 : i32 to index
    %c1 = arith.constant 1 : index
    %22 = memref.load %arg3[%21, %c1] : memref<8x4xi32, #tpu.memory_space<smem>>
    %c1_i32 = arith.constant 1 : i32
    %c1_i32_14 = arith.constant 1 : i32
    %c0_i32_15 = arith.constant 0 : i32
    %c0_i32_16 = arith.constant 0 : i32
    %23 = tpu.memref_slice %arg5[%22, %c0_i32_16] : memref<64x128xf32, #tpu.memory_space<any>> -> memref<1x128xf32, #tpu.memory_space<any>>
    %c0_i32_17 = arith.constant 0 : i32
    %c0_i32_18 = arith.constant 0 : i32
    %24 = tpu.memref_slice %arg9[%c1_i32, %c0_i32_17, %c0_i32_18] : memref<4x8x128xf32, #tpu.memory_space<vmem>> -> memref<1x1x128xf32, #tpu.memory_space<vmem>>
    %25 = tpu.memref_squeeze %24 : memref<1x1x128xf32, #tpu.memory_space<vmem>> -> memref<1x128xf32, #tpu.memory_space<vmem>>
    %26 = tpu.memref_slice %arg12[%c1_i32_14, %c0_i32_15] : memref<4x8x!tpu.dma_semaphore, #tpu.memory_space<semaphore_mem>> -> memref<1x1x!tpu.dma_semaphore, #tpu.memory_space<semaphore_mem>>
    %27 = tpu.memref_squeeze %26 : memref<1x1x!tpu.dma_semaphore, #tpu.memory_space<semaphore_mem>> -> memref<!tpu.dma_semaphore, #tpu.memory_space<semaphore_mem>>
    tpu.enqueue_dma source(%23 : memref<1x128xf32, #tpu.memory_space<any>>) target(%25 : memref<1x128xf32, #tpu.memory_space<vmem>>) target_semaphore(%27 : memref<!tpu.dma_semaphore, #tpu.memory_space<semaphore_mem>>)
    %28 = arith.index_cast %1 : i32 to index
    %c2 = arith.constant 2 : index
    %29 = memref.load %arg3[%28, %c2] : memref<8x4xi32, #tpu.memory_space<smem>>
    %c2_i32 = arith.constant 2 : i32
    %c2_i32_19 = arith.constant 2 : i32
    %c0_i32_20 = arith.constant 0 : i32
    %c0_i32_21 = arith.constant 0 : i32
    %30 = tpu.memref_slice %arg5[%29, %c0_i32_21] : memref<64x128xf32, #tpu.memory_space<any>> -> memref<1x128xf32, #tpu.memory_space<any>>
    %c0_i32_22 = arith.constant 0 : i32
    %c0_i32_23 = arith.constant 0 : i32
    %31 = tpu.memref_slice %arg9[%c2_i32, %c0_i32_22, %c0_i32_23] : memref<4x8x128xf32, #tpu.memory_space<vmem>> -> memref<1x1x128xf32, #tpu.memory_space<vmem>>
    %32 = tpu.memref_squeeze %31 : memref<1x1x128xf32, #tpu.memory_space<vmem>> -> memref<1x128xf32, #tpu.memory_space<vmem>>
    %33 = tpu.memref_slice %arg12[%c2_i32_19, %c0_i32_20] : memref<4x8x!tpu.dma_semaphore, #tpu.memory_space<semaphore_mem>> -> memref<1x1x!tpu.dma_semaphore, #tpu.memory_space<semaphore_mem>>
    %34 = tpu.memref_squeeze %33 : memref<1x1x!tpu.dma_semaphore, #tpu.memory_space<semaphore_mem>> -> memref<!tpu.dma_semaphore, #tpu.memory_space<semaphore_mem>>
    tpu.enqueue_dma source(%30 : memref<1x128xf32, #tpu.memory_space<any>>) target(%32 : memref<1x128xf32, #tpu.memory_space<vmem>>) target_semaphore(%34 : memref<!tpu.dma_semaphore, #tpu.memory_space<semaphore_mem>>)
    %35 = arith.index_cast %1 : i32 to index
    %c3 = arith.constant 3 : index
    %36 = memref.load %arg3[%35, %c3] : memref<8x4xi32, #tpu.memory_space<smem>>
    %c3_i32 = arith.constant 3 : i32
    %c3_i32_24 = arith.constant 3 : i32
    %c0_i32_25 = arith.constant 0 : i32
    %c0_i32_26 = arith.constant 0 : i32
    %37 = tpu.memref_slice %arg5[%36, %c0_i32_26] : memref<64x128xf32, #tpu.memory_space<any>> -> memref<1x128xf32, #tpu.memory_space<any>>
    %c0_i32_27 = arith.constant 0 : i32
    %c0_i32_28 = arith.constant 0 : i32
    %38 = tpu.memref_slice %arg9[%c3_i32, %c0_i32_27, %c0_i32_28] : memref<4x8x128xf32, #tpu.memory_space<vmem>> -> memref<1x1x128xf32, #tpu.memory_space<vmem>>
    %39 = tpu.memref_squeeze %38 : memref<1x1x128xf32, #tpu.memory_space<vmem>> -> memref<1x128xf32, #tpu.memory_space<vmem>>
    %40 = tpu.memref_slice %arg12[%c3_i32_24, %c0_i32_25] : memref<4x8x!tpu.dma_semaphore, #tpu.memory_space<semaphore_mem>> -> memref<1x1x!tpu.dma_semaphore, #tpu.memory_space<semaphore_mem>>
    %41 = tpu.memref_squeeze %40 : memref<1x1x!tpu.dma_semaphore, #tpu.memory_space<semaphore_mem>> -> memref<!tpu.dma_semaphore, #tpu.memory_space<semaphore_mem>>
    tpu.enqueue_dma source(%37 : memref<1x128xf32, #tpu.memory_space<any>>) target(%39 : memref<1x128xf32, #tpu.memory_space<vmem>>) target_semaphore(%41 : memref<!tpu.dma_semaphore, #tpu.memory_space<semaphore_mem>>)
    %c8_i32_29 = arith.constant 8 : i32
    %42 = arith.muli %arg0, %c8_i32_29 : i32
    %c1_i32_30 = arith.constant 1 : i32
    %43 = arith.addi %42, %c1_i32_30 : i32
    %44 = arith.index_cast %43 : i32 to index
    %45 = memref.load %arg1[%44] : memref<8xi32, #tpu.memory_space<smem>>
    %46 = arith.index_cast %43 : i32 to index
    %47 = memref.load %arg2[%46] : memref<8xi32, #tpu.memory_space<smem>>
    %c1_i32_31 = arith.constant 1 : i32
    %c0_i32_32 = arith.constant 0 : i32
    %48 = tpu.memref_slice %arg4[%45, %c0_i32_32] : memref<64x128xf32, #tpu.memory_space<any>> -> memref<1x128xf32, #tpu.memory_space<any>>
    %c1_i32_33 = arith.constant 1 : i32
    %c0_i32_34 = arith.constant 0 : i32
    %49 = tpu.memref_slice %arg7[%c1_i32_33, %c0_i32_34] : memref<8x128xf32, #tpu.memory_space<vmem>> -> memref<1x128xf32, #tpu.memory_space<vmem>>
    %50 = tpu.memref_slice %arg10[%c1_i32_31] : memref<8x!tpu.dma_semaphore, #tpu.memory_space<semaphore_mem>> -> memref<1x!tpu.dma_semaphore, #tpu.memory_space<semaphore_mem>>
    %51 = tpu.memref_squeeze %50 : memref<1x!tpu.dma_semaphore, #tpu.memory_space<semaphore_mem>> -> memref<!tpu.dma_semaphore, #tpu.memory_space<semaphore_mem>>
    tpu.enqueue_dma source(%48 : memref<1x128xf32, #tpu.memory_space<any>>) target(%49 : memref<1x128xf32, #tpu.memory_space<vmem>>) target_semaphore(%51 : memref<!tpu.dma_semaphore, #tpu.memory_space<semaphore_mem>>)
    %c1_i32_35 = arith.constant 1 : i32
    %c0_i32_36 = arith.constant 0 : i32
    %52 = tpu.memref_slice %arg5[%47, %c0_i32_36] : memref<64x128xf32, #tpu.memory_space<any>> -> memref<1x128xf32, #tpu.memory_space<any>>
    %c1_i32_37 = arith.constant 1 : i32
    %c0_i32_38 = arith.constant 0 : i32
    %53 = tpu.memref_slice %arg8[%c1_i32_37, %c0_i32_38] : memref<8x128xf32, #tpu.memory_space<vmem>> -> memref<1x128xf32, #tpu.memory_space<vmem>>
    %54 = tpu.memref_slice %arg11[%c1_i32_35] : memref<8x!tpu.dma_semaphore, #tpu.memory_space<semaphore_mem>> -> memref<1x!tpu.dma_semaphore, #tpu.memory_space<semaphore_mem>>
    %55 = tpu.memref_squeeze %54 : memref<1x!tpu.dma_semaphore, #tpu.memory_space<semaphore_mem>> -> memref<!tpu.dma_semaphore, #tpu.memory_space<semaphore_mem>>
    tpu.enqueue_dma source(%52 : memref<1x128xf32, #tpu.memory_space<any>>) target(%53 : memref<1x128xf32, #tpu.memory_space<vmem>>) target_semaphore(%55 : memref<!tpu.dma_semaphore, #tpu.memory_space<semaphore_mem>>)
    %56 = arith.index_cast %43 : i32 to index
    %c0_39 = arith.constant 0 : index
    %57 = memref.load %arg3[%56, %c0_39] : memref<8x4xi32, #tpu.memory_space<smem>>
    %c0_i32_40 = arith.constant 0 : i32
    %c0_i32_41 = arith.constant 0 : i32
    %c1_i32_42 = arith.constant 1 : i32
    %c0_i32_43 = arith.constant 0 : i32
    %58 = tpu.memref_slice %arg5[%57, %c0_i32_43] : memref<64x128xf32, #tpu.memory_space<any>> -> memref<1x128xf32, #tpu.memory_space<any>>
    %c1_i32_44 = arith.constant 1 : i32
    %c0_i32_45 = arith.constant 0 : i32
    %59 = tpu.memref_slice %arg9[%c0_i32_40, %c1_i32_44, %c0_i32_45] : memref<4x8x128xf32, #tpu.memory_space<vmem>> -> memref<1x1x128xf32, #tpu.memory_space<vmem>>
    %60 = tpu.memref_squeeze %59 : memref<1x1x128xf32, #tpu.memory_space<vmem>> -> memref<1x128xf32, #tpu.memory_space<vmem>>
    %61 = tpu.memref_slice %arg12[%c0_i32_41, %c1_i32_42] : memref<4x8x!tpu.dma_semaphore, #tpu.memory_space<semaphore_mem>> -> memref<1x1x!tpu.dma_semaphore, #tpu.memory_space<semaphore_mem>>
    %62 = tpu.memref_squeeze %61 : memref<1x1x!tpu.dma_semaphore, #tpu.memory_space<semaphore_mem>> -> memref<!tpu.dma_semaphore, #tpu.memory_space<semaphore_mem>>
    tpu.enqueue_dma source(%58 : memref<1x128xf32, #tpu.memory_space<any>>) target(%60 : memref<1x128xf32, #tpu.memory_space<vmem>>) target_semaphore(%62 : memref<!tpu.dma_semaphore, #tpu.memory_space<semaphore_mem>>)
    %63 = arith.index_cast %43 : i32 to index
    %c1_46 = arith.constant 1 : index
    %64 = memref.load %arg3[%63, %c1_46] : memref<8x4xi32, #tpu.memory_space<smem>>
    %c1_i32_47 = arith.constant 1 : i32
    %c1_i32_48 = arith.constant 1 : i32
    %c1_i32_49 = arith.constant 1 : i32
    %c0_i32_50 = arith.constant 0 : i32
    %65 = tpu.memref_slice %arg5[%64, %c0_i32_50] : memref<64x128xf32, #tpu.memory_space<any>> -> memref<1x128xf32, #tpu.memory_space<any>>
    %c1_i32_51 = arith.constant 1 : i32
    %c0_i32_52 = arith.constant 0 : i32
    %66 = tpu.memref_slice %arg9[%c1_i32_47, %c1_i32_51, %c0_i32_52] : memref<4x8x128xf32, #tpu.memory_space<vmem>> -> memref<1x1x128xf32, #tpu.memory_space<vmem>>
    %67 = tpu.memref_squeeze %66 : memref<1x1x128xf32, #tpu.memory_space<vmem>> -> memref<1x128xf32, #tpu.memory_space<vmem>>
    %68 = tpu.memref_slice %arg12[%c1_i32_48, %c1_i32_49] : memref<4x8x!tpu.dma_semaphore, #tpu.memory_space<semaphore_mem>> -> memref<1x1x!tpu.dma_semaphore, #tpu.memory_space<semaphore_mem>>
    %69 = tpu.memref_squeeze %68 : memref<1x1x!tpu.dma_semaphore, #tpu.memory_space<semaphore_mem>> -> memref<!tpu.dma_semaphore, #tpu.memory_space<semaphore_mem>>
    tpu.enqueue_dma source(%65 : memref<1x128xf32, #tpu.memory_space<any>>) target(%67 : memref<1x128xf32, #tpu.memory_space<vmem>>) target_semaphore(%69 : memref<!tpu.dma_semaphore, #tpu.memory_space<semaphore_mem>>)
    %70 = arith.index_cast %43 : i32 to index
    %c2_53 = arith.constant 2 : index
    %71 = memref.load %arg3[%70, %c2_53] : memref<8x4xi32, #tpu.memory_space<smem>>
    %c2_i32_54 = arith.constant 2 : i32
    %c2_i32_55 = arith.constant 2 : i32
    %c1_i32_56 = arith.constant 1 : i32
    %c0_i32_57 = arith.constant 0 : i32
    %72 = tpu.memref_slice %arg5[%71, %c0_i32_57] : memref<64x128xf32, #tpu.memory_space<any>> -> memref<1x128xf32, #tpu.memory_space<any>>
    %c1_i32_58 = arith.constant 1 : i32
    %c0_i32_59 = arith.constant 0 : i32
    %73 = tpu.memref_slice %arg9[%c2_i32_54, %c1_i32_58, %c0_i32_59] : memref<4x8x128xf32, #tpu.memory_space<vmem>> -> memref<1x1x128xf32, #tpu.memory_space<vmem>>
    %74 = tpu.memref_squeeze %73 : memref<1x1x128xf32, #tpu.memory_space<vmem>> -> memref<1x128xf32, #tpu.memory_space<vmem>>
    %75 = tpu.memref_slice %arg12[%c2_i32_55, %c1_i32_56] : memref<4x8x!tpu.dma_semaphore, #tpu.memory_space<semaphore_mem>> -> memref<1x1x!tpu.dma_semaphore, #tpu.memory_space<semaphore_mem>>
    %76 = tpu.memref_squeeze %75 : memref<1x1x!tpu.dma_semaphore, #tpu.memory_space<semaphore_mem>> -> memref<!tpu.dma_semaphore, #tpu.memory_space<semaphore_mem>>
    tpu.enqueue_dma source(%72 : memref<1x128xf32, #tpu.memory_space<any>>) target(%74 : memref<1x128xf32, #tpu.memory_space<vmem>>) target_semaphore(%76 : memref<!tpu.dma_semaphore, #tpu.memory_space<semaphore_mem>>)
    %77 = arith.index_cast %43 : i32 to index
    %c3_60 = arith.constant 3 : index
    %78 = memref.load %arg3[%77, %c3_60] : memref<8x4xi32, #tpu.memory_space<smem>>
    %c3_i32_61 = arith.constant 3 : i32
    %c3_i32_62 = arith.constant 3 : i32
    %c1_i32_63 = arith.constant 1 : i32
    %c0_i32_64 = arith.constant 0 : i32
    %79 = tpu.memref_slice %arg5[%78, %c0_i32_64] : memref<64x128xf32, #tpu.memory_space<any>> -> memref<1x128xf32, #tpu.memory_space<any>>
    %c1_i32_65 = arith.constant 1 : i32
    %c0_i32_66 = arith.constant 0 : i32
    %80 = tpu.memref_slice %arg9[%c3_i32_61, %c1_i32_65, %c0_i32_66] : memref<4x8x128xf32, #tpu.memory_space<vmem>> -> memref<1x1x128xf32, #tpu.memory_space<vmem>>
    %81 = tpu.memref_squeeze %80 : memref<1x1x128xf32, #tpu.memory_space<vmem>> -> memref<1x128xf32, #tpu.memory_space<vmem>>
    %82 = tpu.memref_slice %arg12[%c3_i32_62, %c1_i32_63] : memref<4x8x!tpu.dma_semaphore, #tpu.memory_space<semaphore_mem>> -> memref<1x1x!tpu.dma_semaphore, #tpu.memory_space<semaphore_mem>>
    %83 = tpu.memref_squeeze %82 : memref<1x1x!tpu.dma_semaphore, #tpu.memory_space<semaphore_mem>> -> memref<!tpu.dma_semaphore, #tpu.memory_space<semaphore_mem>>
    tpu.enqueue_dma source(%79 : memref<1x128xf32, #tpu.memory_space<any>>) target(%81 : memref<1x128xf32, #tpu.memory_space<vmem>>) target_semaphore(%83 : memref<!tpu.dma_semaphore, #tpu.memory_space<semaphore_mem>>)
    %c8_i32_67 = arith.constant 8 : i32
    %84 = arith.muli %arg0, %c8_i32_67 : i32
    %c2_i32_68 = arith.constant 2 : i32
    %85 = arith.addi %84, %c2_i32_68 : i32
    %86 = arith.index_cast %85 : i32 to index
    %87 = memref.load %arg1[%86] : memref<8xi32, #tpu.memory_space<smem>>
    %88 = arith.index_cast %85 : i32 to index
    %89 = memref.load %arg2[%88] : memref<8xi32, #tpu.memory_space<smem>>
    %c2_i32_69 = arith.constant 2 : i32
    %c0_i32_70 = arith.constant 0 : i32
    %90 = tpu.memref_slice %arg4[%87, %c0_i32_70] : memref<64x128xf32, #tpu.memory_space<any>> -> memref<1x128xf32, #tpu.memory_space<any>>
    %c2_i32_71 = arith.constant 2 : i32
    %c0_i32_72 = arith.constant 0 : i32
    %91 = tpu.memref_slice %arg7[%c2_i32_71, %c0_i32_72] : memref<8x128xf32, #tpu.memory_space<vmem>> -> memref<1x128xf32, #tpu.memory_space<vmem>>
    %92 = tpu.memref_slice %arg10[%c2_i32_69] : memref<8x!tpu.dma_semaphore, #tpu.memory_space<semaphore_mem>> -> memref<1x!tpu.dma_semaphore, #tpu.memory_space<semaphore_mem>>
    %93 = tpu.memref_squeeze %92 : memref<1x!tpu.dma_semaphore, #tpu.memory_space<semaphore_mem>> -> memref<!tpu.dma_semaphore, #tpu.memory_space<semaphore_mem>>
    tpu.enqueue_dma source(%90 : memref<1x128xf32, #tpu.memory_space<any>>) target(%91 : memref<1x128xf32, #tpu.memory_space<vmem>>) target_semaphore(%93 : memref<!tpu.dma_semaphore, #tpu.memory_space<semaphore_mem>>)
    %c2_i32_73 = arith.constant 2 : i32
    %c0_i32_74 = arith.constant 0 : i32
    %94 = tpu.memref_slice %arg5[%89, %c0_i32_74] : memref<64x128xf32, #tpu.memory_space<any>> -> memref<1x128xf32, #tpu.memory_space<any>>
    %c2_i32_75 = arith.constant 2 : i32
    %c0_i32_76 = arith.constant 0 : i32
    %95 = tpu.memref_slice %arg8[%c2_i32_75, %c0_i32_76] : memref<8x128xf32, #tpu.memory_space<vmem>> -> memref<1x128xf32, #tpu.memory_space<vmem>>
    %96 = tpu.memref_slice %arg11[%c2_i32_73] : memref<8x!tpu.dma_semaphore, #tpu.memory_space<semaphore_mem>> -> memref<1x!tpu.dma_semaphore, #tpu.memory_space<semaphore_mem>>
    %97 = tpu.memref_squeeze %96 : memref<1x!tpu.dma_semaphore, #tpu.memory_space<semaphore_mem>> -> memref<!tpu.dma_semaphore, #tpu.memory_space<semaphore_mem>>
    tpu.enqueue_dma source(%94 : memref<1x128xf32, #tpu.memory_space<any>>) target(%95 : memref<1x128xf32, #tpu.memory_space<vmem>>) target_semaphore(%97 : memref<!tpu.dma_semaphore, #tpu.memory_space<semaphore_mem>>)
    %98 = arith.index_cast %85 : i32 to index
    %c0_77 = arith.constant 0 : index
    %99 = memref.load %arg3[%98, %c0_77] : memref<8x4xi32, #tpu.memory_space<smem>>
    %c0_i32_78 = arith.constant 0 : i32
    %c0_i32_79 = arith.constant 0 : i32
    %c2_i32_80 = arith.constant 2 : i32
    %c0_i32_81 = arith.constant 0 : i32
    %100 = tpu.memref_slice %arg5[%99, %c0_i32_81] : memref<64x128xf32, #tpu.memory_space<any>> -> memref<1x128xf32, #tpu.memory_space<any>>
    %c2_i32_82 = arith.constant 2 : i32
    %c0_i32_83 = arith.constant 0 : i32
    %101 = tpu.memref_slice %arg9[%c0_i32_78, %c2_i32_82, %c0_i32_83] : memref<4x8x128xf32, #tpu.memory_space<vmem>> -> memref<1x1x128xf32, #tpu.memory_space<vmem>>
    %102 = tpu.memref_squeeze %101 : memref<1x1x128xf32, #tpu.memory_space<vmem>> -> memref<1x128xf32, #tpu.memory_space<vmem>>
    %103 = tpu.memref_slice %arg12[%c0_i32_79, %c2_i32_80] : memref<4x8x!tpu.dma_semaphore, #tpu.memory_space<semaphore_mem>> -> memref<1x1x!tpu.dma_semaphore, #tpu.memory_space<semaphore_mem>>
    %104 = tpu.memref_squeeze %103 : memref<1x1x!tpu.dma_semaphore, #tpu.memory_space<semaphore_mem>> -> memref<!tpu.dma_semaphore, #tpu.memory_space<semaphore_mem>>
    tpu.enqueue_dma source(%100 : memref<1x128xf32, #tpu.memory_space<any>>) target(%102 : memref<1x128xf32, #tpu.memory_space<vmem>>) target_semaphore(%104 : memref<!tpu.dma_semaphore, #tpu.memory_space<semaphore_mem>>)
    %105 = arith.index_cast %85 : i32 to index
    %c1_84 = arith.constant 1 : index
    %106 = memref.load %arg3[%105, %c1_84] : memref<8x4xi32, #tpu.memory_space<smem>>
    %c1_i32_85 = arith.constant 1 : i32
    %c1_i32_86 = arith.constant 1 : i32
    %c2_i32_87 = arith.constant 2 : i32
    %c0_i32_88 = arith.constant 0 : i32
    %107 = tpu.memref_slice %arg5[%106, %c0_i32_88] : memref<64x128xf32, #tpu.memory_space<any>> -> memref<1x128xf32, #tpu.memory_space<any>>
    %c2_i32_89 = arith.constant 2 : i32
    %c0_i32_90 = arith.constant 0 : i32
    %108 = tpu.memref_slice %arg9[%c1_i32_85, %c2_i32_89, %c0_i32_90] : memref<4x8x128xf32, #tpu.memory_space<vmem>> -> memref<1x1x128xf32, #tpu.memory_space<vmem>>
    %109 = tpu.memref_squeeze %108 : memref<1x1x128xf32, #tpu.memory_space<vmem>> -> memref<1x128xf32, #tpu.memory_space<vmem>>
    %110 = tpu.memref_slice %arg12[%c1_i32_86, %c2_i32_87] : memref<4x8x!tpu.dma_semaphore, #tpu.memory_space<semaphore_mem>> -> memref<1x1x!tpu.dma_semaphore, #tpu.memory_space<semaphore_mem>>
    %111 = tpu.memref_squeeze %110 : memref<1x1x!tpu.dma_semaphore, #tpu.memory_space<semaphore_mem>> -> memref<!tpu.dma_semaphore, #tpu.memory_space<semaphore_mem>>
    tpu.enqueue_dma source(%107 : memref<1x128xf32, #tpu.memory_space<any>>) target(%109 : memref<1x128xf32, #tpu.memory_space<vmem>>) target_semaphore(%111 : memref<!tpu.dma_semaphore, #tpu.memory_space<semaphore_mem>>)
    %112 = arith.index_cast %85 : i32 to index
    %c2_91 = arith.constant 2 : index
    %113 = memref.load %arg3[%112, %c2_91] : memref<8x4xi32, #tpu.memory_space<smem>>
    %c2_i32_92 = arith.constant 2 : i32
    %c2_i32_93 = arith.constant 2 : i32
    %c2_i32_94 = arith.constant 2 : i32
    %c0_i32_95 = arith.constant 0 : i32
    %114 = tpu.memref_slice %arg5[%113, %c0_i32_95] : memref<64x128xf32, #tpu.memory_space<any>> -> memref<1x128xf32, #tpu.memory_space<any>>
    %c2_i32_96 = arith.constant 2 : i32
    %c0_i32_97 = arith.constant 0 : i32
    %115 = tpu.memref_slice %arg9[%c2_i32_92, %c2_i32_96, %c0_i32_97] : memref<4x8x128xf32, #tpu.memory_space<vmem>> -> memref<1x1x128xf32, #tpu.memory_space<vmem>>
    %116 = tpu.memref_squeeze %115 : memref<1x1x128xf32, #tpu.memory_space<vmem>> -> memref<1x128xf32, #tpu.memory_space<vmem>>
    %117 = tpu.memref_slice %arg12[%c2_i32_93, %c2_i32_94] : memref<4x8x!tpu.dma_semaphore, #tpu.memory_space<semaphore_mem>> -> memref<1x1x!tpu.dma_semaphore, #tpu.memory_space<semaphore_mem>>
    %118 = tpu.memref_squeeze %117 : memref<1x1x!tpu.dma_semaphore, #tpu.memory_space<semaphore_mem>> -> memref<!tpu.dma_semaphore, #tpu.memory_space<semaphore_mem>>
    tpu.enqueue_dma source(%114 : memref<1x128xf32, #tpu.memory_space<any>>) target(%116 : memref<1x128xf32, #tpu.memory_space<vmem>>) target_semaphore(%118 : memref<!tpu.dma_semaphore, #tpu.memory_space<semaphore_mem>>)
    %119 = arith.index_cast %85 : i32 to index
    %c3_98 = arith.constant 3 : index
    %120 = memref.load %arg3[%119, %c3_98] : memref<8x4xi32, #tpu.memory_space<smem>>
    %c3_i32_99 = arith.constant 3 : i32
    %c3_i32_100 = arith.constant 3 : i32
    %c2_i32_101 = arith.constant 2 : i32
    %c0_i32_102 = arith.constant 0 : i32
    %121 = tpu.memref_slice %arg5[%120, %c0_i32_102] : memref<64x128xf32, #tpu.memory_space<any>> -> memref<1x128xf32, #tpu.memory_space<any>>
    %c2_i32_103 = arith.constant 2 : i32
    %c0_i32_104 = arith.constant 0 : i32
    %122 = tpu.memref_slice %arg9[%c3_i32_99, %c2_i32_103, %c0_i32_104] : memref<4x8x128xf32, #tpu.memory_space<vmem>> -> memref<1x1x128xf32, #tpu.memory_space<vmem>>
    %123 = tpu.memref_squeeze %122 : memref<1x1x128xf32, #tpu.memory_space<vmem>> -> memref<1x128xf32, #tpu.memory_space<vmem>>
    %124 = tpu.memref_slice %arg12[%c3_i32_100, %c2_i32_101] : memref<4x8x!tpu.dma_semaphore, #tpu.memory_space<semaphore_mem>> -> memref<1x1x!tpu.dma_semaphore, #tpu.memory_space<semaphore_mem>>
    %125 = tpu.memref_squeeze %124 : memref<1x1x!tpu.dma_semaphore, #tpu.memory_space<semaphore_mem>> -> memref<!tpu.dma_semaphore, #tpu.memory_space<semaphore_mem>>
    tpu.enqueue_dma source(%121 : memref<1x128xf32, #tpu.memory_space<any>>) target(%123 : memref<1x128xf32, #tpu.memory_space<vmem>>) target_semaphore(%125 : memref<!tpu.dma_semaphore, #tpu.memory_space<semaphore_mem>>)
    %c8_i32_105 = arith.constant 8 : i32
    %126 = arith.muli %arg0, %c8_i32_105 : i32
    %c3_i32_106 = arith.constant 3 : i32
    %127 = arith.addi %126, %c3_i32_106 : i32
    %128 = arith.index_cast %127 : i32 to index
    %129 = memref.load %arg1[%128] : memref<8xi32, #tpu.memory_space<smem>>
    %130 = arith.index_cast %127 : i32 to index
    %131 = memref.load %arg2[%130] : memref<8xi32, #tpu.memory_space<smem>>
    %c3_i32_107 = arith.constant 3 : i32
    %c0_i32_108 = arith.constant 0 : i32
    %132 = tpu.memref_slice %arg4[%129, %c0_i32_108] : memref<64x128xf32, #tpu.memory_space<any>> -> memref<1x128xf32, #tpu.memory_space<any>>
    %c3_i32_109 = arith.constant 3 : i32
    %c0_i32_110 = arith.constant 0 : i32
    %133 = tpu.memref_slice %arg7[%c3_i32_109, %c0_i32_110] : memref<8x128xf32, #tpu.memory_space<vmem>> -> memref<1x128xf32, #tpu.memory_space<vmem>>
    %134 = tpu.memref_slice %arg10[%c3_i32_107] : memref<8x!tpu.dma_semaphore, #tpu.memory_space<semaphore_mem>> -> memref<1x!tpu.dma_semaphore, #tpu.memory_space<semaphore_mem>>
    %135 = tpu.memref_squeeze %134 : memref<1x!tpu.dma_semaphore, #tpu.memory_space<semaphore_mem>> -> memref<!tpu.dma_semaphore, #tpu.memory_space<semaphore_mem>>
    tpu.enqueue_dma source(%132 : memref<1x128xf32, #tpu.memory_space<any>>) target(%133 : memref<1x128xf32, #tpu.memory_space<vmem>>) target_semaphore(%135 : memref<!tpu.dma_semaphore, #tpu.memory_space<semaphore_mem>>)
    %c3_i32_111 = arith.constant 3 : i32
    %c0_i32_112 = arith.constant 0 : i32
    %136 = tpu.memref_slice %arg5[%131, %c0_i32_112] : memref<64x128xf32, #tpu.memory_space<any>> -> memref<1x128xf32, #tpu.memory_space<any>>
    %c3_i32_113 = arith.constant 3 : i32
    %c0_i32_114 = arith.constant 0 : i32
    %137 = tpu.memref_slice %arg8[%c3_i32_113, %c0_i32_114] : memref<8x128xf32, #tpu.memory_space<vmem>> -> memref<1x128xf32, #tpu.memory_space<vmem>>
    %138 = tpu.memref_slice %arg11[%c3_i32_111] : memref<8x!tpu.dma_semaphore, #tpu.memory_space<semaphore_mem>> -> memref<1x!tpu.dma_semaphore, #tpu.memory_space<semaphore_mem>>
    %139 = tpu.memref_squeeze %138 : memref<1x!tpu.dma_semaphore, #tpu.memory_space<semaphore_mem>> -> memref<!tpu.dma_semaphore, #tpu.memory_space<semaphore_mem>>
    tpu.enqueue_dma source(%136 : memref<1x128xf32, #tpu.memory_space<any>>) target(%137 : memref<1x128xf32, #tpu.memory_space<vmem>>) target_semaphore(%139 : memref<!tpu.dma_semaphore, #tpu.memory_space<semaphore_mem>>)
    %140 = arith.index_cast %127 : i32 to index
    %c0_115 = arith.constant 0 : index
    %141 = memref.load %arg3[%140, %c0_115] : memref<8x4xi32, #tpu.memory_space<smem>>
    %c0_i32_116 = arith.constant 0 : i32
    %c0_i32_117 = arith.constant 0 : i32
    %c3_i32_118 = arith.constant 3 : i32
    %c0_i32_119 = arith.constant 0 : i32
    %142 = tpu.memref_slice %arg5[%141, %c0_i32_119] : memref<64x128xf32, #tpu.memory_space<any>> -> memref<1x128xf32, #tpu.memory_space<any>>
    %c3_i32_120 = arith.constant 3 : i32
    %c0_i32_121 = arith.constant 0 : i32
    %143 = tpu.memref_slice %arg9[%c0_i32_116, %c3_i32_120, %c0_i32_121] : memref<4x8x128xf32, #tpu.memory_space<vmem>> -> memref<1x1x128xf32, #tpu.memory_space<vmem>>
    %144 = tpu.memref_squeeze %143 : memref<1x1x128xf32, #tpu.memory_space<vmem>> -> memref<1x128xf32, #tpu.memory_space<vmem>>
    %145 = tpu.memref_slice %arg12[%c0_i32_117, %c3_i32_118] : memref<4x8x!tpu.dma_semaphore, #tpu.memory_space<semaphore_mem>> -> memref<1x1x!tpu.dma_semaphore, #tpu.memory_space<semaphore_mem>>
    %146 = tpu.memref_squeeze %145 : memref<1x1x!tpu.dma_semaphore, #tpu.memory_space<semaphore_mem>> -> memref<!tpu.dma_semaphore, #tpu.memory_space<semaphore_mem>>
    tpu.enqueue_dma source(%142 : memref<1x128xf32, #tpu.memory_space<any>>) target(%144 : memref<1x128xf32, #tpu.memory_space<vmem>>) target_semaphore(%146 : memref<!tpu.dma_semaphore, #tpu.memory_space<semaphore_mem>>)
    %147 = arith.index_cast %127 : i32 to index
    %c1_122 = arith.constant 1 : index
    %148 = memref.load %arg3[%147, %c1_122] : memref<8x4xi32, #tpu.memory_space<smem>>
    %c1_i32_123 = arith.constant 1 : i32
    %c1_i32_124 = arith.constant 1 : i32
    %c3_i32_125 = arith.constant 3 : i32
    %c0_i32_126 = arith.constant 0 : i32
    %149 = tpu.memref_slice %arg5[%148, %c0_i32_126] : memref<64x128xf32, #tpu.memory_space<any>> -> memref<1x128xf32, #tpu.memory_space<any>>
    %c3_i32_127 = arith.constant 3 : i32
    %c0_i32_128 = arith.constant 0 : i32
    %150 = tpu.memref_slice %arg9[%c1_i32_123, %c3_i32_127, %c0_i32_128] : memref<4x8x128xf32, #tpu.memory_space<vmem>> -> memref<1x1x128xf32, #tpu.memory_space<vmem>>
    %151 = tpu.memref_squeeze %150 : memref<1x1x128xf32, #tpu.memory_space<vmem>> -> memref<1x128xf32, #tpu.memory_space<vmem>>
    %152 = tpu.memref_slice %arg12[%c1_i32_124, %c3_i32_125] : memref<4x8x!tpu.dma_semaphore, #tpu.memory_space<semaphore_mem>> -> memref<1x1x!tpu.dma_semaphore, #tpu.memory_space<semaphore_mem>>
    %153 = tpu.memref_squeeze %152 : memref<1x1x!tpu.dma_semaphore, #tpu.memory_space<semaphore_mem>> -> memref<!tpu.dma_semaphore, #tpu.memory_space<semaphore_mem>>
    tpu.enqueue_dma source(%149 : memref<1x128xf32, #tpu.memory_space<any>>) target(%151 : memref<1x128xf32, #tpu.memory_space<vmem>>) target_semaphore(%153 : memref<!tpu.dma_semaphore, #tpu.memory_space<semaphore_mem>>)
    %154 = arith.index_cast %127 : i32 to index
    %c2_129 = arith.constant 2 : index
    %155 = memref.load %arg3[%154, %c2_129] : memref<8x4xi32, #tpu.memory_space<smem>>
    %c2_i32_130 = arith.constant 2 : i32
    %c2_i32_131 = arith.constant 2 : i32
    %c3_i32_132 = arith.constant 3 : i32
    %c0_i32_133 = arith.constant 0 : i32
    %156 = tpu.memref_slice %arg5[%155, %c0_i32_133] : memref<64x128xf32, #tpu.memory_space<any>> -> memref<1x128xf32, #tpu.memory_space<any>>
    %c3_i32_134 = arith.constant 3 : i32
    %c0_i32_135 = arith.constant 0 : i32
    %157 = tpu.memref_slice %arg9[%c2_i32_130, %c3_i32_134, %c0_i32_135] : memref<4x8x128xf32, #tpu.memory_space<vmem>> -> memref<1x1x128xf32, #tpu.memory_space<vmem>>
    %158 = tpu.memref_squeeze %157 : memref<1x1x128xf32, #tpu.memory_space<vmem>> -> memref<1x128xf32, #tpu.memory_space<vmem>>
    %159 = tpu.memref_slice %arg12[%c2_i32_131, %c3_i32_132] : memref<4x8x!tpu.dma_semaphore, #tpu.memory_space<semaphore_mem>> -> memref<1x1x!tpu.dma_semaphore, #tpu.memory_space<semaphore_mem>>
    %160 = tpu.memref_squeeze %159 : memref<1x1x!tpu.dma_semaphore, #tpu.memory_space<semaphore_mem>> -> memref<!tpu.dma_semaphore, #tpu.memory_space<semaphore_mem>>
    tpu.enqueue_dma source(%156 : memref<1x128xf32, #tpu.memory_space<any>>) target(%158 : memref<1x128xf32, #tpu.memory_space<vmem>>) target_semaphore(%160 : memref<!tpu.dma_semaphore, #tpu.memory_space<semaphore_mem>>)
    %161 = arith.index_cast %127 : i32 to index
    %c3_136 = arith.constant 3 : index
    %162 = memref.load %arg3[%161, %c3_136] : memref<8x4xi32, #tpu.memory_space<smem>>
    %c3_i32_137 = arith.constant 3 : i32
    %c3_i32_138 = arith.constant 3 : i32
    %c3_i32_139 = arith.constant 3 : i32
    %c0_i32_140 = arith.constant 0 : i32
    %163 = tpu.memref_slice %arg5[%162, %c0_i32_140] : memref<64x128xf32, #tpu.memory_space<any>> -> memref<1x128xf32, #tpu.memory_space<any>>
    %c3_i32_141 = arith.constant 3 : i32
    %c0_i32_142 = arith.constant 0 : i32
    %164 = tpu.memref_slice %arg9[%c3_i32_137, %c3_i32_141, %c0_i32_142] : memref<4x8x128xf32, #tpu.memory_space<vmem>> -> memref<1x1x128xf32, #tpu.memory_space<vmem>>
    %165 = tpu.memref_squeeze %164 : memref<1x1x128xf32, #tpu.memory_space<vmem>> -> memref<1x128xf32, #tpu.memory_space<vmem>>
    %166 = tpu.memref_slice %arg12[%c3_i32_138, %c3_i32_139] : memref<4x8x!tpu.dma_semaphore, #tpu.memory_space<semaphore_mem>> -> memref<1x1x!tpu.dma_semaphore, #tpu.memory_space<semaphore_mem>>
    %167 = tpu.memref_squeeze %166 : memref<1x1x!tpu.dma_semaphore, #tpu.memory_space<semaphore_mem>> -> memref<!tpu.dma_semaphore, #tpu.memory_space<semaphore_mem>>
    tpu.enqueue_dma source(%163 : memref<1x128xf32, #tpu.memory_space<any>>) target(%165 : memref<1x128xf32, #tpu.memory_space<vmem>>) target_semaphore(%167 : memref<!tpu.dma_semaphore, #tpu.memory_space<semaphore_mem>>)
    %c8_i32_143 = arith.constant 8 : i32
    %168 = arith.muli %arg0, %c8_i32_143 : i32
    %c4_i32 = arith.constant 4 : i32
    %169 = arith.addi %168, %c4_i32 : i32
    %170 = arith.index_cast %169 : i32 to index
    %171 = memref.load %arg1[%170] : memref<8xi32, #tpu.memory_space<smem>>
    %172 = arith.index_cast %169 : i32 to index
    %173 = memref.load %arg2[%172] : memref<8xi32, #tpu.memory_space<smem>>
    %c4_i32_144 = arith.constant 4 : i32
    %c0_i32_145 = arith.constant 0 : i32
    %174 = tpu.memref_slice %arg4[%171, %c0_i32_145] : memref<64x128xf32, #tpu.memory_space<any>> -> memref<1x128xf32, #tpu.memory_space<any>>
    %c4_i32_146 = arith.constant 4 : i32
    %c0_i32_147 = arith.constant 0 : i32
    %175 = tpu.memref_slice %arg7[%c4_i32_146, %c0_i32_147] : memref<8x128xf32, #tpu.memory_space<vmem>> -> memref<1x128xf32, #tpu.memory_space<vmem>>
    %176 = tpu.memref_slice %arg10[%c4_i32_144] : memref<8x!tpu.dma_semaphore, #tpu.memory_space<semaphore_mem>> -> memref<1x!tpu.dma_semaphore, #tpu.memory_space<semaphore_mem>>
    %177 = tpu.memref_squeeze %176 : memref<1x!tpu.dma_semaphore, #tpu.memory_space<semaphore_mem>> -> memref<!tpu.dma_semaphore, #tpu.memory_space<semaphore_mem>>
    tpu.enqueue_dma source(%174 : memref<1x128xf32, #tpu.memory_space<any>>) target(%175 : memref<1x128xf32, #tpu.memory_space<vmem>>) target_semaphore(%177 : memref<!tpu.dma_semaphore, #tpu.memory_space<semaphore_mem>>)
    %c4_i32_148 = arith.constant 4 : i32
    %c0_i32_149 = arith.constant 0 : i32
    %178 = tpu.memref_slice %arg5[%173, %c0_i32_149] : memref<64x128xf32, #tpu.memory_space<any>> -> memref<1x128xf32, #tpu.memory_space<any>>
    %c4_i32_150 = arith.constant 4 : i32
    %c0_i32_151 = arith.constant 0 : i32
    %179 = tpu.memref_slice %arg8[%c4_i32_150, %c0_i32_151] : memref<8x128xf32, #tpu.memory_space<vmem>> -> memref<1x128xf32, #tpu.memory_space<vmem>>
    %180 = tpu.memref_slice %arg11[%c4_i32_148] : memref<8x!tpu.dma_semaphore, #tpu.memory_space<semaphore_mem>> -> memref<1x!tpu.dma_semaphore, #tpu.memory_space<semaphore_mem>>
    %181 = tpu.memref_squeeze %180 : memref<1x!tpu.dma_semaphore, #tpu.memory_space<semaphore_mem>> -> memref<!tpu.dma_semaphore, #tpu.memory_space<semaphore_mem>>
    tpu.enqueue_dma source(%178 : memref<1x128xf32, #tpu.memory_space<any>>) target(%179 : memref<1x128xf32, #tpu.memory_space<vmem>>) target_semaphore(%181 : memref<!tpu.dma_semaphore, #tpu.memory_space<semaphore_mem>>)
    %182 = arith.index_cast %169 : i32 to index
    %c0_152 = arith.constant 0 : index
    %183 = memref.load %arg3[%182, %c0_152] : memref<8x4xi32, #tpu.memory_space<smem>>
    %c0_i32_153 = arith.constant 0 : i32
    %c0_i32_154 = arith.constant 0 : i32
    %c4_i32_155 = arith.constant 4 : i32
    %c0_i32_156 = arith.constant 0 : i32
    %184 = tpu.memref_slice %arg5[%183, %c0_i32_156] : memref<64x128xf32, #tpu.memory_space<any>> -> memref<1x128xf32, #tpu.memory_space<any>>
    %c4_i32_157 = arith.constant 4 : i32
    %c0_i32_158 = arith.constant 0 : i32
    %185 = tpu.memref_slice %arg9[%c0_i32_153, %c4_i32_157, %c0_i32_158] : memref<4x8x128xf32, #tpu.memory_space<vmem>> -> memref<1x1x128xf32, #tpu.memory_space<vmem>>
    %186 = tpu.memref_squeeze %185 : memref<1x1x128xf32, #tpu.memory_space<vmem>> -> memref<1x128xf32, #tpu.memory_space<vmem>>
    %187 = tpu.memref_slice %arg12[%c0_i32_154, %c4_i32_155] : memref<4x8x!tpu.dma_semaphore, #tpu.memory_space<semaphore_mem>> -> memref<1x1x!tpu.dma_semaphore, #tpu.memory_space<semaphore_mem>>
    %188 = tpu.memref_squeeze %187 : memref<1x1x!tpu.dma_semaphore, #tpu.memory_space<semaphore_mem>> -> memref<!tpu.dma_semaphore, #tpu.memory_space<semaphore_mem>>
    tpu.enqueue_dma source(%184 : memref<1x128xf32, #tpu.memory_space<any>>) target(%186 : memref<1x128xf32, #tpu.memory_space<vmem>>) target_semaphore(%188 : memref<!tpu.dma_semaphore, #tpu.memory_space<semaphore_mem>>)
    %189 = arith.index_cast %169 : i32 to index
    %c1_159 = arith.constant 1 : index
    %190 = memref.load %arg3[%189, %c1_159] : memref<8x4xi32, #tpu.memory_space<smem>>
    %c1_i32_160 = arith.constant 1 : i32
    %c1_i32_161 = arith.constant 1 : i32
    %c4_i32_162 = arith.constant 4 : i32
    %c0_i32_163 = arith.constant 0 : i32
    %191 = tpu.memref_slice %arg5[%190, %c0_i32_163] : memref<64x128xf32, #tpu.memory_space<any>> -> memref<1x128xf32, #tpu.memory_space<any>>
    %c4_i32_164 = arith.constant 4 : i32
    %c0_i32_165 = arith.constant 0 : i32
    %192 = tpu.memref_slice %arg9[%c1_i32_160, %c4_i32_164, %c0_i32_165] : memref<4x8x128xf32, #tpu.memory_space<vmem>> -> memref<1x1x128xf32, #tpu.memory_space<vmem>>
    %193 = tpu.memref_squeeze %192 : memref<1x1x128xf32, #tpu.memory_space<vmem>> -> memref<1x128xf32, #tpu.memory_space<vmem>>
    %194 = tpu.memref_slice %arg12[%c1_i32_161, %c4_i32_162] : memref<4x8x!tpu.dma_semaphore, #tpu.memory_space<semaphore_mem>> -> memref<1x1x!tpu.dma_semaphore, #tpu.memory_space<semaphore_mem>>
    %195 = tpu.memref_squeeze %194 : memref<1x1x!tpu.dma_semaphore, #tpu.memory_space<semaphore_mem>> -> memref<!tpu.dma_semaphore, #tpu.memory_space<semaphore_mem>>
    tpu.enqueue_dma source(%191 : memref<1x128xf32, #tpu.memory_space<any>>) target(%193 : memref<1x128xf32, #tpu.memory_space<vmem>>) target_semaphore(%195 : memref<!tpu.dma_semaphore, #tpu.memory_space<semaphore_mem>>)
    %196 = arith.index_cast %169 : i32 to index
    %c2_166 = arith.constant 2 : index
    %197 = memref.load %arg3[%196, %c2_166] : memref<8x4xi32, #tpu.memory_space<smem>>
    %c2_i32_167 = arith.constant 2 : i32
    %c2_i32_168 = arith.constant 2 : i32
    %c4_i32_169 = arith.constant 4 : i32
    %c0_i32_170 = arith.constant 0 : i32
    %198 = tpu.memref_slice %arg5[%197, %c0_i32_170] : memref<64x128xf32, #tpu.memory_space<any>> -> memref<1x128xf32, #tpu.memory_space<any>>
    %c4_i32_171 = arith.constant 4 : i32
    %c0_i32_172 = arith.constant 0 : i32
    %199 = tpu.memref_slice %arg9[%c2_i32_167, %c4_i32_171, %c0_i32_172] : memref<4x8x128xf32, #tpu.memory_space<vmem>> -> memref<1x1x128xf32, #tpu.memory_space<vmem>>
    %200 = tpu.memref_squeeze %199 : memref<1x1x128xf32, #tpu.memory_space<vmem>> -> memref<1x128xf32, #tpu.memory_space<vmem>>
    %201 = tpu.memref_slice %arg12[%c2_i32_168, %c4_i32_169] : memref<4x8x!tpu.dma_semaphore, #tpu.memory_space<semaphore_mem>> -> memref<1x1x!tpu.dma_semaphore, #tpu.memory_space<semaphore_mem>>
    %202 = tpu.memref_squeeze %201 : memref<1x1x!tpu.dma_semaphore, #tpu.memory_space<semaphore_mem>> -> memref<!tpu.dma_semaphore, #tpu.memory_space<semaphore_mem>>
    tpu.enqueue_dma source(%198 : memref<1x128xf32, #tpu.memory_space<any>>) target(%200 : memref<1x128xf32, #tpu.memory_space<vmem>>) target_semaphore(%202 : memref<!tpu.dma_semaphore, #tpu.memory_space<semaphore_mem>>)
    %203 = arith.index_cast %169 : i32 to index
    %c3_173 = arith.constant 3 : index
    %204 = memref.load %arg3[%203, %c3_173] : memref<8x4xi32, #tpu.memory_space<smem>>
    %c3_i32_174 = arith.constant 3 : i32
    %c3_i32_175 = arith.constant 3 : i32
    %c4_i32_176 = arith.constant 4 : i32
    %c0_i32_177 = arith.constant 0 : i32
    %205 = tpu.memref_slice %arg5[%204, %c0_i32_177] : memref<64x128xf32, #tpu.memory_space<any>> -> memref<1x128xf32, #tpu.memory_space<any>>
    %c4_i32_178 = arith.constant 4 : i32
    %c0_i32_179 = arith.constant 0 : i32
    %206 = tpu.memref_slice %arg9[%c3_i32_174, %c4_i32_178, %c0_i32_179] : memref<4x8x128xf32, #tpu.memory_space<vmem>> -> memref<1x1x128xf32, #tpu.memory_space<vmem>>
    %207 = tpu.memref_squeeze %206 : memref<1x1x128xf32, #tpu.memory_space<vmem>> -> memref<1x128xf32, #tpu.memory_space<vmem>>
    %208 = tpu.memref_slice %arg12[%c3_i32_175, %c4_i32_176] : memref<4x8x!tpu.dma_semaphore, #tpu.memory_space<semaphore_mem>> -> memref<1x1x!tpu.dma_semaphore, #tpu.memory_space<semaphore_mem>>
    %209 = tpu.memref_squeeze %208 : memref<1x1x!tpu.dma_semaphore, #tpu.memory_space<semaphore_mem>> -> memref<!tpu.dma_semaphore, #tpu.memory_space<semaphore_mem>>
    tpu.enqueue_dma source(%205 : memref<1x128xf32, #tpu.memory_space<any>>) target(%207 : memref<1x128xf32, #tpu.memory_space<vmem>>) target_semaphore(%209 : memref<!tpu.dma_semaphore, #tpu.memory_space<semaphore_mem>>)
    %c8_i32_180 = arith.constant 8 : i32
    %210 = arith.muli %arg0, %c8_i32_180 : i32
    %c5_i32 = arith.constant 5 : i32
    %211 = arith.addi %210, %c5_i32 : i32
    %212 = arith.index_cast %211 : i32 to index
    %213 = memref.load %arg1[%212] : memref<8xi32, #tpu.memory_space<smem>>
    %214 = arith.index_cast %211 : i32 to index
    %215 = memref.load %arg2[%214] : memref<8xi32, #tpu.memory_space<smem>>
    %c5_i32_181 = arith.constant 5 : i32
    %c0_i32_182 = arith.constant 0 : i32
    %216 = tpu.memref_slice %arg4[%213, %c0_i32_182] : memref<64x128xf32, #tpu.memory_space<any>> -> memref<1x128xf32, #tpu.memory_space<any>>
    %c5_i32_183 = arith.constant 5 : i32
    %c0_i32_184 = arith.constant 0 : i32
    %217 = tpu.memref_slice %arg7[%c5_i32_183, %c0_i32_184] : memref<8x128xf32, #tpu.memory_space<vmem>> -> memref<1x128xf32, #tpu.memory_space<vmem>>
    %218 = tpu.memref_slice %arg10[%c5_i32_181] : memref<8x!tpu.dma_semaphore, #tpu.memory_space<semaphore_mem>> -> memref<1x!tpu.dma_semaphore, #tpu.memory_space<semaphore_mem>>
    %219 = tpu.memref_squeeze %218 : memref<1x!tpu.dma_semaphore, #tpu.memory_space<semaphore_mem>> -> memref<!tpu.dma_semaphore, #tpu.memory_space<semaphore_mem>>
    tpu.enqueue_dma source(%216 : memref<1x128xf32, #tpu.memory_space<any>>) target(%217 : memref<1x128xf32, #tpu.memory_space<vmem>>) target_semaphore(%219 : memref<!tpu.dma_semaphore, #tpu.memory_space<semaphore_mem>>)
    %c5_i32_185 = arith.constant 5 : i32
    %c0_i32_186 = arith.constant 0 : i32
    %220 = tpu.memref_slice %arg5[%215, %c0_i32_186] : memref<64x128xf32, #tpu.memory_space<any>> -> memref<1x128xf32, #tpu.memory_space<any>>
    %c5_i32_187 = arith.constant 5 : i32
    %c0_i32_188 = arith.constant 0 : i32
    %221 = tpu.memref_slice %arg8[%c5_i32_187, %c0_i32_188] : memref<8x128xf32, #tpu.memory_space<vmem>> -> memref<1x128xf32, #tpu.memory_space<vmem>>
    %222 = tpu.memref_slice %arg11[%c5_i32_185] : memref<8x!tpu.dma_semaphore, #tpu.memory_space<semaphore_mem>> -> memref<1x!tpu.dma_semaphore, #tpu.memory_space<semaphore_mem>>
    %223 = tpu.memref_squeeze %222 : memref<1x!tpu.dma_semaphore, #tpu.memory_space<semaphore_mem>> -> memref<!tpu.dma_semaphore, #tpu.memory_space<semaphore_mem>>
    tpu.enqueue_dma source(%220 : memref<1x128xf32, #tpu.memory_space<any>>) target(%221 : memref<1x128xf32, #tpu.memory_space<vmem>>) target_semaphore(%223 : memref<!tpu.dma_semaphore, #tpu.memory_space<semaphore_mem>>)
    %224 = arith.index_cast %211 : i32 to index
    %c0_189 = arith.constant 0 : index
    %225 = memref.load %arg3[%224, %c0_189] : memref<8x4xi32, #tpu.memory_space<smem>>
    %c0_i32_190 = arith.constant 0 : i32
    %c0_i32_191 = arith.constant 0 : i32
    %c5_i32_192 = arith.constant 5 : i32
    %c0_i32_193 = arith.constant 0 : i32
    %226 = tpu.memref_slice %arg5[%225, %c0_i32_193] : memref<64x128xf32, #tpu.memory_space<any>> -> memref<1x128xf32, #tpu.memory_space<any>>
    %c5_i32_194 = arith.constant 5 : i32
    %c0_i32_195 = arith.constant 0 : i32
    %227 = tpu.memref_slice %arg9[%c0_i32_190, %c5_i32_194, %c0_i32_195] : memref<4x8x128xf32, #tpu.memory_space<vmem>> -> memref<1x1x128xf32, #tpu.memory_space<vmem>>
    %228 = tpu.memref_squeeze %227 : memref<1x1x128xf32, #tpu.memory_space<vmem>> -> memref<1x128xf32, #tpu.memory_space<vmem>>
    %229 = tpu.memref_slice %arg12[%c0_i32_191, %c5_i32_192] : memref<4x8x!tpu.dma_semaphore, #tpu.memory_space<semaphore_mem>> -> memref<1x1x!tpu.dma_semaphore, #tpu.memory_space<semaphore_mem>>
    %230 = tpu.memref_squeeze %229 : memref<1x1x!tpu.dma_semaphore, #tpu.memory_space<semaphore_mem>> -> memref<!tpu.dma_semaphore, #tpu.memory_space<semaphore_mem>>
    tpu.enqueue_dma source(%226 : memref<1x128xf32, #tpu.memory_space<any>>) target(%228 : memref<1x128xf32, #tpu.memory_space<vmem>>) target_semaphore(%230 : memref<!tpu.dma_semaphore, #tpu.memory_space<semaphore_mem>>)
    %231 = arith.index_cast %211 : i32 to index
    %c1_196 = arith.constant 1 : index
    %232 = memref.load %arg3[%231, %c1_196] : memref<8x4xi32, #tpu.memory_space<smem>>
    %c1_i32_197 = arith.constant 1 : i32
    %c1_i32_198 = arith.constant 1 : i32
    %c5_i32_199 = arith.constant 5 : i32
    %c0_i32_200 = arith.constant 0 : i32
    %233 = tpu.memref_slice %arg5[%232, %c0_i32_200] : memref<64x128xf32, #tpu.memory_space<any>> -> memref<1x128xf32, #tpu.memory_space<any>>
    %c5_i32_201 = arith.constant 5 : i32
    %c0_i32_202 = arith.constant 0 : i32
    %234 = tpu.memref_slice %arg9[%c1_i32_197, %c5_i32_201, %c0_i32_202] : memref<4x8x128xf32, #tpu.memory_space<vmem>> -> memref<1x1x128xf32, #tpu.memory_space<vmem>>
    %235 = tpu.memref_squeeze %234 : memref<1x1x128xf32, #tpu.memory_space<vmem>> -> memref<1x128xf32, #tpu.memory_space<vmem>>
    %236 = tpu.memref_slice %arg12[%c1_i32_198, %c5_i32_199] : memref<4x8x!tpu.dma_semaphore, #tpu.memory_space<semaphore_mem>> -> memref<1x1x!tpu.dma_semaphore, #tpu.memory_space<semaphore_mem>>
    %237 = tpu.memref_squeeze %236 : memref<1x1x!tpu.dma_semaphore, #tpu.memory_space<semaphore_mem>> -> memref<!tpu.dma_semaphore, #tpu.memory_space<semaphore_mem>>
    tpu.enqueue_dma source(%233 : memref<1x128xf32, #tpu.memory_space<any>>) target(%235 : memref<1x128xf32, #tpu.memory_space<vmem>>) target_semaphore(%237 : memref<!tpu.dma_semaphore, #tpu.memory_space<semaphore_mem>>)
    %238 = arith.index_cast %211 : i32 to index
    %c2_203 = arith.constant 2 : index
    %239 = memref.load %arg3[%238, %c2_203] : memref<8x4xi32, #tpu.memory_space<smem>>
    %c2_i32_204 = arith.constant 2 : i32
    %c2_i32_205 = arith.constant 2 : i32
    %c5_i32_206 = arith.constant 5 : i32
    %c0_i32_207 = arith.constant 0 : i32
    %240 = tpu.memref_slice %arg5[%239, %c0_i32_207] : memref<64x128xf32, #tpu.memory_space<any>> -> memref<1x128xf32, #tpu.memory_space<any>>
    %c5_i32_208 = arith.constant 5 : i32
    %c0_i32_209 = arith.constant 0 : i32
    %241 = tpu.memref_slice %arg9[%c2_i32_204, %c5_i32_208, %c0_i32_209] : memref<4x8x128xf32, #tpu.memory_space<vmem>> -> memref<1x1x128xf32, #tpu.memory_space<vmem>>
    %242 = tpu.memref_squeeze %241 : memref<1x1x128xf32, #tpu.memory_space<vmem>> -> memref<1x128xf32, #tpu.memory_space<vmem>>
    %243 = tpu.memref_slice %arg12[%c2_i32_205, %c5_i32_206] : memref<4x8x!tpu.dma_semaphore, #tpu.memory_space<semaphore_mem>> -> memref<1x1x!tpu.dma_semaphore, #tpu.memory_space<semaphore_mem>>
    %244 = tpu.memref_squeeze %243 : memref<1x1x!tpu.dma_semaphore, #tpu.memory_space<semaphore_mem>> -> memref<!tpu.dma_semaphore, #tpu.memory_space<semaphore_mem>>
    tpu.enqueue_dma source(%240 : memref<1x128xf32, #tpu.memory_space<any>>) target(%242 : memref<1x128xf32, #tpu.memory_space<vmem>>) target_semaphore(%244 : memref<!tpu.dma_semaphore, #tpu.memory_space<semaphore_mem>>)
    %245 = arith.index_cast %211 : i32 to index
    %c3_210 = arith.constant 3 : index
    %246 = memref.load %arg3[%245, %c3_210] : memref<8x4xi32, #tpu.memory_space<smem>>
    %c3_i32_211 = arith.constant 3 : i32
    %c3_i32_212 = arith.constant 3 : i32
    %c5_i32_213 = arith.constant 5 : i32
    %c0_i32_214 = arith.constant 0 : i32
    %247 = tpu.memref_slice %arg5[%246, %c0_i32_214] : memref<64x128xf32, #tpu.memory_space<any>> -> memref<1x128xf32, #tpu.memory_space<any>>
    %c5_i32_215 = arith.constant 5 : i32
    %c0_i32_216 = arith.constant 0 : i32
    %248 = tpu.memref_slice %arg9[%c3_i32_211, %c5_i32_215, %c0_i32_216] : memref<4x8x128xf32, #tpu.memory_space<vmem>> -> memref<1x1x128xf32, #tpu.memory_space<vmem>>
    %249 = tpu.memref_squeeze %248 : memref<1x1x128xf32, #tpu.memory_space<vmem>> -> memref<1x128xf32, #tpu.memory_space<vmem>>
    %250 = tpu.memref_slice %arg12[%c3_i32_212, %c5_i32_213] : memref<4x8x!tpu.dma_semaphore, #tpu.memory_space<semaphore_mem>> -> memref<1x1x!tpu.dma_semaphore, #tpu.memory_space<semaphore_mem>>
    %251 = tpu.memref_squeeze %250 : memref<1x1x!tpu.dma_semaphore, #tpu.memory_space<semaphore_mem>> -> memref<!tpu.dma_semaphore, #tpu.memory_space<semaphore_mem>>
    tpu.enqueue_dma source(%247 : memref<1x128xf32, #tpu.memory_space<any>>) target(%249 : memref<1x128xf32, #tpu.memory_space<vmem>>) target_semaphore(%251 : memref<!tpu.dma_semaphore, #tpu.memory_space<semaphore_mem>>)
    %c8_i32_217 = arith.constant 8 : i32
    %252 = arith.muli %arg0, %c8_i32_217 : i32
    %c6_i32 = arith.constant 6 : i32
    %253 = arith.addi %252, %c6_i32 : i32
    %254 = arith.index_cast %253 : i32 to index
    %255 = memref.load %arg1[%254] : memref<8xi32, #tpu.memory_space<smem>>
    %256 = arith.index_cast %253 : i32 to index
    %257 = memref.load %arg2[%256] : memref<8xi32, #tpu.memory_space<smem>>
    %c6_i32_218 = arith.constant 6 : i32
    %c0_i32_219 = arith.constant 0 : i32
    %258 = tpu.memref_slice %arg4[%255, %c0_i32_219] : memref<64x128xf32, #tpu.memory_space<any>> -> memref<1x128xf32, #tpu.memory_space<any>>
    %c6_i32_220 = arith.constant 6 : i32
    %c0_i32_221 = arith.constant 0 : i32
    %259 = tpu.memref_slice %arg7[%c6_i32_220, %c0_i32_221] : memref<8x128xf32, #tpu.memory_space<vmem>> -> memref<1x128xf32, #tpu.memory_space<vmem>>
    %260 = tpu.memref_slice %arg10[%c6_i32_218] : memref<8x!tpu.dma_semaphore, #tpu.memory_space<semaphore_mem>> -> memref<1x!tpu.dma_semaphore, #tpu.memory_space<semaphore_mem>>
    %261 = tpu.memref_squeeze %260 : memref<1x!tpu.dma_semaphore, #tpu.memory_space<semaphore_mem>> -> memref<!tpu.dma_semaphore, #tpu.memory_space<semaphore_mem>>
    tpu.enqueue_dma source(%258 : memref<1x128xf32, #tpu.memory_space<any>>) target(%259 : memref<1x128xf32, #tpu.memory_space<vmem>>) target_semaphore(%261 : memref<!tpu.dma_semaphore, #tpu.memory_space<semaphore_mem>>)
    %c6_i32_222 = arith.constant 6 : i32
    %c0_i32_223 = arith.constant 0 : i32
    %262 = tpu.memref_slice %arg5[%257, %c0_i32_223] : memref<64x128xf32, #tpu.memory_space<any>> -> memref<1x128xf32, #tpu.memory_space<any>>
    %c6_i32_224 = arith.constant 6 : i32
    %c0_i32_225 = arith.constant 0 : i32
    %263 = tpu.memref_slice %arg8[%c6_i32_224, %c0_i32_225] : memref<8x128xf32, #tpu.memory_space<vmem>> -> memref<1x128xf32, #tpu.memory_space<vmem>>
    %264 = tpu.memref_slice %arg11[%c6_i32_222] : memref<8x!tpu.dma_semaphore, #tpu.memory_space<semaphore_mem>> -> memref<1x!tpu.dma_semaphore, #tpu.memory_space<semaphore_mem>>
    %265 = tpu.memref_squeeze %264 : memref<1x!tpu.dma_semaphore, #tpu.memory_space<semaphore_mem>> -> memref<!tpu.dma_semaphore, #tpu.memory_space<semaphore_mem>>
    tpu.enqueue_dma source(%262 : memref<1x128xf32, #tpu.memory_space<any>>) target(%263 : memref<1x128xf32, #tpu.memory_space<vmem>>) target_semaphore(%265 : memref<!tpu.dma_semaphore, #tpu.memory_space<semaphore_mem>>)
    %266 = arith.index_cast %253 : i32 to index
    %c0_226 = arith.constant 0 : index
    %267 = memref.load %arg3[%266, %c0_226] : memref<8x4xi32, #tpu.memory_space<smem>>
    %c0_i32_227 = arith.constant 0 : i32
    %c0_i32_228 = arith.constant 0 : i32
    %c6_i32_229 = arith.constant 6 : i32
    %c0_i32_230 = arith.constant 0 : i32
    %268 = tpu.memref_slice %arg5[%267, %c0_i32_230] : memref<64x128xf32, #tpu.memory_space<any>> -> memref<1x128xf32, #tpu.memory_space<any>>
    %c6_i32_231 = arith.constant 6 : i32
    %c0_i32_232 = arith.constant 0 : i32
    %269 = tpu.memref_slice %arg9[%c0_i32_227, %c6_i32_231, %c0_i32_232] : memref<4x8x128xf32, #tpu.memory_space<vmem>> -> memref<1x1x128xf32, #tpu.memory_space<vmem>>
    %270 = tpu.memref_squeeze %269 : memref<1x1x128xf32, #tpu.memory_space<vmem>> -> memref<1x128xf32, #tpu.memory_space<vmem>>
    %271 = tpu.memref_slice %arg12[%c0_i32_228, %c6_i32_229] : memref<4x8x!tpu.dma_semaphore, #tpu.memory_space<semaphore_mem>> -> memref<1x1x!tpu.dma_semaphore, #tpu.memory_space<semaphore_mem>>
    %272 = tpu.memref_squeeze %271 : memref<1x1x!tpu.dma_semaphore, #tpu.memory_space<semaphore_mem>> -> memref<!tpu.dma_semaphore, #tpu.memory_space<semaphore_mem>>
    tpu.enqueue_dma source(%268 : memref<1x128xf32, #tpu.memory_space<any>>) target(%270 : memref<1x128xf32, #tpu.memory_space<vmem>>) target_semaphore(%272 : memref<!tpu.dma_semaphore, #tpu.memory_space<semaphore_mem>>)
    %273 = arith.index_cast %253 : i32 to index
    %c1_233 = arith.constant 1 : index
    %274 = memref.load %arg3[%273, %c1_233] : memref<8x4xi32, #tpu.memory_space<smem>>
    %c1_i32_234 = arith.constant 1 : i32
    %c1_i32_235 = arith.constant 1 : i32
    %c6_i32_236 = arith.constant 6 : i32
    %c0_i32_237 = arith.constant 0 : i32
    %275 = tpu.memref_slice %arg5[%274, %c0_i32_237] : memref<64x128xf32, #tpu.memory_space<any>> -> memref<1x128xf32, #tpu.memory_space<any>>
    %c6_i32_238 = arith.constant 6 : i32
    %c0_i32_239 = arith.constant 0 : i32
    %276 = tpu.memref_slice %arg9[%c1_i32_234, %c6_i32_238, %c0_i32_239] : memref<4x8x128xf32, #tpu.memory_space<vmem>> -> memref<1x1x128xf32, #tpu.memory_space<vmem>>
    %277 = tpu.memref_squeeze %276 : memref<1x1x128xf32, #tpu.memory_space<vmem>> -> memref<1x128xf32, #tpu.memory_space<vmem>>
    %278 = tpu.memref_slice %arg12[%c1_i32_235, %c6_i32_236] : memref<4x8x!tpu.dma_semaphore, #tpu.memory_space<semaphore_mem>> -> memref<1x1x!tpu.dma_semaphore, #tpu.memory_space<semaphore_mem>>
    %279 = tpu.memref_squeeze %278 : memref<1x1x!tpu.dma_semaphore, #tpu.memory_space<semaphore_mem>> -> memref<!tpu.dma_semaphore, #tpu.memory_space<semaphore_mem>>
    tpu.enqueue_dma source(%275 : memref<1x128xf32, #tpu.memory_space<any>>) target(%277 : memref<1x128xf32, #tpu.memory_space<vmem>>) target_semaphore(%279 : memref<!tpu.dma_semaphore, #tpu.memory_space<semaphore_mem>>)
    %280 = arith.index_cast %253 : i32 to index
    %c2_240 = arith.constant 2 : index
    %281 = memref.load %arg3[%280, %c2_240] : memref<8x4xi32, #tpu.memory_space<smem>>
    %c2_i32_241 = arith.constant 2 : i32
    %c2_i32_242 = arith.constant 2 : i32
    %c6_i32_243 = arith.constant 6 : i32
    %c0_i32_244 = arith.constant 0 : i32
    %282 = tpu.memref_slice %arg5[%281, %c0_i32_244] : memref<64x128xf32, #tpu.memory_space<any>> -> memref<1x128xf32, #tpu.memory_space<any>>
    %c6_i32_245 = arith.constant 6 : i32
    %c0_i32_246 = arith.constant 0 : i32
    %283 = tpu.memref_slice %arg9[%c2_i32_241, %c6_i32_245, %c0_i32_246] : memref<4x8x128xf32, #tpu.memory_space<vmem>> -> memref<1x1x128xf32, #tpu.memory_space<vmem>>
    %284 = tpu.memref_squeeze %283 : memref<1x1x128xf32, #tpu.memory_space<vmem>> -> memref<1x128xf32, #tpu.memory_space<vmem>>
    %285 = tpu.memref_slice %arg12[%c2_i32_242, %c6_i32_243] : memref<4x8x!tpu.dma_semaphore, #tpu.memory_space<semaphore_mem>> -> memref<1x1x!tpu.dma_semaphore, #tpu.memory_space<semaphore_mem>>
    %286 = tpu.memref_squeeze %285 : memref<1x1x!tpu.dma_semaphore, #tpu.memory_space<semaphore_mem>> -> memref<!tpu.dma_semaphore, #tpu.memory_space<semaphore_mem>>
    tpu.enqueue_dma source(%282 : memref<1x128xf32, #tpu.memory_space<any>>) target(%284 : memref<1x128xf32, #tpu.memory_space<vmem>>) target_semaphore(%286 : memref<!tpu.dma_semaphore, #tpu.memory_space<semaphore_mem>>)
    %287 = arith.index_cast %253 : i32 to index
    %c3_247 = arith.constant 3 : index
    %288 = memref.load %arg3[%287, %c3_247] : memref<8x4xi32, #tpu.memory_space<smem>>
    %c3_i32_248 = arith.constant 3 : i32
    %c3_i32_249 = arith.constant 3 : i32
    %c6_i32_250 = arith.constant 6 : i32
    %c0_i32_251 = arith.constant 0 : i32
    %289 = tpu.memref_slice %arg5[%288, %c0_i32_251] : memref<64x128xf32, #tpu.memory_space<any>> -> memref<1x128xf32, #tpu.memory_space<any>>
    %c6_i32_252 = arith.constant 6 : i32
    %c0_i32_253 = arith.constant 0 : i32
    %290 = tpu.memref_slice %arg9[%c3_i32_248, %c6_i32_252, %c0_i32_253] : memref<4x8x128xf32, #tpu.memory_space<vmem>> -> memref<1x1x128xf32, #tpu.memory_space<vmem>>
    %291 = tpu.memref_squeeze %290 : memref<1x1x128xf32, #tpu.memory_space<vmem>> -> memref<1x128xf32, #tpu.memory_space<vmem>>
    %292 = tpu.memref_slice %arg12[%c3_i32_249, %c6_i32_250] : memref<4x8x!tpu.dma_semaphore, #tpu.memory_space<semaphore_mem>> -> memref<1x1x!tpu.dma_semaphore, #tpu.memory_space<semaphore_mem>>
    %293 = tpu.memref_squeeze %292 : memref<1x1x!tpu.dma_semaphore, #tpu.memory_space<semaphore_mem>> -> memref<!tpu.dma_semaphore, #tpu.memory_space<semaphore_mem>>
    tpu.enqueue_dma source(%289 : memref<1x128xf32, #tpu.memory_space<any>>) target(%291 : memref<1x128xf32, #tpu.memory_space<vmem>>) target_semaphore(%293 : memref<!tpu.dma_semaphore, #tpu.memory_space<semaphore_mem>>)
    %c8_i32_254 = arith.constant 8 : i32
    %294 = arith.muli %arg0, %c8_i32_254 : i32
    %c7_i32 = arith.constant 7 : i32
    %295 = arith.addi %294, %c7_i32 : i32
    %296 = arith.index_cast %295 : i32 to index
    %297 = memref.load %arg1[%296] : memref<8xi32, #tpu.memory_space<smem>>
    %298 = arith.index_cast %295 : i32 to index
    %299 = memref.load %arg2[%298] : memref<8xi32, #tpu.memory_space<smem>>
    %c7_i32_255 = arith.constant 7 : i32
    %c0_i32_256 = arith.constant 0 : i32
    %300 = tpu.memref_slice %arg4[%297, %c0_i32_256] : memref<64x128xf32, #tpu.memory_space<any>> -> memref<1x128xf32, #tpu.memory_space<any>>
    %c7_i32_257 = arith.constant 7 : i32
    %c0_i32_258 = arith.constant 0 : i32
    %301 = tpu.memref_slice %arg7[%c7_i32_257, %c0_i32_258] : memref<8x128xf32, #tpu.memory_space<vmem>> -> memref<1x128xf32, #tpu.memory_space<vmem>>
    %302 = tpu.memref_slice %arg10[%c7_i32_255] : memref<8x!tpu.dma_semaphore, #tpu.memory_space<semaphore_mem>> -> memref<1x!tpu.dma_semaphore, #tpu.memory_space<semaphore_mem>>
    %303 = tpu.memref_squeeze %302 : memref<1x!tpu.dma_semaphore, #tpu.memory_space<semaphore_mem>> -> memref<!tpu.dma_semaphore, #tpu.memory_space<semaphore_mem>>
    tpu.enqueue_dma source(%300 : memref<1x128xf32, #tpu.memory_space<any>>) target(%301 : memref<1x128xf32, #tpu.memory_space<vmem>>) target_semaphore(%303 : memref<!tpu.dma_semaphore, #tpu.memory_space<semaphore_mem>>)
    %c7_i32_259 = arith.constant 7 : i32
    %c0_i32_260 = arith.constant 0 : i32
    %304 = tpu.memref_slice %arg5[%299, %c0_i32_260] : memref<64x128xf32, #tpu.memory_space<any>> -> memref<1x128xf32, #tpu.memory_space<any>>
    %c7_i32_261 = arith.constant 7 : i32
    %c0_i32_262 = arith.constant 0 : i32
    %305 = tpu.memref_slice %arg8[%c7_i32_261, %c0_i32_262] : memref<8x128xf32, #tpu.memory_space<vmem>> -> memref<1x128xf32, #tpu.memory_space<vmem>>
    %306 = tpu.memref_slice %arg11[%c7_i32_259] : memref<8x!tpu.dma_semaphore, #tpu.memory_space<semaphore_mem>> -> memref<1x!tpu.dma_semaphore, #tpu.memory_space<semaphore_mem>>
    %307 = tpu.memref_squeeze %306 : memref<1x!tpu.dma_semaphore, #tpu.memory_space<semaphore_mem>> -> memref<!tpu.dma_semaphore, #tpu.memory_space<semaphore_mem>>
    tpu.enqueue_dma source(%304 : memref<1x128xf32, #tpu.memory_space<any>>) target(%305 : memref<1x128xf32, #tpu.memory_space<vmem>>) target_semaphore(%307 : memref<!tpu.dma_semaphore, #tpu.memory_space<semaphore_mem>>)
    %308 = arith.index_cast %295 : i32 to index
    %c0_263 = arith.constant 0 : index
    %309 = memref.load %arg3[%308, %c0_263] : memref<8x4xi32, #tpu.memory_space<smem>>
    %c0_i32_264 = arith.constant 0 : i32
    %c0_i32_265 = arith.constant 0 : i32
    %c7_i32_266 = arith.constant 7 : i32
    %c0_i32_267 = arith.constant 0 : i32
    %310 = tpu.memref_slice %arg5[%309, %c0_i32_267] : memref<64x128xf32, #tpu.memory_space<any>> -> memref<1x128xf32, #tpu.memory_space<any>>
    %c7_i32_268 = arith.constant 7 : i32
    %c0_i32_269 = arith.constant 0 : i32
    %311 = tpu.memref_slice %arg9[%c0_i32_264, %c7_i32_268, %c0_i32_269] : memref<4x8x128xf32, #tpu.memory_space<vmem>> -> memref<1x1x128xf32, #tpu.memory_space<vmem>>
    %312 = tpu.memref_squeeze %311 : memref<1x1x128xf32, #tpu.memory_space<vmem>> -> memref<1x128xf32, #tpu.memory_space<vmem>>
    %313 = tpu.memref_slice %arg12[%c0_i32_265, %c7_i32_266] : memref<4x8x!tpu.dma_semaphore, #tpu.memory_space<semaphore_mem>> -> memref<1x1x!tpu.dma_semaphore, #tpu.memory_space<semaphore_mem>>
    %314 = tpu.memref_squeeze %313 : memref<1x1x!tpu.dma_semaphore, #tpu.memory_space<semaphore_mem>> -> memref<!tpu.dma_semaphore, #tpu.memory_space<semaphore_mem>>
    tpu.enqueue_dma source(%310 : memref<1x128xf32, #tpu.memory_space<any>>) target(%312 : memref<1x128xf32, #tpu.memory_space<vmem>>) target_semaphore(%314 : memref<!tpu.dma_semaphore, #tpu.memory_space<semaphore_mem>>)
    %315 = arith.index_cast %295 : i32 to index
    %c1_270 = arith.constant 1 : index
    %316 = memref.load %arg3[%315, %c1_270] : memref<8x4xi32, #tpu.memory_space<smem>>
    %c1_i32_271 = arith.constant 1 : i32
    %c1_i32_272 = arith.constant 1 : i32
    %c7_i32_273 = arith.constant 7 : i32
    %c0_i32_274 = arith.constant 0 : i32
    %317 = tpu.memref_slice %arg5[%316, %c0_i32_274] : memref<64x128xf32, #tpu.memory_space<any>> -> memref<1x128xf32, #tpu.memory_space<any>>
    %c7_i32_275 = arith.constant 7 : i32
    %c0_i32_276 = arith.constant 0 : i32
    %318 = tpu.memref_slice %arg9[%c1_i32_271, %c7_i32_275, %c0_i32_276] : memref<4x8x128xf32, #tpu.memory_space<vmem>> -> memref<1x1x128xf32, #tpu.memory_space<vmem>>
    %319 = tpu.memref_squeeze %318 : memref<1x1x128xf32, #tpu.memory_space<vmem>> -> memref<1x128xf32, #tpu.memory_space<vmem>>
    %320 = tpu.memref_slice %arg12[%c1_i32_272, %c7_i32_273] : memref<4x8x!tpu.dma_semaphore, #tpu.memory_space<semaphore_mem>> -> memref<1x1x!tpu.dma_semaphore, #tpu.memory_space<semaphore_mem>>
    %321 = tpu.memref_squeeze %320 : memref<1x1x!tpu.dma_semaphore, #tpu.memory_space<semaphore_mem>> -> memref<!tpu.dma_semaphore, #tpu.memory_space<semaphore_mem>>
    tpu.enqueue_dma source(%317 : memref<1x128xf32, #tpu.memory_space<any>>) target(%319 : memref<1x128xf32, #tpu.memory_space<vmem>>) target_semaphore(%321 : memref<!tpu.dma_semaphore, #tpu.memory_space<semaphore_mem>>)
    %322 = arith.index_cast %295 : i32 to index
    %c2_277 = arith.constant 2 : index
    %323 = memref.load %arg3[%322, %c2_277] : memref<8x4xi32, #tpu.memory_space<smem>>
    %c2_i32_278 = arith.constant 2 : i32
    %c2_i32_279 = arith.constant 2 : i32
    %c7_i32_280 = arith.constant 7 : i32
    %c0_i32_281 = arith.constant 0 : i32
    %324 = tpu.memref_slice %arg5[%323, %c0_i32_281] : memref<64x128xf32, #tpu.memory_space<any>> -> memref<1x128xf32, #tpu.memory_space<any>>
    %c7_i32_282 = arith.constant 7 : i32
    %c0_i32_283 = arith.constant 0 : i32
    %325 = tpu.memref_slice %arg9[%c2_i32_278, %c7_i32_282, %c0_i32_283] : memref<4x8x128xf32, #tpu.memory_space<vmem>> -> memref<1x1x128xf32, #tpu.memory_space<vmem>>
    %326 = tpu.memref_squeeze %325 : memref<1x1x128xf32, #tpu.memory_space<vmem>> -> memref<1x128xf32, #tpu.memory_space<vmem>>
    %327 = tpu.memref_slice %arg12[%c2_i32_279, %c7_i32_280] : memref<4x8x!tpu.dma_semaphore, #tpu.memory_space<semaphore_mem>> -> memref<1x1x!tpu.dma_semaphore, #tpu.memory_space<semaphore_mem>>
    %328 = tpu.memref_squeeze %327 : memref<1x1x!tpu.dma_semaphore, #tpu.memory_space<semaphore_mem>> -> memref<!tpu.dma_semaphore, #tpu.memory_space<semaphore_mem>>
    tpu.enqueue_dma source(%324 : memref<1x128xf32, #tpu.memory_space<any>>) target(%326 : memref<1x128xf32, #tpu.memory_space<vmem>>) target_semaphore(%328 : memref<!tpu.dma_semaphore, #tpu.memory_space<semaphore_mem>>)
    %329 = arith.index_cast %295 : i32 to index
    %c3_284 = arith.constant 3 : index
    %330 = memref.load %arg3[%329, %c3_284] : memref<8x4xi32, #tpu.memory_space<smem>>
    %c3_i32_285 = arith.constant 3 : i32
    %c3_i32_286 = arith.constant 3 : i32
    %c7_i32_287 = arith.constant 7 : i32
    %c0_i32_288 = arith.constant 0 : i32
    %331 = tpu.memref_slice %arg5[%330, %c0_i32_288] : memref<64x128xf32, #tpu.memory_space<any>> -> memref<1x128xf32, #tpu.memory_space<any>>
    %c7_i32_289 = arith.constant 7 : i32
    %c0_i32_290 = arith.constant 0 : i32
    %332 = tpu.memref_slice %arg9[%c3_i32_285, %c7_i32_289, %c0_i32_290] : memref<4x8x128xf32, #tpu.memory_space<vmem>> -> memref<1x1x128xf32, #tpu.memory_space<vmem>>
    %333 = tpu.memref_squeeze %332 : memref<1x1x128xf32, #tpu.memory_space<vmem>> -> memref<1x128xf32, #tpu.memory_space<vmem>>
    %334 = tpu.memref_slice %arg12[%c3_i32_286, %c7_i32_287] : memref<4x8x!tpu.dma_semaphore, #tpu.memory_space<semaphore_mem>> -> memref<1x1x!tpu.dma_semaphore, #tpu.memory_space<semaphore_mem>>
    %335 = tpu.memref_squeeze %334 : memref<1x1x!tpu.dma_semaphore, #tpu.memory_space<semaphore_mem>> -> memref<!tpu.dma_semaphore, #tpu.memory_space<semaphore_mem>>
    tpu.enqueue_dma source(%331 : memref<1x128xf32, #tpu.memory_space<any>>) target(%333 : memref<1x128xf32, #tpu.memory_space<vmem>>) target_semaphore(%335 : memref<!tpu.dma_semaphore, #tpu.memory_space<semaphore_mem>>)
    %c0_i32_291 = arith.constant 0 : i32
    %c0_i32_292 = arith.constant 0 : i32
    %336 = tpu.memref_slice %arg4[%3, %c0_i32_292] : memref<64x128xf32, #tpu.memory_space<any>> -> memref<1x128xf32, #tpu.memory_space<any>>
    %c0_i32_293 = arith.constant 0 : i32
    %c0_i32_294 = arith.constant 0 : i32
    %337 = tpu.memref_slice %arg7[%c0_i32_293, %c0_i32_294] : memref<8x128xf32, #tpu.memory_space<vmem>> -> memref<1x128xf32, #tpu.memory_space<vmem>>
    %338 = tpu.memref_slice %arg10[%c0_i32_291] : memref<8x!tpu.dma_semaphore, #tpu.memory_space<semaphore_mem>> -> memref<1x!tpu.dma_semaphore, #tpu.memory_space<semaphore_mem>>
    %339 = tpu.memref_squeeze %338 : memref<1x!tpu.dma_semaphore, #tpu.memory_space<semaphore_mem>> -> memref<!tpu.dma_semaphore, #tpu.memory_space<semaphore_mem>>
    tpu.wait_dma2 semaphore(%339 : memref<!tpu.dma_semaphore, #tpu.memory_space<semaphore_mem>>) src(%336 : memref<1x128xf32, #tpu.memory_space<any>>) dst(%337 : memref<1x128xf32, #tpu.memory_space<vmem>>)
    %c0_i32_295 = arith.constant 0 : i32
    %c0_i32_296 = arith.constant 0 : i32
    %340 = tpu.memref_slice %arg5[%5, %c0_i32_296] : memref<64x128xf32, #tpu.memory_space<any>> -> memref<1x128xf32, #tpu.memory_space<any>>
    %c0_i32_297 = arith.constant 0 : i32
    %c0_i32_298 = arith.constant 0 : i32
    %341 = tpu.memref_slice %arg8[%c0_i32_297, %c0_i32_298] : memref<8x128xf32, #tpu.memory_space<vmem>> -> memref<1x128xf32, #tpu.memory_space<vmem>>
    %342 = tpu.memref_slice %arg11[%c0_i32_295] : memref<8x!tpu.dma_semaphore, #tpu.memory_space<semaphore_mem>> -> memref<1x!tpu.dma_semaphore, #tpu.memory_space<semaphore_mem>>
    %343 = tpu.memref_squeeze %342 : memref<1x!tpu.dma_semaphore, #tpu.memory_space<semaphore_mem>> -> memref<!tpu.dma_semaphore, #tpu.memory_space<semaphore_mem>>
    tpu.wait_dma2 semaphore(%343 : memref<!tpu.dma_semaphore, #tpu.memory_space<semaphore_mem>>) src(%340 : memref<1x128xf32, #tpu.memory_space<any>>) dst(%341 : memref<1x128xf32, #tpu.memory_space<vmem>>)
    %c0_i32_299 = arith.constant 0 : i32
    %c0_i32_300 = arith.constant 0 : i32
    %c0_i32_301 = arith.constant 0 : i32
    %c0_i32_302 = arith.constant 0 : i32
    %344 = tpu.memref_slice %arg5[%15, %c0_i32_302] : memref<64x128xf32, #tpu.memory_space<any>> -> memref<1x128xf32, #tpu.memory_space<any>>
    %c0_i32_303 = arith.constant 0 : i32
    %c0_i32_304 = arith.constant 0 : i32
    %345 = tpu.memref_slice %arg9[%c0_i32_299, %c0_i32_303, %c0_i32_304] : memref<4x8x128xf32, #tpu.memory_space<vmem>> -> memref<1x1x128xf32, #tpu.memory_space<vmem>>
    %346 = tpu.memref_squeeze %345 : memref<1x1x128xf32, #tpu.memory_space<vmem>> -> memref<1x128xf32, #tpu.memory_space<vmem>>
    %347 = tpu.memref_slice %arg12[%c0_i32_300, %c0_i32_301] : memref<4x8x!tpu.dma_semaphore, #tpu.memory_space<semaphore_mem>> -> memref<1x1x!tpu.dma_semaphore, #tpu.memory_space<semaphore_mem>>
    %348 = tpu.memref_squeeze %347 : memref<1x1x!tpu.dma_semaphore, #tpu.memory_space<semaphore_mem>> -> memref<!tpu.dma_semaphore, #tpu.memory_space<semaphore_mem>>
    tpu.wait_dma2 semaphore(%348 : memref<!tpu.dma_semaphore, #tpu.memory_space<semaphore_mem>>) src(%344 : memref<1x128xf32, #tpu.memory_space<any>>) dst(%346 : memref<1x128xf32, #tpu.memory_space<vmem>>)
    %c1_i32_305 = arith.constant 1 : i32
    %c1_i32_306 = arith.constant 1 : i32
    %c0_i32_307 = arith.constant 0 : i32
    %c0_i32_308 = arith.constant 0 : i32
    %349 = tpu.memref_slice %arg5[%22, %c0_i32_308] : memref<64x128xf32, #tpu.memory_space<any>> -> memref<1x128xf32, #tpu.memory_space<any>>
    %c0_i32_309 = arith.constant 0 : i32
    %c0_i32_310 = arith.constant 0 : i32
    %350 = tpu.memref_slice %arg9[%c1_i32_305, %c0_i32_309, %c0_i32_310] : memref<4x8x128xf32, #tpu.memory_space<vmem>> -> memref<1x1x128xf32, #tpu.memory_space<vmem>>
    %351 = tpu.memref_squeeze %350 : memref<1x1x128xf32, #tpu.memory_space<vmem>> -> memref<1x128xf32, #tpu.memory_space<vmem>>
    %352 = tpu.memref_slice %arg12[%c1_i32_306, %c0_i32_307] : memref<4x8x!tpu.dma_semaphore, #tpu.memory_space<semaphore_mem>> -> memref<1x1x!tpu.dma_semaphore, #tpu.memory_space<semaphore_mem>>
    %353 = tpu.memref_squeeze %352 : memref<1x1x!tpu.dma_semaphore, #tpu.memory_space<semaphore_mem>> -> memref<!tpu.dma_semaphore, #tpu.memory_space<semaphore_mem>>
    tpu.wait_dma2 semaphore(%353 : memref<!tpu.dma_semaphore, #tpu.memory_space<semaphore_mem>>) src(%349 : memref<1x128xf32, #tpu.memory_space<any>>) dst(%351 : memref<1x128xf32, #tpu.memory_space<vmem>>)
    %c2_i32_311 = arith.constant 2 : i32
    %c2_i32_312 = arith.constant 2 : i32
    %c0_i32_313 = arith.constant 0 : i32
    %c0_i32_314 = arith.constant 0 : i32
    %354 = tpu.memref_slice %arg5[%29, %c0_i32_314] : memref<64x128xf32, #tpu.memory_space<any>> -> memref<1x128xf32, #tpu.memory_space<any>>
    %c0_i32_315 = arith.constant 0 : i32
    %c0_i32_316 = arith.constant 0 : i32
    %355 = tpu.memref_slice %arg9[%c2_i32_311, %c0_i32_315, %c0_i32_316] : memref<4x8x128xf32, #tpu.memory_space<vmem>> -> memref<1x1x128xf32, #tpu.memory_space<vmem>>
    %356 = tpu.memref_squeeze %355 : memref<1x1x128xf32, #tpu.memory_space<vmem>> -> memref<1x128xf32, #tpu.memory_space<vmem>>
    %357 = tpu.memref_slice %arg12[%c2_i32_312, %c0_i32_313] : memref<4x8x!tpu.dma_semaphore, #tpu.memory_space<semaphore_mem>> -> memref<1x1x!tpu.dma_semaphore, #tpu.memory_space<semaphore_mem>>
    %358 = tpu.memref_squeeze %357 : memref<1x1x!tpu.dma_semaphore, #tpu.memory_space<semaphore_mem>> -> memref<!tpu.dma_semaphore, #tpu.memory_space<semaphore_mem>>
    tpu.wait_dma2 semaphore(%358 : memref<!tpu.dma_semaphore, #tpu.memory_space<semaphore_mem>>) src(%354 : memref<1x128xf32, #tpu.memory_space<any>>) dst(%356 : memref<1x128xf32, #tpu.memory_space<vmem>>)
    %c3_i32_317 = arith.constant 3 : i32
    %c3_i32_318 = arith.constant 3 : i32
    %c0_i32_319 = arith.constant 0 : i32
    %c0_i32_320 = arith.constant 0 : i32
    %359 = tpu.memref_slice %arg5[%36, %c0_i32_320] : memref<64x128xf32, #tpu.memory_space<any>> -> memref<1x128xf32, #tpu.memory_space<any>>
    %c0_i32_321 = arith.constant 0 : i32
    %c0_i32_322 = arith.constant 0 : i32
    %360 = tpu.memref_slice %arg9[%c3_i32_317, %c0_i32_321, %c0_i32_322] : memref<4x8x128xf32, #tpu.memory_space<vmem>> -> memref<1x1x128xf32, #tpu.memory_space<vmem>>
    %361 = tpu.memref_squeeze %360 : memref<1x1x128xf32, #tpu.memory_space<vmem>> -> memref<1x128xf32, #tpu.memory_space<vmem>>
    %362 = tpu.memref_slice %arg12[%c3_i32_318, %c0_i32_319] : memref<4x8x!tpu.dma_semaphore, #tpu.memory_space<semaphore_mem>> -> memref<1x1x!tpu.dma_semaphore, #tpu.memory_space<semaphore_mem>>
    %363 = tpu.memref_squeeze %362 : memref<1x1x!tpu.dma_semaphore, #tpu.memory_space<semaphore_mem>> -> memref<!tpu.dma_semaphore, #tpu.memory_space<semaphore_mem>>
    tpu.wait_dma2 semaphore(%363 : memref<!tpu.dma_semaphore, #tpu.memory_space<semaphore_mem>>) src(%359 : memref<1x128xf32, #tpu.memory_space<any>>) dst(%361 : memref<1x128xf32, #tpu.memory_space<vmem>>)
    %c1_i32_323 = arith.constant 1 : i32
    %c0_i32_324 = arith.constant 0 : i32
    %364 = tpu.memref_slice %arg4[%45, %c0_i32_324] : memref<64x128xf32, #tpu.memory_space<any>> -> memref<1x128xf32, #tpu.memory_space<any>>
    %c1_i32_325 = arith.constant 1 : i32
    %c0_i32_326 = arith.constant 0 : i32
    %365 = tpu.memref_slice %arg7[%c1_i32_325, %c0_i32_326] : memref<8x128xf32, #tpu.memory_space<vmem>> -> memref<1x128xf32, #tpu.memory_space<vmem>>
    %366 = tpu.memref_slice %arg10[%c1_i32_323] : memref<8x!tpu.dma_semaphore, #tpu.memory_space<semaphore_mem>> -> memref<1x!tpu.dma_semaphore, #tpu.memory_space<semaphore_mem>>
    %367 = tpu.memref_squeeze %366 : memref<1x!tpu.dma_semaphore, #tpu.memory_space<semaphore_mem>> -> memref<!tpu.dma_semaphore, #tpu.memory_space<semaphore_mem>>
    tpu.wait_dma2 semaphore(%367 : memref<!tpu.dma_semaphore, #tpu.memory_space<semaphore_mem>>) src(%364 : memref<1x128xf32, #tpu.memory_space<any>>) dst(%365 : memref<1x128xf32, #tpu.memory_space<vmem>>)
    %c1_i32_327 = arith.constant 1 : i32
    %c0_i32_328 = arith.constant 0 : i32
    %368 = tpu.memref_slice %arg5[%47, %c0_i32_328] : memref<64x128xf32, #tpu.memory_space<any>> -> memref<1x128xf32, #tpu.memory_space<any>>
    %c1_i32_329 = arith.constant 1 : i32
    %c0_i32_330 = arith.constant 0 : i32
    %369 = tpu.memref_slice %arg8[%c1_i32_329, %c0_i32_330] : memref<8x128xf32, #tpu.memory_space<vmem>> -> memref<1x128xf32, #tpu.memory_space<vmem>>
    %370 = tpu.memref_slice %arg11[%c1_i32_327] : memref<8x!tpu.dma_semaphore, #tpu.memory_space<semaphore_mem>> -> memref<1x!tpu.dma_semaphore, #tpu.memory_space<semaphore_mem>>
    %371 = tpu.memref_squeeze %370 : memref<1x!tpu.dma_semaphore, #tpu.memory_space<semaphore_mem>> -> memref<!tpu.dma_semaphore, #tpu.memory_space<semaphore_mem>>
    tpu.wait_dma2 semaphore(%371 : memref<!tpu.dma_semaphore, #tpu.memory_space<semaphore_mem>>) src(%368 : memref<1x128xf32, #tpu.memory_space<any>>) dst(%369 : memref<1x128xf32, #tpu.memory_space<vmem>>)
    %c0_i32_331 = arith.constant 0 : i32
    %c0_i32_332 = arith.constant 0 : i32
    %c1_i32_333 = arith.constant 1 : i32
    %c0_i32_334 = arith.constant 0 : i32
    %372 = tpu.memref_slice %arg5[%57, %c0_i32_334] : memref<64x128xf32, #tpu.memory_space<any>> -> memref<1x128xf32, #tpu.memory_space<any>>
    %c1_i32_335 = arith.constant 1 : i32
    %c0_i32_336 = arith.constant 0 : i32
    %373 = tpu.memref_slice %arg9[%c0_i32_331, %c1_i32_335, %c0_i32_336] : memref<4x8x128xf32, #tpu.memory_space<vmem>> -> memref<1x1x128xf32, #tpu.memory_space<vmem>>
    %374 = tpu.memref_squeeze %373 : memref<1x1x128xf32, #tpu.memory_space<vmem>> -> memref<1x128xf32, #tpu.memory_space<vmem>>
    %375 = tpu.memref_slice %arg12[%c0_i32_332, %c1_i32_333] : memref<4x8x!tpu.dma_semaphore, #tpu.memory_space<semaphore_mem>> -> memref<1x1x!tpu.dma_semaphore, #tpu.memory_space<semaphore_mem>>
    %376 = tpu.memref_squeeze %375 : memref<1x1x!tpu.dma_semaphore, #tpu.memory_space<semaphore_mem>> -> memref<!tpu.dma_semaphore, #tpu.memory_space<semaphore_mem>>
    tpu.wait_dma2 semaphore(%376 : memref<!tpu.dma_semaphore, #tpu.memory_space<semaphore_mem>>) src(%372 : memref<1x128xf32, #tpu.memory_space<any>>) dst(%374 : memref<1x128xf32, #tpu.memory_space<vmem>>)
    %c1_i32_337 = arith.constant 1 : i32
    %c1_i32_338 = arith.constant 1 : i32
    %c1_i32_339 = arith.constant 1 : i32
    %c0_i32_340 = arith.constant 0 : i32
    %377 = tpu.memref_slice %arg5[%64, %c0_i32_340] : memref<64x128xf32, #tpu.memory_space<any>> -> memref<1x128xf32, #tpu.memory_space<any>>
    %c1_i32_341 = arith.constant 1 : i32
    %c0_i32_342 = arith.constant 0 : i32
    %378 = tpu.memref_slice %arg9[%c1_i32_337, %c1_i32_341, %c0_i32_342] : memref<4x8x128xf32, #tpu.memory_space<vmem>> -> memref<1x1x128xf32, #tpu.memory_space<vmem>>
    %379 = tpu.memref_squeeze %378 : memref<1x1x128xf32, #tpu.memory_space<vmem>> -> memref<1x128xf32, #tpu.memory_space<vmem>>
    %380 = tpu.memref_slice %arg12[%c1_i32_338, %c1_i32_339] : memref<4x8x!tpu.dma_semaphore, #tpu.memory_space<semaphore_mem>> -> memref<1x1x!tpu.dma_semaphore, #tpu.memory_space<semaphore_mem>>
    %381 = tpu.memref_squeeze %380 : memref<1x1x!tpu.dma_semaphore, #tpu.memory_space<semaphore_mem>> -> memref<!tpu.dma_semaphore, #tpu.memory_space<semaphore_mem>>
    tpu.wait_dma2 semaphore(%381 : memref<!tpu.dma_semaphore, #tpu.memory_space<semaphore_mem>>) src(%377 : memref<1x128xf32, #tpu.memory_space<any>>) dst(%379 : memref<1x128xf32, #tpu.memory_space<vmem>>)
    %c2_i32_343 = arith.constant 2 : i32
    %c2_i32_344 = arith.constant 2 : i32
    %c1_i32_345 = arith.constant 1 : i32
    %c0_i32_346 = arith.constant 0 : i32
    %382 = tpu.memref_slice %arg5[%71, %c0_i32_346] : memref<64x128xf32, #tpu.memory_space<any>> -> memref<1x128xf32, #tpu.memory_space<any>>
    %c1_i32_347 = arith.constant 1 : i32
    %c0_i32_348 = arith.constant 0 : i32
    %383 = tpu.memref_slice %arg9[%c2_i32_343, %c1_i32_347, %c0_i32_348] : memref<4x8x128xf32, #tpu.memory_space<vmem>> -> memref<1x1x128xf32, #tpu.memory_space<vmem>>
    %384 = tpu.memref_squeeze %383 : memref<1x1x128xf32, #tpu.memory_space<vmem>> -> memref<1x128xf32, #tpu.memory_space<vmem>>
    %385 = tpu.memref_slice %arg12[%c2_i32_344, %c1_i32_345] : memref<4x8x!tpu.dma_semaphore, #tpu.memory_space<semaphore_mem>> -> memref<1x1x!tpu.dma_semaphore, #tpu.memory_space<semaphore_mem>>
    %386 = tpu.memref_squeeze %385 : memref<1x1x!tpu.dma_semaphore, #tpu.memory_space<semaphore_mem>> -> memref<!tpu.dma_semaphore, #tpu.memory_space<semaphore_mem>>
    tpu.wait_dma2 semaphore(%386 : memref<!tpu.dma_semaphore, #tpu.memory_space<semaphore_mem>>) src(%382 : memref<1x128xf32, #tpu.memory_space<any>>) dst(%384 : memref<1x128xf32, #tpu.memory_space<vmem>>)
    %c3_i32_349 = arith.constant 3 : i32
    %c3_i32_350 = arith.constant 3 : i32
    %c1_i32_351 = arith.constant 1 : i32
    %c0_i32_352 = arith.constant 0 : i32
    %387 = tpu.memref_slice %arg5[%78, %c0_i32_352] : memref<64x128xf32, #tpu.memory_space<any>> -> memref<1x128xf32, #tpu.memory_space<any>>
    %c1_i32_353 = arith.constant 1 : i32
    %c0_i32_354 = arith.constant 0 : i32
    %388 = tpu.memref_slice %arg9[%c3_i32_349, %c1_i32_353, %c0_i32_354] : memref<4x8x128xf32, #tpu.memory_space<vmem>> -> memref<1x1x128xf32, #tpu.memory_space<vmem>>
    %389 = tpu.memref_squeeze %388 : memref<1x1x128xf32, #tpu.memory_space<vmem>> -> memref<1x128xf32, #tpu.memory_space<vmem>>
    %390 = tpu.memref_slice %arg12[%c3_i32_350, %c1_i32_351] : memref<4x8x!tpu.dma_semaphore, #tpu.memory_space<semaphore_mem>> -> memref<1x1x!tpu.dma_semaphore, #tpu.memory_space<semaphore_mem>>
    %391 = tpu.memref_squeeze %390 : memref<1x1x!tpu.dma_semaphore, #tpu.memory_space<semaphore_mem>> -> memref<!tpu.dma_semaphore, #tpu.memory_space<semaphore_mem>>
    tpu.wait_dma2 semaphore(%391 : memref<!tpu.dma_semaphore, #tpu.memory_space<semaphore_mem>>) src(%387 : memref<1x128xf32, #tpu.memory_space<any>>) dst(%389 : memref<1x128xf32, #tpu.memory_space<vmem>>)
    %c2_i32_355 = arith.constant 2 : i32
    %c0_i32_356 = arith.constant 0 : i32
    %392 = tpu.memref_slice %arg4[%87, %c0_i32_356] : memref<64x128xf32, #tpu.memory_space<any>> -> memref<1x128xf32, #tpu.memory_space<any>>
    %c2_i32_357 = arith.constant 2 : i32
    %c0_i32_358 = arith.constant 0 : i32
    %393 = tpu.memref_slice %arg7[%c2_i32_357, %c0_i32_358] : memref<8x128xf32, #tpu.memory_space<vmem>> -> memref<1x128xf32, #tpu.memory_space<vmem>>
    %394 = tpu.memref_slice %arg10[%c2_i32_355] : memref<8x!tpu.dma_semaphore, #tpu.memory_space<semaphore_mem>> -> memref<1x!tpu.dma_semaphore, #tpu.memory_space<semaphore_mem>>
    %395 = tpu.memref_squeeze %394 : memref<1x!tpu.dma_semaphore, #tpu.memory_space<semaphore_mem>> -> memref<!tpu.dma_semaphore, #tpu.memory_space<semaphore_mem>>
    tpu.wait_dma2 semaphore(%395 : memref<!tpu.dma_semaphore, #tpu.memory_space<semaphore_mem>>) src(%392 : memref<1x128xf32, #tpu.memory_space<any>>) dst(%393 : memref<1x128xf32, #tpu.memory_space<vmem>>)
    %c2_i32_359 = arith.constant 2 : i32
    %c0_i32_360 = arith.constant 0 : i32
    %396 = tpu.memref_slice %arg5[%89, %c0_i32_360] : memref<64x128xf32, #tpu.memory_space<any>> -> memref<1x128xf32, #tpu.memory_space<any>>
    %c2_i32_361 = arith.constant 2 : i32
    %c0_i32_362 = arith.constant 0 : i32
    %397 = tpu.memref_slice %arg8[%c2_i32_361, %c0_i32_362] : memref<8x128xf32, #tpu.memory_space<vmem>> -> memref<1x128xf32, #tpu.memory_space<vmem>>
    %398 = tpu.memref_slice %arg11[%c2_i32_359] : memref<8x!tpu.dma_semaphore, #tpu.memory_space<semaphore_mem>> -> memref<1x!tpu.dma_semaphore, #tpu.memory_space<semaphore_mem>>
    %399 = tpu.memref_squeeze %398 : memref<1x!tpu.dma_semaphore, #tpu.memory_space<semaphore_mem>> -> memref<!tpu.dma_semaphore, #tpu.memory_space<semaphore_mem>>
    tpu.wait_dma2 semaphore(%399 : memref<!tpu.dma_semaphore, #tpu.memory_space<semaphore_mem>>) src(%396 : memref<1x128xf32, #tpu.memory_space<any>>) dst(%397 : memref<1x128xf32, #tpu.memory_space<vmem>>)
    %c0_i32_363 = arith.constant 0 : i32
    %c0_i32_364 = arith.constant 0 : i32
    %c2_i32_365 = arith.constant 2 : i32
    %c0_i32_366 = arith.constant 0 : i32
    %400 = tpu.memref_slice %arg5[%99, %c0_i32_366] : memref<64x128xf32, #tpu.memory_space<any>> -> memref<1x128xf32, #tpu.memory_space<any>>
    %c2_i32_367 = arith.constant 2 : i32
    %c0_i32_368 = arith.constant 0 : i32
    %401 = tpu.memref_slice %arg9[%c0_i32_363, %c2_i32_367, %c0_i32_368] : memref<4x8x128xf32, #tpu.memory_space<vmem>> -> memref<1x1x128xf32, #tpu.memory_space<vmem>>
    %402 = tpu.memref_squeeze %401 : memref<1x1x128xf32, #tpu.memory_space<vmem>> -> memref<1x128xf32, #tpu.memory_space<vmem>>
    %403 = tpu.memref_slice %arg12[%c0_i32_364, %c2_i32_365] : memref<4x8x!tpu.dma_semaphore, #tpu.memory_space<semaphore_mem>> -> memref<1x1x!tpu.dma_semaphore, #tpu.memory_space<semaphore_mem>>
    %404 = tpu.memref_squeeze %403 : memref<1x1x!tpu.dma_semaphore, #tpu.memory_space<semaphore_mem>> -> memref<!tpu.dma_semaphore, #tpu.memory_space<semaphore_mem>>
    tpu.wait_dma2 semaphore(%404 : memref<!tpu.dma_semaphore, #tpu.memory_space<semaphore_mem>>) src(%400 : memref<1x128xf32, #tpu.memory_space<any>>) dst(%402 : memref<1x128xf32, #tpu.memory_space<vmem>>)
    %c1_i32_369 = arith.constant 1 : i32
    %c1_i32_370 = arith.constant 1 : i32
    %c2_i32_371 = arith.constant 2 : i32
    %c0_i32_372 = arith.constant 0 : i32
    %405 = tpu.memref_slice %arg5[%106, %c0_i32_372] : memref<64x128xf32, #tpu.memory_space<any>> -> memref<1x128xf32, #tpu.memory_space<any>>
    %c2_i32_373 = arith.constant 2 : i32
    %c0_i32_374 = arith.constant 0 : i32
    %406 = tpu.memref_slice %arg9[%c1_i32_369, %c2_i32_373, %c0_i32_374] : memref<4x8x128xf32, #tpu.memory_space<vmem>> -> memref<1x1x128xf32, #tpu.memory_space<vmem>>
    %407 = tpu.memref_squeeze %406 : memref<1x1x128xf32, #tpu.memory_space<vmem>> -> memref<1x128xf32, #tpu.memory_space<vmem>>
    %408 = tpu.memref_slice %arg12[%c1_i32_370, %c2_i32_371] : memref<4x8x!tpu.dma_semaphore, #tpu.memory_space<semaphore_mem>> -> memref<1x1x!tpu.dma_semaphore, #tpu.memory_space<semaphore_mem>>
    %409 = tpu.memref_squeeze %408 : memref<1x1x!tpu.dma_semaphore, #tpu.memory_space<semaphore_mem>> -> memref<!tpu.dma_semaphore, #tpu.memory_space<semaphore_mem>>
    tpu.wait_dma2 semaphore(%409 : memref<!tpu.dma_semaphore, #tpu.memory_space<semaphore_mem>>) src(%405 : memref<1x128xf32, #tpu.memory_space<any>>) dst(%407 : memref<1x128xf32, #tpu.memory_space<vmem>>)
    %c2_i32_375 = arith.constant 2 : i32
    %c2_i32_376 = arith.constant 2 : i32
    %c2_i32_377 = arith.constant 2 : i32
    %c0_i32_378 = arith.constant 0 : i32
    %410 = tpu.memref_slice %arg5[%113, %c0_i32_378] : memref<64x128xf32, #tpu.memory_space<any>> -> memref<1x128xf32, #tpu.memory_space<any>>
    %c2_i32_379 = arith.constant 2 : i32
    %c0_i32_380 = arith.constant 0 : i32
    %411 = tpu.memref_slice %arg9[%c2_i32_375, %c2_i32_379, %c0_i32_380] : memref<4x8x128xf32, #tpu.memory_space<vmem>> -> memref<1x1x128xf32, #tpu.memory_space<vmem>>
    %412 = tpu.memref_squeeze %411 : memref<1x1x128xf32, #tpu.memory_space<vmem>> -> memref<1x128xf32, #tpu.memory_space<vmem>>
    %413 = tpu.memref_slice %arg12[%c2_i32_376, %c2_i32_377] : memref<4x8x!tpu.dma_semaphore, #tpu.memory_space<semaphore_mem>> -> memref<1x1x!tpu.dma_semaphore, #tpu.memory_space<semaphore_mem>>
    %414 = tpu.memref_squeeze %413 : memref<1x1x!tpu.dma_semaphore, #tpu.memory_space<semaphore_mem>> -> memref<!tpu.dma_semaphore, #tpu.memory_space<semaphore_mem>>
    tpu.wait_dma2 semaphore(%414 : memref<!tpu.dma_semaphore, #tpu.memory_space<semaphore_mem>>) src(%410 : memref<1x128xf32, #tpu.memory_space<any>>) dst(%412 : memref<1x128xf32, #tpu.memory_space<vmem>>)
    %c3_i32_381 = arith.constant 3 : i32
    %c3_i32_382 = arith.constant 3 : i32
    %c2_i32_383 = arith.constant 2 : i32
    %c0_i32_384 = arith.constant 0 : i32
    %415 = tpu.memref_slice %arg5[%120, %c0_i32_384] : memref<64x128xf32, #tpu.memory_space<any>> -> memref<1x128xf32, #tpu.memory_space<any>>
    %c2_i32_385 = arith.constant 2 : i32
    %c0_i32_386 = arith.constant 0 : i32
    %416 = tpu.memref_slice %arg9[%c3_i32_381, %c2_i32_385, %c0_i32_386] : memref<4x8x128xf32, #tpu.memory_space<vmem>> -> memref<1x1x128xf32, #tpu.memory_space<vmem>>
    %417 = tpu.memref_squeeze %416 : memref<1x1x128xf32, #tpu.memory_space<vmem>> -> memref<1x128xf32, #tpu.memory_space<vmem>>
    %418 = tpu.memref_slice %arg12[%c3_i32_382, %c2_i32_383] : memref<4x8x!tpu.dma_semaphore, #tpu.memory_space<semaphore_mem>> -> memref<1x1x!tpu.dma_semaphore, #tpu.memory_space<semaphore_mem>>
    %419 = tpu.memref_squeeze %418 : memref<1x1x!tpu.dma_semaphore, #tpu.memory_space<semaphore_mem>> -> memref<!tpu.dma_semaphore, #tpu.memory_space<semaphore_mem>>
    tpu.wait_dma2 semaphore(%419 : memref<!tpu.dma_semaphore, #tpu.memory_space<semaphore_mem>>) src(%415 : memref<1x128xf32, #tpu.memory_space<any>>) dst(%417 : memref<1x128xf32, #tpu.memory_space<vmem>>)
    %c3_i32_387 = arith.constant 3 : i32
    %c0_i32_388 = arith.constant 0 : i32
    %420 = tpu.memref_slice %arg4[%129, %c0_i32_388] : memref<64x128xf32, #tpu.memory_space<any>> -> memref<1x128xf32, #tpu.memory_space<any>>
    %c3_i32_389 = arith.constant 3 : i32
    %c0_i32_390 = arith.constant 0 : i32
    %421 = tpu.memref_slice %arg7[%c3_i32_389, %c0_i32_390] : memref<8x128xf32, #tpu.memory_space<vmem>> -> memref<1x128xf32, #tpu.memory_space<vmem>>
    %422 = tpu.memref_slice %arg10[%c3_i32_387] : memref<8x!tpu.dma_semaphore, #tpu.memory_space<semaphore_mem>> -> memref<1x!tpu.dma_semaphore, #tpu.memory_space<semaphore_mem>>
    %423 = tpu.memref_squeeze %422 : memref<1x!tpu.dma_semaphore, #tpu.memory_space<semaphore_mem>> -> memref<!tpu.dma_semaphore, #tpu.memory_space<semaphore_mem>>
    tpu.wait_dma2 semaphore(%423 : memref<!tpu.dma_semaphore, #tpu.memory_space<semaphore_mem>>) src(%420 : memref<1x128xf32, #tpu.memory_space<any>>) dst(%421 : memref<1x128xf32, #tpu.memory_space<vmem>>)
    %c3_i32_391 = arith.constant 3 : i32
    %c0_i32_392 = arith.constant 0 : i32
    %424 = tpu.memref_slice %arg5[%131, %c0_i32_392] : memref<64x128xf32, #tpu.memory_space<any>> -> memref<1x128xf32, #tpu.memory_space<any>>
    %c3_i32_393 = arith.constant 3 : i32
    %c0_i32_394 = arith.constant 0 : i32
    %425 = tpu.memref_slice %arg8[%c3_i32_393, %c0_i32_394] : memref<8x128xf32, #tpu.memory_space<vmem>> -> memref<1x128xf32, #tpu.memory_space<vmem>>
    %426 = tpu.memref_slice %arg11[%c3_i32_391] : memref<8x!tpu.dma_semaphore, #tpu.memory_space<semaphore_mem>> -> memref<1x!tpu.dma_semaphore, #tpu.memory_space<semaphore_mem>>
    %427 = tpu.memref_squeeze %426 : memref<1x!tpu.dma_semaphore, #tpu.memory_space<semaphore_mem>> -> memref<!tpu.dma_semaphore, #tpu.memory_space<semaphore_mem>>
    tpu.wait_dma2 semaphore(%427 : memref<!tpu.dma_semaphore, #tpu.memory_space<semaphore_mem>>) src(%424 : memref<1x128xf32, #tpu.memory_space<any>>) dst(%425 : memref<1x128xf32, #tpu.memory_space<vmem>>)
    %c0_i32_395 = arith.constant 0 : i32
    %c0_i32_396 = arith.constant 0 : i32
    %c3_i32_397 = arith.constant 3 : i32
    %c0_i32_398 = arith.constant 0 : i32
    %428 = tpu.memref_slice %arg5[%141, %c0_i32_398] : memref<64x128xf32, #tpu.memory_space<any>> -> memref<1x128xf32, #tpu.memory_space<any>>
    %c3_i32_399 = arith.constant 3 : i32
    %c0_i32_400 = arith.constant 0 : i32
    %429 = tpu.memref_slice %arg9[%c0_i32_395, %c3_i32_399, %c0_i32_400] : memref<4x8x128xf32, #tpu.memory_space<vmem>> -> memref<1x1x128xf32, #tpu.memory_space<vmem>>
    %430 = tpu.memref_squeeze %429 : memref<1x1x128xf32, #tpu.memory_space<vmem>> -> memref<1x128xf32, #tpu.memory_space<vmem>>
    %431 = tpu.memref_slice %arg12[%c0_i32_396, %c3_i32_397] : memref<4x8x!tpu.dma_semaphore, #tpu.memory_space<semaphore_mem>> -> memref<1x1x!tpu.dma_semaphore, #tpu.memory_space<semaphore_mem>>
    %432 = tpu.memref_squeeze %431 : memref<1x1x!tpu.dma_semaphore, #tpu.memory_space<semaphore_mem>> -> memref<!tpu.dma_semaphore, #tpu.memory_space<semaphore_mem>>
    tpu.wait_dma2 semaphore(%432 : memref<!tpu.dma_semaphore, #tpu.memory_space<semaphore_mem>>) src(%428 : memref<1x128xf32, #tpu.memory_space<any>>) dst(%430 : memref<1x128xf32, #tpu.memory_space<vmem>>)
    %c1_i32_401 = arith.constant 1 : i32
    %c1_i32_402 = arith.constant 1 : i32
    %c3_i32_403 = arith.constant 3 : i32
    %c0_i32_404 = arith.constant 0 : i32
    %433 = tpu.memref_slice %arg5[%148, %c0_i32_404] : memref<64x128xf32, #tpu.memory_space<any>> -> memref<1x128xf32, #tpu.memory_space<any>>
    %c3_i32_405 = arith.constant 3 : i32
    %c0_i32_406 = arith.constant 0 : i32
    %434 = tpu.memref_slice %arg9[%c1_i32_401, %c3_i32_405, %c0_i32_406] : memref<4x8x128xf32, #tpu.memory_space<vmem>> -> memref<1x1x128xf32, #tpu.memory_space<vmem>>
    %435 = tpu.memref_squeeze %434 : memref<1x1x128xf32, #tpu.memory_space<vmem>> -> memref<1x128xf32, #tpu.memory_space<vmem>>
    %436 = tpu.memref_slice %arg12[%c1_i32_402, %c3_i32_403] : memref<4x8x!tpu.dma_semaphore, #tpu.memory_space<semaphore_mem>> -> memref<1x1x!tpu.dma_semaphore, #tpu.memory_space<semaphore_mem>>
    %437 = tpu.memref_squeeze %436 : memref<1x1x!tpu.dma_semaphore, #tpu.memory_space<semaphore_mem>> -> memref<!tpu.dma_semaphore, #tpu.memory_space<semaphore_mem>>
    tpu.wait_dma2 semaphore(%437 : memref<!tpu.dma_semaphore, #tpu.memory_space<semaphore_mem>>) src(%433 : memref<1x128xf32, #tpu.memory_space<any>>) dst(%435 : memref<1x128xf32, #tpu.memory_space<vmem>>)
    %c2_i32_407 = arith.constant 2 : i32
    %c2_i32_408 = arith.constant 2 : i32
    %c3_i32_409 = arith.constant 3 : i32
    %c0_i32_410 = arith.constant 0 : i32
    %438 = tpu.memref_slice %arg5[%155, %c0_i32_410] : memref<64x128xf32, #tpu.memory_space<any>> -> memref<1x128xf32, #tpu.memory_space<any>>
    %c3_i32_411 = arith.constant 3 : i32
    %c0_i32_412 = arith.constant 0 : i32
    %439 = tpu.memref_slice %arg9[%c2_i32_407, %c3_i32_411, %c0_i32_412] : memref<4x8x128xf32, #tpu.memory_space<vmem>> -> memref<1x1x128xf32, #tpu.memory_space<vmem>>
    %440 = tpu.memref_squeeze %439 : memref<1x1x128xf32, #tpu.memory_space<vmem>> -> memref<1x128xf32, #tpu.memory_space<vmem>>
    %441 = tpu.memref_slice %arg12[%c2_i32_408, %c3_i32_409] : memref<4x8x!tpu.dma_semaphore, #tpu.memory_space<semaphore_mem>> -> memref<1x1x!tpu.dma_semaphore, #tpu.memory_space<semaphore_mem>>
    %442 = tpu.memref_squeeze %441 : memref<1x1x!tpu.dma_semaphore, #tpu.memory_space<semaphore_mem>> -> memref<!tpu.dma_semaphore, #tpu.memory_space<semaphore_mem>>
    tpu.wait_dma2 semaphore(%442 : memref<!tpu.dma_semaphore, #tpu.memory_space<semaphore_mem>>) src(%438 : memref<1x128xf32, #tpu.memory_space<any>>) dst(%440 : memref<1x128xf32, #tpu.memory_space<vmem>>)
    %c3_i32_413 = arith.constant 3 : i32
    %c3_i32_414 = arith.constant 3 : i32
    %c3_i32_415 = arith.constant 3 : i32
    %c0_i32_416 = arith.constant 0 : i32
    %443 = tpu.memref_slice %arg5[%162, %c0_i32_416] : memref<64x128xf32, #tpu.memory_space<any>> -> memref<1x128xf32, #tpu.memory_space<any>>
    %c3_i32_417 = arith.constant 3 : i32
    %c0_i32_418 = arith.constant 0 : i32
    %444 = tpu.memref_slice %arg9[%c3_i32_413, %c3_i32_417, %c0_i32_418] : memref<4x8x128xf32, #tpu.memory_space<vmem>> -> memref<1x1x128xf32, #tpu.memory_space<vmem>>
    %445 = tpu.memref_squeeze %444 : memref<1x1x128xf32, #tpu.memory_space<vmem>> -> memref<1x128xf32, #tpu.memory_space<vmem>>
    %446 = tpu.memref_slice %arg12[%c3_i32_414, %c3_i32_415] : memref<4x8x!tpu.dma_semaphore, #tpu.memory_space<semaphore_mem>> -> memref<1x1x!tpu.dma_semaphore, #tpu.memory_space<semaphore_mem>>
    %447 = tpu.memref_squeeze %446 : memref<1x1x!tpu.dma_semaphore, #tpu.memory_space<semaphore_mem>> -> memref<!tpu.dma_semaphore, #tpu.memory_space<semaphore_mem>>
    tpu.wait_dma2 semaphore(%447 : memref<!tpu.dma_semaphore, #tpu.memory_space<semaphore_mem>>) src(%443 : memref<1x128xf32, #tpu.memory_space<any>>) dst(%445 : memref<1x128xf32, #tpu.memory_space<vmem>>)
    %c4_i32_419 = arith.constant 4 : i32
    %c0_i32_420 = arith.constant 0 : i32
    %448 = tpu.memref_slice %arg4[%171, %c0_i32_420] : memref<64x128xf32, #tpu.memory_space<any>> -> memref<1x128xf32, #tpu.memory_space<any>>
    %c4_i32_421 = arith.constant 4 : i32
    %c0_i32_422 = arith.constant 0 : i32
    %449 = tpu.memref_slice %arg7[%c4_i32_421, %c0_i32_422] : memref<8x128xf32, #tpu.memory_space<vmem>> -> memref<1x128xf32, #tpu.memory_space<vmem>>
    %450 = tpu.memref_slice %arg10[%c4_i32_419] : memref<8x!tpu.dma_semaphore, #tpu.memory_space<semaphore_mem>> -> memref<1x!tpu.dma_semaphore, #tpu.memory_space<semaphore_mem>>
    %451 = tpu.memref_squeeze %450 : memref<1x!tpu.dma_semaphore, #tpu.memory_space<semaphore_mem>> -> memref<!tpu.dma_semaphore, #tpu.memory_space<semaphore_mem>>
    tpu.wait_dma2 semaphore(%451 : memref<!tpu.dma_semaphore, #tpu.memory_space<semaphore_mem>>) src(%448 : memref<1x128xf32, #tpu.memory_space<any>>) dst(%449 : memref<1x128xf32, #tpu.memory_space<vmem>>)
    %c4_i32_423 = arith.constant 4 : i32
    %c0_i32_424 = arith.constant 0 : i32
    %452 = tpu.memref_slice %arg5[%173, %c0_i32_424] : memref<64x128xf32, #tpu.memory_space<any>> -> memref<1x128xf32, #tpu.memory_space<any>>
    %c4_i32_425 = arith.constant 4 : i32
    %c0_i32_426 = arith.constant 0 : i32
    %453 = tpu.memref_slice %arg8[%c4_i32_425, %c0_i32_426] : memref<8x128xf32, #tpu.memory_space<vmem>> -> memref<1x128xf32, #tpu.memory_space<vmem>>
    %454 = tpu.memref_slice %arg11[%c4_i32_423] : memref<8x!tpu.dma_semaphore, #tpu.memory_space<semaphore_mem>> -> memref<1x!tpu.dma_semaphore, #tpu.memory_space<semaphore_mem>>
    %455 = tpu.memref_squeeze %454 : memref<1x!tpu.dma_semaphore, #tpu.memory_space<semaphore_mem>> -> memref<!tpu.dma_semaphore, #tpu.memory_space<semaphore_mem>>
    tpu.wait_dma2 semaphore(%455 : memref<!tpu.dma_semaphore, #tpu.memory_space<semaphore_mem>>) src(%452 : memref<1x128xf32, #tpu.memory_space<any>>) dst(%453 : memref<1x128xf32, #tpu.memory_space<vmem>>)
    %c0_i32_427 = arith.constant 0 : i32
    %c0_i32_428 = arith.constant 0 : i32
    %c4_i32_429 = arith.constant 4 : i32
    %c0_i32_430 = arith.constant 0 : i32
    %456 = tpu.memref_slice %arg5[%183, %c0_i32_430] : memref<64x128xf32, #tpu.memory_space<any>> -> memref<1x128xf32, #tpu.memory_space<any>>
    %c4_i32_431 = arith.constant 4 : i32
    %c0_i32_432 = arith.constant 0 : i32
    %457 = tpu.memref_slice %arg9[%c0_i32_427, %c4_i32_431, %c0_i32_432] : memref<4x8x128xf32, #tpu.memory_space<vmem>> -> memref<1x1x128xf32, #tpu.memory_space<vmem>>
    %458 = tpu.memref_squeeze %457 : memref<1x1x128xf32, #tpu.memory_space<vmem>> -> memref<1x128xf32, #tpu.memory_space<vmem>>
    %459 = tpu.memref_slice %arg12[%c0_i32_428, %c4_i32_429] : memref<4x8x!tpu.dma_semaphore, #tpu.memory_space<semaphore_mem>> -> memref<1x1x!tpu.dma_semaphore, #tpu.memory_space<semaphore_mem>>
    %460 = tpu.memref_squeeze %459 : memref<1x1x!tpu.dma_semaphore, #tpu.memory_space<semaphore_mem>> -> memref<!tpu.dma_semaphore, #tpu.memory_space<semaphore_mem>>
    tpu.wait_dma2 semaphore(%460 : memref<!tpu.dma_semaphore, #tpu.memory_space<semaphore_mem>>) src(%456 : memref<1x128xf32, #tpu.memory_space<any>>) dst(%458 : memref<1x128xf32, #tpu.memory_space<vmem>>)
    %c1_i32_433 = arith.constant 1 : i32
    %c1_i32_434 = arith.constant 1 : i32
    %c4_i32_435 = arith.constant 4 : i32
    %c0_i32_436 = arith.constant 0 : i32
    %461 = tpu.memref_slice %arg5[%190, %c0_i32_436] : memref<64x128xf32, #tpu.memory_space<any>> -> memref<1x128xf32, #tpu.memory_space<any>>
    %c4_i32_437 = arith.constant 4 : i32
    %c0_i32_438 = arith.constant 0 : i32
    %462 = tpu.memref_slice %arg9[%c1_i32_433, %c4_i32_437, %c0_i32_438] : memref<4x8x128xf32, #tpu.memory_space<vmem>> -> memref<1x1x128xf32, #tpu.memory_space<vmem>>
    %463 = tpu.memref_squeeze %462 : memref<1x1x128xf32, #tpu.memory_space<vmem>> -> memref<1x128xf32, #tpu.memory_space<vmem>>
    %464 = tpu.memref_slice %arg12[%c1_i32_434, %c4_i32_435] : memref<4x8x!tpu.dma_semaphore, #tpu.memory_space<semaphore_mem>> -> memref<1x1x!tpu.dma_semaphore, #tpu.memory_space<semaphore_mem>>
    %465 = tpu.memref_squeeze %464 : memref<1x1x!tpu.dma_semaphore, #tpu.memory_space<semaphore_mem>> -> memref<!tpu.dma_semaphore, #tpu.memory_space<semaphore_mem>>
    tpu.wait_dma2 semaphore(%465 : memref<!tpu.dma_semaphore, #tpu.memory_space<semaphore_mem>>) src(%461 : memref<1x128xf32, #tpu.memory_space<any>>) dst(%463 : memref<1x128xf32, #tpu.memory_space<vmem>>)
    %c2_i32_439 = arith.constant 2 : i32
    %c2_i32_440 = arith.constant 2 : i32
    %c4_i32_441 = arith.constant 4 : i32
    %c0_i32_442 = arith.constant 0 : i32
    %466 = tpu.memref_slice %arg5[%197, %c0_i32_442] : memref<64x128xf32, #tpu.memory_space<any>> -> memref<1x128xf32, #tpu.memory_space<any>>
    %c4_i32_443 = arith.constant 4 : i32
    %c0_i32_444 = arith.constant 0 : i32
    %467 = tpu.memref_slice %arg9[%c2_i32_439, %c4_i32_443, %c0_i32_444] : memref<4x8x128xf32, #tpu.memory_space<vmem>> -> memref<1x1x128xf32, #tpu.memory_space<vmem>>
    %468 = tpu.memref_squeeze %467 : memref<1x1x128xf32, #tpu.memory_space<vmem>> -> memref<1x128xf32, #tpu.memory_space<vmem>>
    %469 = tpu.memref_slice %arg12[%c2_i32_440, %c4_i32_441] : memref<4x8x!tpu.dma_semaphore, #tpu.memory_space<semaphore_mem>> -> memref<1x1x!tpu.dma_semaphore, #tpu.memory_space<semaphore_mem>>
    %470 = tpu.memref_squeeze %469 : memref<1x1x!tpu.dma_semaphore, #tpu.memory_space<semaphore_mem>> -> memref<!tpu.dma_semaphore, #tpu.memory_space<semaphore_mem>>
    tpu.wait_dma2 semaphore(%470 : memref<!tpu.dma_semaphore, #tpu.memory_space<semaphore_mem>>) src(%466 : memref<1x128xf32, #tpu.memory_space<any>>) dst(%468 : memref<1x128xf32, #tpu.memory_space<vmem>>)
    %c3_i32_445 = arith.constant 3 : i32
    %c3_i32_446 = arith.constant 3 : i32
    %c4_i32_447 = arith.constant 4 : i32
    %c0_i32_448 = arith.constant 0 : i32
    %471 = tpu.memref_slice %arg5[%204, %c0_i32_448] : memref<64x128xf32, #tpu.memory_space<any>> -> memref<1x128xf32, #tpu.memory_space<any>>
    %c4_i32_449 = arith.constant 4 : i32
    %c0_i32_450 = arith.constant 0 : i32
    %472 = tpu.memref_slice %arg9[%c3_i32_445, %c4_i32_449, %c0_i32_450] : memref<4x8x128xf32, #tpu.memory_space<vmem>> -> memref<1x1x128xf32, #tpu.memory_space<vmem>>
    %473 = tpu.memref_squeeze %472 : memref<1x1x128xf32, #tpu.memory_space<vmem>> -> memref<1x128xf32, #tpu.memory_space<vmem>>
    %474 = tpu.memref_slice %arg12[%c3_i32_446, %c4_i32_447] : memref<4x8x!tpu.dma_semaphore, #tpu.memory_space<semaphore_mem>> -> memref<1x1x!tpu.dma_semaphore, #tpu.memory_space<semaphore_mem>>
    %475 = tpu.memref_squeeze %474 : memref<1x1x!tpu.dma_semaphore, #tpu.memory_space<semaphore_mem>> -> memref<!tpu.dma_semaphore, #tpu.memory_space<semaphore_mem>>
    tpu.wait_dma2 semaphore(%475 : memref<!tpu.dma_semaphore, #tpu.memory_space<semaphore_mem>>) src(%471 : memref<1x128xf32, #tpu.memory_space<any>>) dst(%473 : memref<1x128xf32, #tpu.memory_space<vmem>>)
    %c5_i32_451 = arith.constant 5 : i32
    %c0_i32_452 = arith.constant 0 : i32
    %476 = tpu.memref_slice %arg4[%213, %c0_i32_452] : memref<64x128xf32, #tpu.memory_space<any>> -> memref<1x128xf32, #tpu.memory_space<any>>
    %c5_i32_453 = arith.constant 5 : i32
    %c0_i32_454 = arith.constant 0 : i32
    %477 = tpu.memref_slice %arg7[%c5_i32_453, %c0_i32_454] : memref<8x128xf32, #tpu.memory_space<vmem>> -> memref<1x128xf32, #tpu.memory_space<vmem>>
    %478 = tpu.memref_slice %arg10[%c5_i32_451] : memref<8x!tpu.dma_semaphore, #tpu.memory_space<semaphore_mem>> -> memref<1x!tpu.dma_semaphore, #tpu.memory_space<semaphore_mem>>
    %479 = tpu.memref_squeeze %478 : memref<1x!tpu.dma_semaphore, #tpu.memory_space<semaphore_mem>> -> memref<!tpu.dma_semaphore, #tpu.memory_space<semaphore_mem>>
    tpu.wait_dma2 semaphore(%479 : memref<!tpu.dma_semaphore, #tpu.memory_space<semaphore_mem>>) src(%476 : memref<1x128xf32, #tpu.memory_space<any>>) dst(%477 : memref<1x128xf32, #tpu.memory_space<vmem>>)
    %c5_i32_455 = arith.constant 5 : i32
    %c0_i32_456 = arith.constant 0 : i32
    %480 = tpu.memref_slice %arg5[%215, %c0_i32_456] : memref<64x128xf32, #tpu.memory_space<any>> -> memref<1x128xf32, #tpu.memory_space<any>>
    %c5_i32_457 = arith.constant 5 : i32
    %c0_i32_458 = arith.constant 0 : i32
    %481 = tpu.memref_slice %arg8[%c5_i32_457, %c0_i32_458] : memref<8x128xf32, #tpu.memory_space<vmem>> -> memref<1x128xf32, #tpu.memory_space<vmem>>
    %482 = tpu.memref_slice %arg11[%c5_i32_455] : memref<8x!tpu.dma_semaphore, #tpu.memory_space<semaphore_mem>> -> memref<1x!tpu.dma_semaphore, #tpu.memory_space<semaphore_mem>>
    %483 = tpu.memref_squeeze %482 : memref<1x!tpu.dma_semaphore, #tpu.memory_space<semaphore_mem>> -> memref<!tpu.dma_semaphore, #tpu.memory_space<semaphore_mem>>
    tpu.wait_dma2 semaphore(%483 : memref<!tpu.dma_semaphore, #tpu.memory_space<semaphore_mem>>) src(%480 : memref<1x128xf32, #tpu.memory_space<any>>) dst(%481 : memref<1x128xf32, #tpu.memory_space<vmem>>)
    %c0_i32_459 = arith.constant 0 : i32
    %c0_i32_460 = arith.constant 0 : i32
    %c5_i32_461 = arith.constant 5 : i32
    %c0_i32_462 = arith.constant 0 : i32
    %484 = tpu.memref_slice %arg5[%225, %c0_i32_462] : memref<64x128xf32, #tpu.memory_space<any>> -> memref<1x128xf32, #tpu.memory_space<any>>
    %c5_i32_463 = arith.constant 5 : i32
    %c0_i32_464 = arith.constant 0 : i32
    %485 = tpu.memref_slice %arg9[%c0_i32_459, %c5_i32_463, %c0_i32_464] : memref<4x8x128xf32, #tpu.memory_space<vmem>> -> memref<1x1x128xf32, #tpu.memory_space<vmem>>
    %486 = tpu.memref_squeeze %485 : memref<1x1x128xf32, #tpu.memory_space<vmem>> -> memref<1x128xf32, #tpu.memory_space<vmem>>
    %487 = tpu.memref_slice %arg12[%c0_i32_460, %c5_i32_461] : memref<4x8x!tpu.dma_semaphore, #tpu.memory_space<semaphore_mem>> -> memref<1x1x!tpu.dma_semaphore, #tpu.memory_space<semaphore_mem>>
    %488 = tpu.memref_squeeze %487 : memref<1x1x!tpu.dma_semaphore, #tpu.memory_space<semaphore_mem>> -> memref<!tpu.dma_semaphore, #tpu.memory_space<semaphore_mem>>
    tpu.wait_dma2 semaphore(%488 : memref<!tpu.dma_semaphore, #tpu.memory_space<semaphore_mem>>) src(%484 : memref<1x128xf32, #tpu.memory_space<any>>) dst(%486 : memref<1x128xf32, #tpu.memory_space<vmem>>)
    %c1_i32_465 = arith.constant 1 : i32
    %c1_i32_466 = arith.constant 1 : i32
    %c5_i32_467 = arith.constant 5 : i32
    %c0_i32_468 = arith.constant 0 : i32
    %489 = tpu.memref_slice %arg5[%232, %c0_i32_468] : memref<64x128xf32, #tpu.memory_space<any>> -> memref<1x128xf32, #tpu.memory_space<any>>
    %c5_i32_469 = arith.constant 5 : i32
    %c0_i32_470 = arith.constant 0 : i32
    %490 = tpu.memref_slice %arg9[%c1_i32_465, %c5_i32_469, %c0_i32_470] : memref<4x8x128xf32, #tpu.memory_space<vmem>> -> memref<1x1x128xf32, #tpu.memory_space<vmem>>
    %491 = tpu.memref_squeeze %490 : memref<1x1x128xf32, #tpu.memory_space<vmem>> -> memref<1x128xf32, #tpu.memory_space<vmem>>
    %492 = tpu.memref_slice %arg12[%c1_i32_466, %c5_i32_467] : memref<4x8x!tpu.dma_semaphore, #tpu.memory_space<semaphore_mem>> -> memref<1x1x!tpu.dma_semaphore, #tpu.memory_space<semaphore_mem>>
    %493 = tpu.memref_squeeze %492 : memref<1x1x!tpu.dma_semaphore, #tpu.memory_space<semaphore_mem>> -> memref<!tpu.dma_semaphore, #tpu.memory_space<semaphore_mem>>
    tpu.wait_dma2 semaphore(%493 : memref<!tpu.dma_semaphore, #tpu.memory_space<semaphore_mem>>) src(%489 : memref<1x128xf32, #tpu.memory_space<any>>) dst(%491 : memref<1x128xf32, #tpu.memory_space<vmem>>)
    %c2_i32_471 = arith.constant 2 : i32
    %c2_i32_472 = arith.constant 2 : i32
    %c5_i32_473 = arith.constant 5 : i32
    %c0_i32_474 = arith.constant 0 : i32
    %494 = tpu.memref_slice %arg5[%239, %c0_i32_474] : memref<64x128xf32, #tpu.memory_space<any>> -> memref<1x128xf32, #tpu.memory_space<any>>
    %c5_i32_475 = arith.constant 5 : i32
    %c0_i32_476 = arith.constant 0 : i32
    %495 = tpu.memref_slice %arg9[%c2_i32_471, %c5_i32_475, %c0_i32_476] : memref<4x8x128xf32, #tpu.memory_space<vmem>> -> memref<1x1x128xf32, #tpu.memory_space<vmem>>
    %496 = tpu.memref_squeeze %495 : memref<1x1x128xf32, #tpu.memory_space<vmem>> -> memref<1x128xf32, #tpu.memory_space<vmem>>
    %497 = tpu.memref_slice %arg12[%c2_i32_472, %c5_i32_473] : memref<4x8x!tpu.dma_semaphore, #tpu.memory_space<semaphore_mem>> -> memref<1x1x!tpu.dma_semaphore, #tpu.memory_space<semaphore_mem>>
    %498 = tpu.memref_squeeze %497 : memref<1x1x!tpu.dma_semaphore, #tpu.memory_space<semaphore_mem>> -> memref<!tpu.dma_semaphore, #tpu.memory_space<semaphore_mem>>
    tpu.wait_dma2 semaphore(%498 : memref<!tpu.dma_semaphore, #tpu.memory_space<semaphore_mem>>) src(%494 : memref<1x128xf32, #tpu.memory_space<any>>) dst(%496 : memref<1x128xf32, #tpu.memory_space<vmem>>)
    %c3_i32_477 = arith.constant 3 : i32
    %c3_i32_478 = arith.constant 3 : i32
    %c5_i32_479 = arith.constant 5 : i32
    %c0_i32_480 = arith.constant 0 : i32
    %499 = tpu.memref_slice %arg5[%246, %c0_i32_480] : memref<64x128xf32, #tpu.memory_space<any>> -> memref<1x128xf32, #tpu.memory_space<any>>
    %c5_i32_481 = arith.constant 5 : i32
    %c0_i32_482 = arith.constant 0 : i32
    %500 = tpu.memref_slice %arg9[%c3_i32_477, %c5_i32_481, %c0_i32_482] : memref<4x8x128xf32, #tpu.memory_space<vmem>> -> memref<1x1x128xf32, #tpu.memory_space<vmem>>
    %501 = tpu.memref_squeeze %500 : memref<1x1x128xf32, #tpu.memory_space<vmem>> -> memref<1x128xf32, #tpu.memory_space<vmem>>
    %502 = tpu.memref_slice %arg12[%c3_i32_478, %c5_i32_479] : memref<4x8x!tpu.dma_semaphore, #tpu.memory_space<semaphore_mem>> -> memref<1x1x!tpu.dma_semaphore, #tpu.memory_space<semaphore_mem>>
    %503 = tpu.memref_squeeze %502 : memref<1x1x!tpu.dma_semaphore, #tpu.memory_space<semaphore_mem>> -> memref<!tpu.dma_semaphore, #tpu.memory_space<semaphore_mem>>
    tpu.wait_dma2 semaphore(%503 : memref<!tpu.dma_semaphore, #tpu.memory_space<semaphore_mem>>) src(%499 : memref<1x128xf32, #tpu.memory_space<any>>) dst(%501 : memref<1x128xf32, #tpu.memory_space<vmem>>)
    %c6_i32_483 = arith.constant 6 : i32
    %c0_i32_484 = arith.constant 0 : i32
    %504 = tpu.memref_slice %arg4[%255, %c0_i32_484] : memref<64x128xf32, #tpu.memory_space<any>> -> memref<1x128xf32, #tpu.memory_space<any>>
    %c6_i32_485 = arith.constant 6 : i32
    %c0_i32_486 = arith.constant 0 : i32
    %505 = tpu.memref_slice %arg7[%c6_i32_485, %c0_i32_486] : memref<8x128xf32, #tpu.memory_space<vmem>> -> memref<1x128xf32, #tpu.memory_space<vmem>>
    %506 = tpu.memref_slice %arg10[%c6_i32_483] : memref<8x!tpu.dma_semaphore, #tpu.memory_space<semaphore_mem>> -> memref<1x!tpu.dma_semaphore, #tpu.memory_space<semaphore_mem>>
    %507 = tpu.memref_squeeze %506 : memref<1x!tpu.dma_semaphore, #tpu.memory_space<semaphore_mem>> -> memref<!tpu.dma_semaphore, #tpu.memory_space<semaphore_mem>>
    tpu.wait_dma2 semaphore(%507 : memref<!tpu.dma_semaphore, #tpu.memory_space<semaphore_mem>>) src(%504 : memref<1x128xf32, #tpu.memory_space<any>>) dst(%505 : memref<1x128xf32, #tpu.memory_space<vmem>>)
    %c6_i32_487 = arith.constant 6 : i32
    %c0_i32_488 = arith.constant 0 : i32
    %508 = tpu.memref_slice %arg5[%257, %c0_i32_488] : memref<64x128xf32, #tpu.memory_space<any>> -> memref<1x128xf32, #tpu.memory_space<any>>
    %c6_i32_489 = arith.constant 6 : i32
    %c0_i32_490 = arith.constant 0 : i32
    %509 = tpu.memref_slice %arg8[%c6_i32_489, %c0_i32_490] : memref<8x128xf32, #tpu.memory_space<vmem>> -> memref<1x128xf32, #tpu.memory_space<vmem>>
    %510 = tpu.memref_slice %arg11[%c6_i32_487] : memref<8x!tpu.dma_semaphore, #tpu.memory_space<semaphore_mem>> -> memref<1x!tpu.dma_semaphore, #tpu.memory_space<semaphore_mem>>
    %511 = tpu.memref_squeeze %510 : memref<1x!tpu.dma_semaphore, #tpu.memory_space<semaphore_mem>> -> memref<!tpu.dma_semaphore, #tpu.memory_space<semaphore_mem>>
    tpu.wait_dma2 semaphore(%511 : memref<!tpu.dma_semaphore, #tpu.memory_space<semaphore_mem>>) src(%508 : memref<1x128xf32, #tpu.memory_space<any>>) dst(%509 : memref<1x128xf32, #tpu.memory_space<vmem>>)
    %c0_i32_491 = arith.constant 0 : i32
    %c0_i32_492 = arith.constant 0 : i32
    %c6_i32_493 = arith.constant 6 : i32
    %c0_i32_494 = arith.constant 0 : i32
    %512 = tpu.memref_slice %arg5[%267, %c0_i32_494] : memref<64x128xf32, #tpu.memory_space<any>> -> memref<1x128xf32, #tpu.memory_space<any>>
    %c6_i32_495 = arith.constant 6 : i32
    %c0_i32_496 = arith.constant 0 : i32
    %513 = tpu.memref_slice %arg9[%c0_i32_491, %c6_i32_495, %c0_i32_496] : memref<4x8x128xf32, #tpu.memory_space<vmem>> -> memref<1x1x128xf32, #tpu.memory_space<vmem>>
    %514 = tpu.memref_squeeze %513 : memref<1x1x128xf32, #tpu.memory_space<vmem>> -> memref<1x128xf32, #tpu.memory_space<vmem>>
    %515 = tpu.memref_slice %arg12[%c0_i32_492, %c6_i32_493] : memref<4x8x!tpu.dma_semaphore, #tpu.memory_space<semaphore_mem>> -> memref<1x1x!tpu.dma_semaphore, #tpu.memory_space<semaphore_mem>>
    %516 = tpu.memref_squeeze %515 : memref<1x1x!tpu.dma_semaphore, #tpu.memory_space<semaphore_mem>> -> memref<!tpu.dma_semaphore, #tpu.memory_space<semaphore_mem>>
    tpu.wait_dma2 semaphore(%516 : memref<!tpu.dma_semaphore, #tpu.memory_space<semaphore_mem>>) src(%512 : memref<1x128xf32, #tpu.memory_space<any>>) dst(%514 : memref<1x128xf32, #tpu.memory_space<vmem>>)
    %c1_i32_497 = arith.constant 1 : i32
    %c1_i32_498 = arith.constant 1 : i32
    %c6_i32_499 = arith.constant 6 : i32
    %c0_i32_500 = arith.constant 0 : i32
    %517 = tpu.memref_slice %arg5[%274, %c0_i32_500] : memref<64x128xf32, #tpu.memory_space<any>> -> memref<1x128xf32, #tpu.memory_space<any>>
    %c6_i32_501 = arith.constant 6 : i32
    %c0_i32_502 = arith.constant 0 : i32
    %518 = tpu.memref_slice %arg9[%c1_i32_497, %c6_i32_501, %c0_i32_502] : memref<4x8x128xf32, #tpu.memory_space<vmem>> -> memref<1x1x128xf32, #tpu.memory_space<vmem>>
    %519 = tpu.memref_squeeze %518 : memref<1x1x128xf32, #tpu.memory_space<vmem>> -> memref<1x128xf32, #tpu.memory_space<vmem>>
    %520 = tpu.memref_slice %arg12[%c1_i32_498, %c6_i32_499] : memref<4x8x!tpu.dma_semaphore, #tpu.memory_space<semaphore_mem>> -> memref<1x1x!tpu.dma_semaphore, #tpu.memory_space<semaphore_mem>>
    %521 = tpu.memref_squeeze %520 : memref<1x1x!tpu.dma_semaphore, #tpu.memory_space<semaphore_mem>> -> memref<!tpu.dma_semaphore, #tpu.memory_space<semaphore_mem>>
    tpu.wait_dma2 semaphore(%521 : memref<!tpu.dma_semaphore, #tpu.memory_space<semaphore_mem>>) src(%517 : memref<1x128xf32, #tpu.memory_space<any>>) dst(%519 : memref<1x128xf32, #tpu.memory_space<vmem>>)
    %c2_i32_503 = arith.constant 2 : i32
    %c2_i32_504 = arith.constant 2 : i32
    %c6_i32_505 = arith.constant 6 : i32
    %c0_i32_506 = arith.constant 0 : i32
    %522 = tpu.memref_slice %arg5[%281, %c0_i32_506] : memref<64x128xf32, #tpu.memory_space<any>> -> memref<1x128xf32, #tpu.memory_space<any>>
    %c6_i32_507 = arith.constant 6 : i32
    %c0_i32_508 = arith.constant 0 : i32
    %523 = tpu.memref_slice %arg9[%c2_i32_503, %c6_i32_507, %c0_i32_508] : memref<4x8x128xf32, #tpu.memory_space<vmem>> -> memref<1x1x128xf32, #tpu.memory_space<vmem>>
    %524 = tpu.memref_squeeze %523 : memref<1x1x128xf32, #tpu.memory_space<vmem>> -> memref<1x128xf32, #tpu.memory_space<vmem>>
    %525 = tpu.memref_slice %arg12[%c2_i32_504, %c6_i32_505] : memref<4x8x!tpu.dma_semaphore, #tpu.memory_space<semaphore_mem>> -> memref<1x1x!tpu.dma_semaphore, #tpu.memory_space<semaphore_mem>>
    %526 = tpu.memref_squeeze %525 : memref<1x1x!tpu.dma_semaphore, #tpu.memory_space<semaphore_mem>> -> memref<!tpu.dma_semaphore, #tpu.memory_space<semaphore_mem>>
    tpu.wait_dma2 semaphore(%526 : memref<!tpu.dma_semaphore, #tpu.memory_space<semaphore_mem>>) src(%522 : memref<1x128xf32, #tpu.memory_space<any>>) dst(%524 : memref<1x128xf32, #tpu.memory_space<vmem>>)
    %c3_i32_509 = arith.constant 3 : i32
    %c3_i32_510 = arith.constant 3 : i32
    %c6_i32_511 = arith.constant 6 : i32
    %c0_i32_512 = arith.constant 0 : i32
    %527 = tpu.memref_slice %arg5[%288, %c0_i32_512] : memref<64x128xf32, #tpu.memory_space<any>> -> memref<1x128xf32, #tpu.memory_space<any>>
    %c6_i32_513 = arith.constant 6 : i32
    %c0_i32_514 = arith.constant 0 : i32
    %528 = tpu.memref_slice %arg9[%c3_i32_509, %c6_i32_513, %c0_i32_514] : memref<4x8x128xf32, #tpu.memory_space<vmem>> -> memref<1x1x128xf32, #tpu.memory_space<vmem>>
    %529 = tpu.memref_squeeze %528 : memref<1x1x128xf32, #tpu.memory_space<vmem>> -> memref<1x128xf32, #tpu.memory_space<vmem>>
    %530 = tpu.memref_slice %arg12[%c3_i32_510, %c6_i32_511] : memref<4x8x!tpu.dma_semaphore, #tpu.memory_space<semaphore_mem>> -> memref<1x1x!tpu.dma_semaphore, #tpu.memory_space<semaphore_mem>>
    %531 = tpu.memref_squeeze %530 : memref<1x1x!tpu.dma_semaphore, #tpu.memory_space<semaphore_mem>> -> memref<!tpu.dma_semaphore, #tpu.memory_space<semaphore_mem>>
    tpu.wait_dma2 semaphore(%531 : memref<!tpu.dma_semaphore, #tpu.memory_space<semaphore_mem>>) src(%527 : memref<1x128xf32, #tpu.memory_space<any>>) dst(%529 : memref<1x128xf32, #tpu.memory_space<vmem>>)
    %c7_i32_515 = arith.constant 7 : i32
    %c0_i32_516 = arith.constant 0 : i32
    %532 = tpu.memref_slice %arg4[%297, %c0_i32_516] : memref<64x128xf32, #tpu.memory_space<any>> -> memref<1x128xf32, #tpu.memory_space<any>>
    %c7_i32_517 = arith.constant 7 : i32
    %c0_i32_518 = arith.constant 0 : i32
    %533 = tpu.memref_slice %arg7[%c7_i32_517, %c0_i32_518] : memref<8x128xf32, #tpu.memory_space<vmem>> -> memref<1x128xf32, #tpu.memory_space<vmem>>
    %534 = tpu.memref_slice %arg10[%c7_i32_515] : memref<8x!tpu.dma_semaphore, #tpu.memory_space<semaphore_mem>> -> memref<1x!tpu.dma_semaphore, #tpu.memory_space<semaphore_mem>>
    %535 = tpu.memref_squeeze %534 : memref<1x!tpu.dma_semaphore, #tpu.memory_space<semaphore_mem>> -> memref<!tpu.dma_semaphore, #tpu.memory_space<semaphore_mem>>
    tpu.wait_dma2 semaphore(%535 : memref<!tpu.dma_semaphore, #tpu.memory_space<semaphore_mem>>) src(%532 : memref<1x128xf32, #tpu.memory_space<any>>) dst(%533 : memref<1x128xf32, #tpu.memory_space<vmem>>)
    %c7_i32_519 = arith.constant 7 : i32
    %c0_i32_520 = arith.constant 0 : i32
    %536 = tpu.memref_slice %arg5[%299, %c0_i32_520] : memref<64x128xf32, #tpu.memory_space<any>> -> memref<1x128xf32, #tpu.memory_space<any>>
    %c7_i32_521 = arith.constant 7 : i32
    %c0_i32_522 = arith.constant 0 : i32
    %537 = tpu.memref_slice %arg8[%c7_i32_521, %c0_i32_522] : memref<8x128xf32, #tpu.memory_space<vmem>> -> memref<1x128xf32, #tpu.memory_space<vmem>>
    %538 = tpu.memref_slice %arg11[%c7_i32_519] : memref<8x!tpu.dma_semaphore, #tpu.memory_space<semaphore_mem>> -> memref<1x!tpu.dma_semaphore, #tpu.memory_space<semaphore_mem>>
    %539 = tpu.memref_squeeze %538 : memref<1x!tpu.dma_semaphore, #tpu.memory_space<semaphore_mem>> -> memref<!tpu.dma_semaphore, #tpu.memory_space<semaphore_mem>>
    tpu.wait_dma2 semaphore(%539 : memref<!tpu.dma_semaphore, #tpu.memory_space<semaphore_mem>>) src(%536 : memref<1x128xf32, #tpu.memory_space<any>>) dst(%537 : memref<1x128xf32, #tpu.memory_space<vmem>>)
    %c0_i32_523 = arith.constant 0 : i32
    %c0_i32_524 = arith.constant 0 : i32
    %c7_i32_525 = arith.constant 7 : i32
    %c0_i32_526 = arith.constant 0 : i32
    %540 = tpu.memref_slice %arg5[%309, %c0_i32_526] : memref<64x128xf32, #tpu.memory_space<any>> -> memref<1x128xf32, #tpu.memory_space<any>>
    %c7_i32_527 = arith.constant 7 : i32
    %c0_i32_528 = arith.constant 0 : i32
    %541 = tpu.memref_slice %arg9[%c0_i32_523, %c7_i32_527, %c0_i32_528] : memref<4x8x128xf32, #tpu.memory_space<vmem>> -> memref<1x1x128xf32, #tpu.memory_space<vmem>>
    %542 = tpu.memref_squeeze %541 : memref<1x1x128xf32, #tpu.memory_space<vmem>> -> memref<1x128xf32, #tpu.memory_space<vmem>>
    %543 = tpu.memref_slice %arg12[%c0_i32_524, %c7_i32_525] : memref<4x8x!tpu.dma_semaphore, #tpu.memory_space<semaphore_mem>> -> memref<1x1x!tpu.dma_semaphore, #tpu.memory_space<semaphore_mem>>
    %544 = tpu.memref_squeeze %543 : memref<1x1x!tpu.dma_semaphore, #tpu.memory_space<semaphore_mem>> -> memref<!tpu.dma_semaphore, #tpu.memory_space<semaphore_mem>>
    tpu.wait_dma2 semaphore(%544 : memref<!tpu.dma_semaphore, #tpu.memory_space<semaphore_mem>>) src(%540 : memref<1x128xf32, #tpu.memory_space<any>>) dst(%542 : memref<1x128xf32, #tpu.memory_space<vmem>>)
    %c1_i32_529 = arith.constant 1 : i32
    %c1_i32_530 = arith.constant 1 : i32
    %c7_i32_531 = arith.constant 7 : i32
    %c0_i32_532 = arith.constant 0 : i32
    %545 = tpu.memref_slice %arg5[%316, %c0_i32_532] : memref<64x128xf32, #tpu.memory_space<any>> -> memref<1x128xf32, #tpu.memory_space<any>>
    %c7_i32_533 = arith.constant 7 : i32
    %c0_i32_534 = arith.constant 0 : i32
    %546 = tpu.memref_slice %arg9[%c1_i32_529, %c7_i32_533, %c0_i32_534] : memref<4x8x128xf32, #tpu.memory_space<vmem>> -> memref<1x1x128xf32, #tpu.memory_space<vmem>>
    %547 = tpu.memref_squeeze %546 : memref<1x1x128xf32, #tpu.memory_space<vmem>> -> memref<1x128xf32, #tpu.memory_space<vmem>>
    %548 = tpu.memref_slice %arg12[%c1_i32_530, %c7_i32_531] : memref<4x8x!tpu.dma_semaphore, #tpu.memory_space<semaphore_mem>> -> memref<1x1x!tpu.dma_semaphore, #tpu.memory_space<semaphore_mem>>
    %549 = tpu.memref_squeeze %548 : memref<1x1x!tpu.dma_semaphore, #tpu.memory_space<semaphore_mem>> -> memref<!tpu.dma_semaphore, #tpu.memory_space<semaphore_mem>>
    tpu.wait_dma2 semaphore(%549 : memref<!tpu.dma_semaphore, #tpu.memory_space<semaphore_mem>>) src(%545 : memref<1x128xf32, #tpu.memory_space<any>>) dst(%547 : memref<1x128xf32, #tpu.memory_space<vmem>>)
    %c2_i32_535 = arith.constant 2 : i32
    %c2_i32_536 = arith.constant 2 : i32
    %c7_i32_537 = arith.constant 7 : i32
    %c0_i32_538 = arith.constant 0 : i32
    %550 = tpu.memref_slice %arg5[%323, %c0_i32_538] : memref<64x128xf32, #tpu.memory_space<any>> -> memref<1x128xf32, #tpu.memory_space<any>>
    %c7_i32_539 = arith.constant 7 : i32
    %c0_i32_540 = arith.constant 0 : i32
    %551 = tpu.memref_slice %arg9[%c2_i32_535, %c7_i32_539, %c0_i32_540] : memref<4x8x128xf32, #tpu.memory_space<vmem>> -> memref<1x1x128xf32, #tpu.memory_space<vmem>>
    %552 = tpu.memref_squeeze %551 : memref<1x1x128xf32, #tpu.memory_space<vmem>> -> memref<1x128xf32, #tpu.memory_space<vmem>>
    %553 = tpu.memref_slice %arg12[%c2_i32_536, %c7_i32_537] : memref<4x8x!tpu.dma_semaphore, #tpu.memory_space<semaphore_mem>> -> memref<1x1x!tpu.dma_semaphore, #tpu.memory_space<semaphore_mem>>
    %554 = tpu.memref_squeeze %553 : memref<1x1x!tpu.dma_semaphore, #tpu.memory_space<semaphore_mem>> -> memref<!tpu.dma_semaphore, #tpu.memory_space<semaphore_mem>>
    tpu.wait_dma2 semaphore(%554 : memref<!tpu.dma_semaphore, #tpu.memory_space<semaphore_mem>>) src(%550 : memref<1x128xf32, #tpu.memory_space<any>>) dst(%552 : memref<1x128xf32, #tpu.memory_space<vmem>>)
    %c3_i32_541 = arith.constant 3 : i32
    %c3_i32_542 = arith.constant 3 : i32
    %c7_i32_543 = arith.constant 7 : i32
    %c0_i32_544 = arith.constant 0 : i32
    %555 = tpu.memref_slice %arg5[%330, %c0_i32_544] : memref<64x128xf32, #tpu.memory_space<any>> -> memref<1x128xf32, #tpu.memory_space<any>>
    %c7_i32_545 = arith.constant 7 : i32
    %c0_i32_546 = arith.constant 0 : i32
    %556 = tpu.memref_slice %arg9[%c3_i32_541, %c7_i32_545, %c0_i32_546] : memref<4x8x128xf32, #tpu.memory_space<vmem>> -> memref<1x1x128xf32, #tpu.memory_space<vmem>>
    %557 = tpu.memref_squeeze %556 : memref<1x1x128xf32, #tpu.memory_space<vmem>> -> memref<1x128xf32, #tpu.memory_space<vmem>>
    %558 = tpu.memref_slice %arg12[%c3_i32_542, %c7_i32_543] : memref<4x8x!tpu.dma_semaphore, #tpu.memory_space<semaphore_mem>> -> memref<1x1x!tpu.dma_semaphore, #tpu.memory_space<semaphore_mem>>
    %559 = tpu.memref_squeeze %558 : memref<1x1x!tpu.dma_semaphore, #tpu.memory_space<semaphore_mem>> -> memref<!tpu.dma_semaphore, #tpu.memory_space<semaphore_mem>>
    tpu.wait_dma2 semaphore(%559 : memref<!tpu.dma_semaphore, #tpu.memory_space<semaphore_mem>>) src(%555 : memref<1x128xf32, #tpu.memory_space<any>>) dst(%557 : memref<1x128xf32, #tpu.memory_space<vmem>>)
    %c0_547 = arith.constant 0 : index
    %c0_548 = arith.constant 0 : index
    %560 = vector.load %arg7[%c0_547, %c0_548] : memref<8x128xf32, #tpu.memory_space<vmem>>, vector<8x128xf32>
    %c0_549 = arith.constant 0 : index
    %c0_550 = arith.constant 0 : index
    %561 = vector.load %arg8[%c0_549, %c0_550] : memref<8x128xf32, #tpu.memory_space<vmem>>, vector<8x128xf32>
    %c0_551 = arith.constant 0 : index
    %c0_552 = arith.constant 0 : index
    %c0_553 = arith.constant 0 : index
    %562 = vector.load %arg9[%c0_551, %c0_552, %c0_553] : memref<4x8x128xf32, #tpu.memory_space<vmem>>, vector<4x8x128xf32>
    %cst = arith.constant dense<0.000000e+00> : vector<8x128xf32>
    %563 = vector.multi_reduction <add>, %562, %cst [0] : vector<4x8x128xf32> to vector<8x128xf32>
    %564 = arith.mulf %560, %561 : vector<8x128xf32>
    %cst_554 = arith.constant dense<0.000000e+00> : vector<8xf32>
    %565 = vector.multi_reduction <add>, %564, %cst_554 [1] : vector<8x128xf32> to vector<8xf32>
    %566 = vector.shape_cast %565 : vector<8xf32> to vector<8x1xf32>
    %567 = arith.mulf %560, %563 : vector<8x128xf32>
    %cst_555 = arith.constant dense<0.000000e+00> : vector<8xf32>
    %568 = vector.multi_reduction <add>, %567, %cst_555 [1] : vector<8x128xf32> to vector<8xf32>
    %569 = vector.shape_cast %568 : vector<8xf32> to vector<8x1xf32>
    %cst_556 = arith.constant 0.000000e+00 : f32
    %570 = vector.broadcast %cst_556 : f32 to vector<8x1xf32>
    %571 = arith.minimumf %566, %570 : vector<8x1xf32>
    %572 = math.absf %566 : vector<8x1xf32>
    %cst_557 = arith.constant 0.000000e+00 : f32
    %573 = vector.broadcast %cst_557 : f32 to vector<8x1xf32>
    %574 = arith.subf %573, %572 : vector<8x1xf32>
    %575 = math.exp %574 : vector<8x1xf32>
    %576 = math.log1p %575 : vector<8x1xf32>
    %577 = arith.subf %571, %576 : vector<8x1xf32>
    %cst_558 = arith.constant 0.000000e+00 : f32
    %578 = vector.broadcast %cst_558 : f32 to vector<8x1xf32>
    %579 = arith.subf %578, %569 : vector<8x1xf32>
    %cst_559 = arith.constant 0.000000e+00 : f32
    %580 = vector.broadcast %cst_559 : f32 to vector<8x1xf32>
    %581 = arith.minimumf %579, %580 : vector<8x1xf32>
    %582 = math.absf %579 : vector<8x1xf32>
    %cst_560 = arith.constant 0.000000e+00 : f32
    %583 = vector.broadcast %cst_560 : f32 to vector<8x1xf32>
    %584 = arith.subf %583, %582 : vector<8x1xf32>
    %585 = math.exp %584 : vector<8x1xf32>
    %586 = math.log1p %585 : vector<8x1xf32>
    %587 = arith.subf %581, %586 : vector<8x1xf32>
    %588 = arith.addf %577, %587 : vector<8x1xf32>
    %c8_i32_561 = arith.constant 8 : i32
    %589 = arith.muli %arg0, %c8_i32_561 : i32
    %590 = tpu.iota {dimensions = array<i32: 0>} : vector<8x1xi32>
    %591 = vector.broadcast %589 : i32 to vector<8x1xi32>
    %592 = arith.addi %591, %590 : vector<8x1xi32>
    %c8_i32_562 = arith.constant 8 : i32
    %593 = vector.broadcast %c8_i32_562 : i32 to vector<8x1xi32>
    %594 = arith.cmpi slt, %592, %593 : vector<8x1xi32>
    %cst_563 = arith.constant 0.000000e+00 : f32
    %595 = vector.broadcast %cst_563 : f32 to vector<8x1xf32>
    %596 = arith.select %594, %588, %595 : vector<8x1xi1>, vector<8x1xf32>
    %cst_564 = arith.constant dense<0.000000e+00> : vector<1xf32>
    %597 = vector.multi_reduction <add>, %596, %cst_564 [0] : vector<8x1xf32> to vector<1xf32>
    %598 = vector.shape_cast %597 : vector<1xf32> to vector<1x1xf32>
    %cst_565 = arith.constant 0.000000e+00 : f32
    %599 = vector.broadcast %cst_565 : f32 to vector<1x1xf32>
    %600 = arith.subf %599, %598 : vector<1x1xf32>
    %c0_566 = arith.constant 0 : index
    %c0_567 = arith.constant 0 : index
    %601 = vector.load %arg6[%c0_566, %c0_567] : memref<1x1xf32, #tpu.memory_space<vmem>>, vector<1x1xf32>
    tpu.vector_store %arg6[%c0_566, %c0_567], %600 {strides = array<i32>} : memref<1x1xf32, #tpu.memory_space<vmem>>, vector<1x1xf32>,
    return
  }
  func.func @transform_2(%arg0: i32, %arg1: memref<8xi32, #tpu.memory_space<smem>>, %arg2: memref<8xi32, #tpu.memory_space<smem>>, %arg3: memref<8x4xi32, #tpu.memory_space<smem>>) -> (i32, i32) {
    %c0_i32 = arith.constant 0 : i32
    %c0_i32_0 = arith.constant 0 : i32
    return %arg0, %c0_i32 : i32, i32
  }
}

</mosaic_0001>

<llo_original>
// kernel: tpu_custom_call.1
$region0: #{tpu_custom_call.1}
  #allocation0 [shape = 'u32[]', space=smem, size = 0x4, offset = 0x4, fixed_abs, tag = 'smem constant byte address 0x4 - core index']
  #allocation1 [shape = 'u32[144,128]{1,0:T(1,128)}', space=vmem, size = 0x12000, scoped, tag = 'internal scratch']
  #allocation2 [shape = 'f32[8,128]{1,0:T(8,128)}', space=vmem, size = 0x1000, scoped, tag = 'scratch operand']
  #allocation3 [shape = 'f32[8,128]{1,0:T(8,128)}', space=vmem, size = 0x1000, scoped, tag = 'scratch operand']
  #allocation4 [shape = 'f32[4,8,128]{2,1,0:T(8,128)}', space=vmem, size = 0x4000, scoped, tag = 'scratch operand']
  #allocation5 [shape = 's32[8]{0}', space=sflag, size = 0x20, scoped, tag = 'scratch operand']
  #allocation6 [shape = 's32[8]{0}', space=sflag, size = 0x20, scoped, tag = 'scratch operand']
  #allocation7 [shape = 's32[32]{0}', space=sflag, size = 0x80, scoped, tag = 'scratch operand']
  #allocation8 [shape = 's32[1]{0}', space=sflag, size = 0x4, scoped, tag = 'scoped memory for tpu_custom_call.1']
  #allocation9 [shape = 'u8[512]{0}', space=smem, size = 0x200, scoped, tag = 'prefetched SMEM operand 0']
  #allocation10 [shape = 'u8[512]{0}', space=smem, size = 0x200, scoped, tag = 'prefetched SMEM operand 1']
  #allocation11 [shape = 'u8[4096]{0}', space=smem, size = 0x1000, scoped, tag = 'prefetched SMEM operand 2']
  #allocation14 [shape = 's32[]', space=sflag, size = 0x4, offset = 0, fixed_abs, tag = 'sflag constant byte address 0x0 - dummy sync flag']
  #allocation15 [shape = 's32[]', space=sflag, size = 0x4, offset = 0, fixed_abs, tag = 'sflag constant byte address 0x0 - dummy sync flag']
  #allocation16 [shape = 'u32[]', space=smem, size = 0x4, offset = 0x44, fixed_abs, tag = 'smem constant byte address 0x44 - assertion arg 0']
  #allocation17 [shape = 'u32[]', space=smem, size = 0x4, offset = 0x48, fixed_abs, tag = 'smem constant byte address 0x48 - assertion arg 1']
  #allocation18 [shape = 's32[]', space=sflag, size = 0x4, offset = 0, fixed_abs, tag = 'sflag constant byte address 0x0 - dummy sync flag']
  #allocation19 [shape = 's32[]', space=sflag, size = 0x4, offset = 0, fixed_abs, tag = 'sflag constant byte address 0x0 - dummy sync flag']
  #allocation20 [shape = 's32[]', space=sflag, size = 0x4, offset = 0, fixed_abs, tag = 'sflag constant byte address 0x0 - dummy sync flag']
  #allocation21 [shape = 's32[]', space=sflag, size = 0x4, offset = 0, fixed_abs, tag = 'sflag constant byte address 0x0 - dummy sync flag']
  #allocation22 [shape = 's32[]', space=sflag, size = 0x4, offset = 0, fixed_abs, tag = 'sflag constant byte address 0x0 - dummy sync flag']
  #allocation23 [shape = 's32[]', space=sflag, size = 0x4, offset = 0, fixed_abs, tag = 'sflag constant byte address 0x0 - dummy sync flag']
  #allocation24 [shape = 's32[]', space=sflag, size = 0x4, offset = 0, fixed_abs, tag = 'sflag constant byte address 0x0 - dummy sync flag']
  #allocation25 [shape = 's32[]', space=sflag, size = 0x4, offset = 0, fixed_abs, tag = 'sflag constant byte address 0x0 - dummy sync flag']
  #allocation26 [shape = 's32[]', space=sflag, size = 0x4, offset = 0, fixed_abs, tag = 'sflag constant byte address 0x0 - dummy sync flag']
  #allocation27 [shape = 's32[]', space=sflag, size = 0x4, offset = 0, fixed_abs, tag = 'sflag constant byte address 0x0 - dummy sync flag']
  #allocation28 [shape = 's32[]', space=sflag, size = 0x4, offset = 0, fixed_abs, tag = 'sflag constant byte address 0x0 - dummy sync flag']
  #allocation29 [shape = 's32[]', space=sflag, size = 0x4, offset = 0, fixed_abs, tag = 'sflag constant byte address 0x0 - dummy sync flag']
  #allocation30 [shape = 's32[]', space=sflag, size = 0x4, offset = 0, fixed_abs, tag = 'sflag constant byte address 0x0 - dummy sync flag']
  #allocation31 [shape = 's32[]', space=sflag, size = 0x4, offset = 0, fixed_abs, tag = 'sflag constant byte address 0x0 - dummy sync flag']
  #allocation32 [shape = 's32[]', space=sflag, size = 0x4, offset = 0, fixed_abs, tag = 'sflag constant byte address 0x0 - dummy sync flag']
  #allocation33 [shape = 's32[]', space=sflag, size = 0x4, offset = 0, fixed_abs, tag = 'sflag constant byte address 0x0 - dummy sync flag']
  #allocation34 [shape = 's32[]', space=sflag, size = 0x4, offset = 0, fixed_abs, tag = 'sflag constant byte address 0x0 - dummy sync flag']
  #allocation35 [shape = 's32[]', space=sflag, size = 0x4, offset = 0, fixed_abs, tag = 'sflag constant byte address 0x0 - dummy sync flag']
  #allocation36 [shape = 's32[]', space=sflag, size = 0x4, offset = 0, fixed_abs, tag = 'sflag constant byte address 0x0 - dummy sync flag']
  #allocation37 [shape = 's32[]', space=sflag, size = 0x4, offset = 0, fixed_abs, tag = 'sflag constant byte address 0x0 - dummy sync flag']
  #allocation38 [shape = 's32[]', space=sflag, size = 0x4, offset = 0, fixed_abs, tag = 'sflag constant byte address 0x0 - dummy sync flag']
  #allocation39 [shape = 's32[]', space=sflag, size = 0x4, offset = 0, fixed_abs, tag = 'sflag constant byte address 0x0 - dummy sync flag']
  #allocation40 [shape = 's32[]', space=sflag, size = 0x4, offset = 0, fixed_abs, tag = 'sflag constant byte address 0x0 - dummy sync flag']
  #allocation41 [shape = 's32[]', space=sflag, size = 0x4, offset = 0, fixed_abs, tag = 'sflag constant byte address 0x0 - dummy sync flag']
  #allocation42 [shape = 's32[]', space=sflag, size = 0x4, offset = 0, fixed_abs, tag = 'sflag constant byte address 0x0 - dummy sync flag']
  #allocation43 [shape = 's32[]', space=sflag, size = 0x4, offset = 0, fixed_abs, tag = 'sflag constant byte address 0x0 - dummy sync flag']
  #allocation44 [shape = 's32[]', space=sflag, size = 0x4, offset = 0, fixed_abs, tag = 'sflag constant byte address 0x0 - dummy sync flag']
  #allocation45 [shape = 's32[]', space=sflag, size = 0x4, offset = 0, fixed_abs, tag = 'sflag constant byte address 0x0 - dummy sync flag']
  #allocation46 [shape = 's32[]', space=sflag, size = 0x4, offset = 0, fixed_abs, tag = 'sflag constant byte address 0x0 - dummy sync flag']
  #allocation47 [shape = 's32[]', space=sflag, size = 0x4, offset = 0, fixed_abs, tag = 'sflag constant byte address 0x0 - dummy sync flag']
  #allocation48 [shape = 's32[]', space=sflag, size = 0x4, offset = 0, fixed_abs, tag = 'sflag constant byte address 0x0 - dummy sync flag']
  #allocation49 [shape = 's32[]', space=sflag, size = 0x4, offset = 0, fixed_abs, tag = 'sflag constant byte address 0x0 - dummy sync flag']
  #allocation50 [shape = 's32[]', space=sflag, size = 0x4, offset = 0, fixed_abs, tag = 'sflag constant byte address 0x0 - dummy sync flag']
  #allocation51 [shape = 's32[]', space=sflag, size = 0x4, offset = 0, fixed_abs, tag = 'sflag constant byte address 0x0 - dummy sync flag']
  #allocation52 [shape = 's32[]', space=sflag, size = 0x4, offset = 0, fixed_abs, tag = 'sflag constant byte address 0x0 - dummy sync flag']
  #allocation53 [shape = 's32[]', space=sflag, size = 0x4, offset = 0, fixed_abs, tag = 'sflag constant byte address 0x0 - dummy sync flag']
  #allocation54 [shape = 's32[]', space=sflag, size = 0x4, offset = 0, fixed_abs, tag = 'sflag constant byte address 0x0 - dummy sync flag']
  #allocation55 [shape = 's32[]', space=sflag, size = 0x4, offset = 0, fixed_abs, tag = 'sflag constant byte address 0x0 - dummy sync flag']
  #allocation56 [shape = 's32[]', space=sflag, size = 0x4, offset = 0, fixed_abs, tag = 'sflag constant byte address 0x0 - dummy sync flag']
  #allocation57 [shape = 's32[]', space=sflag, size = 0x4, offset = 0, fixed_abs, tag = 'sflag constant byte address 0x0 - dummy sync flag']
  #allocation58 [shape = 's32[]', space=sflag, size = 0x4, offset = 0, fixed_abs, tag = 'sflag constant byte address 0x0 - dummy sync flag']
  #allocation59 [shape = 's32[]', space=sflag, size = 0x4, offset = 0, fixed_abs, tag = 'sflag constant byte address 0x0 - dummy sync flag']
  #allocation60 [shape = 's32[]', space=sflag, size = 0x4, offset = 0, fixed_abs, tag = 'sflag constant byte address 0x0 - dummy sync flag']
  #allocation61 [shape = 's32[]', space=sflag, size = 0x4, offset = 0, fixed_abs, tag = 'sflag constant byte address 0x0 - dummy sync flag']
  #allocation62 [shape = 's32[]', space=sflag, size = 0x4, offset = 0, fixed_abs, tag = 'sflag constant byte address 0x0 - dummy sync flag']
  #allocation63 [shape = 's32[]', space=sflag, size = 0x4, offset = 0, fixed_abs, tag = 'sflag constant byte address 0x0 - dummy sync flag']
  #allocation64 [shape = 's32[]', space=sflag, size = 0x4, offset = 0, fixed_abs, tag = 'sflag constant byte address 0x0 - dummy sync flag']
  #allocation65 [shape = 's32[]', space=sflag, size = 0x4, offset = 0, fixed_abs, tag = 'sflag constant byte address 0x0 - dummy sync flag']
  #allocation66 [shape = 's32[]', space=sflag, size = 0x4, offset = 0, fixed_abs, tag = 'sflag constant byte address 0x0 - dummy sync flag']
  #allocation67 [shape = 's32[]', space=sflag, size = 0x4, offset = 0, fixed_abs, tag = 'sflag constant byte address 0x0 - dummy sync flag']
  #allocation68 [shape = 's32[]', space=sflag, size = 0x4, offset = 0, fixed_abs, tag = 'sflag constant byte address 0x0 - dummy sync flag']
  #allocation69 [shape = 's32[]', space=sflag, size = 0x4, offset = 0, fixed_abs, tag = 'sflag constant byte address 0x0 - dummy sync flag']
  #allocation70 [shape = 's32[]', space=sflag, size = 0x4, offset = 0, fixed_abs, tag = 'sflag constant byte address 0x0 - dummy sync flag']
  #allocation71 [shape = 's32[]', space=sflag, size = 0x4, offset = 0, fixed_abs, tag = 'sflag constant byte address 0x0 - dummy sync flag']
  #allocation72 [shape = 's32[]', space=sflag, size = 0x4, offset = 0, fixed_abs, tag = 'sflag constant byte address 0x0 - dummy sync flag']
  #allocation73 [shape = 's32[]', space=sflag, size = 0x4, offset = 0, fixed_abs, tag = 'sflag constant byte address 0x0 - dummy sync flag']
  #allocation74 [shape = 's32[]', space=sflag, size = 0x4, offset = 0, fixed_abs, tag = 'sflag constant byte address 0x0 - dummy sync flag']
  #allocation75 [shape = 's32[]', space=sflag, size = 0x4, offset = 0, fixed_abs, tag = 'sflag constant byte address 0x0 - dummy sync flag']
  #allocation76 [shape = 's32[]', space=sflag, size = 0x4, offset = 0, fixed_abs, tag = 'sflag constant byte address 0x0 - dummy sync flag']
  #allocation77 [shape = 's32[]', space=sflag, size = 0x4, offset = 0, fixed_abs, tag = 'sflag constant byte address 0x0 - dummy sync flag']
  #allocation78 [shape = 's32[]', space=sflag, size = 0x4, offset = 0, fixed_abs, tag = 'sflag constant byte address 0x0 - dummy sync flag']
  #allocation79 [shape = 's32[]', space=sflag, size = 0x4, offset = 0, fixed_abs, tag = 'sflag constant byte address 0x0 - dummy sync flag']
  #allocation80 [shape = 's32[]', space=sflag, size = 0x4, offset = 0, fixed_abs, tag = 'sflag constant byte address 0x0 - dummy sync flag']
  #allocation81 [shape = 's32[]', space=sflag, size = 0x4, offset = 0, fixed_abs, tag = 'sflag constant byte address 0x0 - dummy sync flag']
  #allocation82 [shape = 's32[]', space=sflag, size = 0x4, offset = 0, fixed_abs, tag = 'sflag constant byte address 0x0 - dummy sync flag']
  #allocation83 [shape = 's32[]', space=sflag, size = 0x4, offset = 0, fixed_abs, tag = 'sflag constant byte address 0x0 - dummy sync flag']
  #allocation84 [shape = 's32[]', space=sflag, size = 0x4, offset = 0, fixed_abs, tag = 'sflag constant byte address 0x0 - dummy sync flag']
  #allocation85 [shape = 's32[]', space=sflag, size = 0x4, offset = 0, fixed_abs, tag = 'sflag constant byte address 0x0 - dummy sync flag']
  #allocation86 [shape = 's32[]', space=sflag, size = 0x4, offset = 0, fixed_abs, tag = 'sflag constant byte address 0x0 - dummy sync flag']
  #allocation87 [shape = 's32[]', space=sflag, size = 0x4, offset = 0, fixed_abs, tag = 'sflag constant byte address 0x0 - dummy sync flag']
  #allocation88 [shape = 's32[]', space=sflag, size = 0x4, offset = 0, fixed_abs, tag = 'sflag constant byte address 0x0 - dummy sync flag']
  #allocation89 [shape = 's32[]', space=sflag, size = 0x4, offset = 0, fixed_abs, tag = 'sflag constant byte address 0x0 - dummy sync flag']
  #allocation90 [shape = 's32[]', space=sflag, size = 0x4, offset = 0, fixed_abs, tag = 'sflag constant byte address 0x0 - dummy sync flag']
  #allocation91 [shape = 's32[]', space=sflag, size = 0x4, offset = 0, fixed_abs, tag = 'sflag constant byte address 0x0 - dummy sync flag']
  #allocation92 [shape = 's32[]', space=sflag, size = 0x4, offset = 0, fixed_abs, tag = 'sflag constant byte address 0x0 - dummy sync flag']
  #allocation93 [shape = 's32[]', space=sflag, size = 0x4, offset = 0, fixed_abs, tag = 'sflag constant byte address 0x0 - dummy sync flag']
  #allocation94 [shape = 's32[]', space=sflag, size = 0x4, offset = 0, fixed_abs, tag = 'sflag constant byte address 0x0 - dummy sync flag']
  #allocation95 [shape = 's32[]', space=sflag, size = 0x4, offset = 0, fixed_abs, tag = 'sflag constant byte address 0x0 - dummy sync flag']
  #allocation96 [shape = 's32[]', space=sflag, size = 0x4, offset = 0, fixed_abs, tag = 'sflag constant byte address 0x0 - dummy sync flag']
  #allocation97 [shape = 's32[]', space=sflag, size = 0x4, offset = 0, fixed_abs, tag = 'sflag constant byte address 0x0 - dummy sync flag']
  #allocation98 [shape = 's32[]', space=sflag, size = 0x4, offset = 0, fixed_abs, tag = 'sflag constant byte address 0x0 - dummy sync flag']
  #allocation99 [shape = 's32[]', space=sflag, size = 0x4, offset = 0, fixed_abs, tag = 'sflag constant byte address 0x0 - dummy sync flag']
  #allocation100 [shape = 's32[]', space=sflag, size = 0x4, offset = 0, fixed_abs, tag = 'sflag constant byte address 0x0 - dummy sync flag']
  #allocation101 [shape = 's32[]', space=sflag, size = 0x4, offset = 0, fixed_abs, tag = 'sflag constant byte address 0x0 - dummy sync flag']
  #allocation102 [shape = 's32[]', space=sflag, size = 0x4, offset = 0, fixed_abs, tag = 'sflag constant byte address 0x0 - dummy sync flag']
  #allocation103 [shape = 's32[]', space=sflag, size = 0x4, offset = 0, fixed_abs, tag = 'sflag constant byte address 0x0 - dummy sync flag']
  #allocation104 [shape = 's32[]', space=sflag, size = 0x4, offset = 0, fixed_abs, tag = 'sflag constant byte address 0x0 - dummy sync flag']
  #allocation105 [shape = 's32[]', space=sflag, size = 0x4, offset = 0, fixed_abs, tag = 'sflag constant byte address 0x0 - dummy sync flag']
  #allocation106 [shape = 's32[]', space=sflag, size = 0x4, offset = 0, fixed_abs, tag = 'sflag constant byte address 0x0 - dummy sync flag']
  #allocation107 [shape = 's32[]', space=sflag, size = 0x4, offset = 0, fixed_abs, tag = 'sflag constant byte address 0x0 - dummy sync flag']
  #allocation108 [shape = 's32[]', space=sflag, size = 0x4, offset = 0, fixed_abs, tag = 'sflag constant byte address 0x0 - dummy sync flag']
  #allocation109 [shape = 's32[]', space=sflag, size = 0x4, offset = 0, fixed_abs, tag = 'sflag constant byte address 0x0 - dummy sync flag']
  #allocation110 [shape = 's32[]', space=sflag, size = 0x4, offset = 0, fixed_abs, tag = 'sflag constant byte address 0x0 - dummy sync flag']
  #allocation111 [shape = 's32[]', space=sflag, size = 0x4, offset = 0, fixed_abs, tag = 'sflag constant byte address 0x0 - dummy sync flag']
  %s0 = inlined_call_operand.vmem [shape: s32[8], index: 0, kind: input, shape index: {}]
  %s1 = inlined_call_operand.vmem [shape: s32[8], index: 1, kind: input, shape index: {}]
  %s2 = inlined_call_operand.vmem [shape: s32[8,4], index: 2, kind: input, shape index: {}]
  %s3 = inlined_call_operand.hbm [shape: f32[64,128], index: 3, kind: input, shape index: {}]
  %s4 = inlined_call_operand.hbm [shape: f32[64,128], index: 4, kind: input, shape index: {}]
  %s5 = inlined_call_operand.hbm [shape: f32[1,1], index: 5, kind: output, shape index: {}]
  %s6 = sld [smem:[#allocation0]]
  $region202: #{tpu_custom_call.1} parent=0
    _
  %s8 = ssub.s32 1, %s6
  %s9 = scalar_select 0, %s8, %s6
  %s10 = sshll.u32 %s0, 4
  %s11 = int_to_ptr.vmem [resolvable:$true] %s10
  %13 = dma.vmem_to_smem %s11, 16, [#allocation9], [#allocation8]
  %s14 = sshll.u32 %s1, 4
  %s15 = int_to_ptr.vmem [resolvable:$true] %s14
  %17 = dma.vmem_to_smem %s15, 16, [#allocation10], [#allocation8]
  %s18 = sshll.u32 %s2, 4
  %s19 = int_to_ptr.vmem [resolvable:$true] %s18
  %21 = dma.vmem_to_smem %s19, 128, [#allocation11], [#allocation8]
  %22 = dma.done [#allocation8], 160
  %23 = sfence
  $region1: #{tpu_custom_call.1} parent=0
    #allocation12 [shape = 'u8[512]{0}', space=vmem, size = 0x400, scoped, tag = 'output window, operand 0, single buffered']
    #allocation13 [shape = 's32[1]{0}', space=sflag, size = 0x4, scoped, tag = 'scoped memory for tpu_custom_call.1']
    %24 = vsyncpa [#allocation13], 0
    %s25 = smul.u32 0, 8
    %s26 = sld [smem:[#allocation9 + %s25]]
    %s27 = sld [smem:[#allocation10 + %s25]]
    %s28 = smul.addr %s26, 16
    %s29 = scalar_lea.hbm %s3, %s28
    // Predicated region
    $region2: #{tpu_custom_call.1} parent=1 // pred_check
      _
    $region3: #{tpu_custom_call.1} parent=1 // pred_check_branch
      %31 = sbr.rel target = $region5
    $region4: #{tpu_custom_call.1} parent=1 // pred_region
      %32 = sst [smem:[#allocation16]] [#allocation15]
      %33 = sst [smem:[#allocation17]] [#allocation14]
    $region5: #{tpu_custom_call.1} parent=1 // pred_fallthru
      _
    %35 = shalt.err (0)
    %s37 = sshll.u32 [#allocation2], 4
    %s38 = int_to_ptr.vmem [resolvable:$true] %s37
    %40 = dma.hbm_to_vmem [thread:$0]  %s29, 16, %s38, [#allocation5]
    %s41 = smul.addr %s27, 16
    %s42 = scalar_lea.hbm %s4, %s41
    // Predicated region
    $region6: #{tpu_custom_call.1} parent=1 // pred_check
      _
    $region7: #{tpu_custom_call.1} parent=1 // pred_check_branch
      %44 = sbr.rel target = $region9
    $region8: #{tpu_custom_call.1} parent=1 // pred_region
      %45 = sst [smem:[#allocation16]] [#allocation19]
      %46 = sst [smem:[#allocation17]] [#allocation18]
    $region9: #{tpu_custom_call.1} parent=1 // pred_fallthru
      _
    %48 = shalt.err (0)
    %s50 = sshll.u32 [#allocation3], 4
    %s51 = int_to_ptr.vmem [resolvable:$true] %s50
    %53 = dma.hbm_to_vmem [thread:$0]  %s42, 16, %s51, [#allocation6]
    %s54 = smul.u32 %s25, 128
    %s55 = sld [smem:[#allocation11 + %s54]]
    %s56 = smul.addr %s55, 16
    %s57 = scalar_lea.hbm %s4, %s56
    // Predicated region
    $region10: #{tpu_custom_call.1} parent=1 // pred_check
      _
    $region11: #{tpu_custom_call.1} parent=1 // pred_check_branch
      %59 = sbr.rel target = $region13
    $region12: #{tpu_custom_call.1} parent=1 // pred_region
      %60 = sst [smem:[#allocation16]] [#allocation21]
      %61 = sst [smem:[#allocation17]] [#allocation20]
    $region13: #{tpu_custom_call.1} parent=1 // pred_fallthru
      _
    %63 = shalt.err (0)
    %s65 = sshll.u32 [#allocation4], 4
    %s66 = int_to_ptr.vmem [resolvable:$true] %s65
    %68 = dma.hbm_to_vmem [thread:$0]  %s57, 16, %s66, [#allocation7]
    %s69 = sadd.s32 %s54, 1
    %s70 = sld [smem:[#allocation11 + %s69]]
    %s71 = smul.addr %s70, 16
    %s72 = scalar_lea.hbm %s4, %s71
    %s73 = scalar_lea.vmem [#allocation4], 8
    %s74 = scalar_lea.sflag [#allocation7], 8
    // Predicated region
    $region14: #{tpu_custom_call.1} parent=1 // pred_check
      _
    $region15: #{tpu_custom_call.1} parent=1 // pred_check_branch
      %76 = sbr.rel target = $region17
    $region16: #{tpu_custom_call.1} parent=1 // pred_region
      %77 = sst [smem:[#allocation16]] [#allocation23]
      %78 = sst [smem:[#allocation17]] [#allocation22]
    $region17: #{tpu_custom_call.1} parent=1 // pred_fallthru
      _
    %80 = shalt.err (0)
    %s82 = sshll.u32 %s73, 4
    %s83 = int_to_ptr.vmem [resolvable:$true] %s82
    %85 = dma.hbm_to_vmem [thread:$0]  %s72, 16, %s83, %s74
    %s86 = sadd.s32 %s54, 2
    %s87 = sld [smem:[#allocation11 + %s86]]
    %s88 = smul.addr %s87, 16
    %s89 = scalar_lea.hbm %s4, %s88
    %s90 = scalar_lea.vmem [#allocation4], 16
    %s91 = scalar_lea.sflag [#allocation7], 16
    // Predicated region
    $region18: #{tpu_custom_call.1} parent=1 // pred_check
      _
    $region19: #{tpu_custom_call.1} parent=1 // pred_check_branch
      %93 = sbr.rel target = $region21
    $region20: #{tpu_custom_call.1} parent=1 // pred_region
      %94 = sst [smem:[#allocation16]] [#allocation25]
      %95 = sst [smem:[#allocation17]] [#allocation24]
    $region21: #{tpu_custom_call.1} parent=1 // pred_fallthru
      _
    %97 = shalt.err (0)
    %s99 = sshll.u32 %s90, 4
    %s100 = int_to_ptr.vmem [resolvable:$true] %s99
    %102 = dma.hbm_to_vmem [thread:$0]  %s89, 16, %s100, %s91
    %s103 = sadd.s32 %s54, 3
    %s104 = sld [smem:[#allocation11 + %s103]]
    %s105 = smul.addr %s104, 16
    %s106 = scalar_lea.hbm %s4, %s105
    %s107 = scalar_lea.vmem [#allocation4], 24
    %s108 = scalar_lea.sflag [#allocation7], 24
    // Predicated region
    $region22: #{tpu_custom_call.1} parent=1 // pred_check
      _
    $region23: #{tpu_custom_call.1} parent=1 // pred_check_branch
      %110 = sbr.rel target = $region25
    $region24: #{tpu_custom_call.1} parent=1 // pred_region
      %111 = sst [smem:[#allocation16]] [#allocation27]
      %112 = sst [smem:[#allocation17]] [#allocation26]
    $region25: #{tpu_custom_call.1} parent=1 // pred_fallthru
      _
    %114 = shalt.err (0)
    %s116 = sshll.u32 %s107, 4
    %s117 = int_to_ptr.vmem [resolvable:$true] %s116
    %119 = dma.hbm_to_vmem [thread:$0]  %s106, 16, %s117, %s108
    %s120 = sadd.s32 %s25, 1
    %s121 = sld [smem:[#allocation9 + %s120]]
    %s122 = sld [smem:[#allocation10 + %s120]]
    %s123 = smul.addr %s121, 16
    %s124 = scalar_lea.hbm %s3, %s123
    %s125 = scalar_lea.vmem [#allocation2], 1
    %s126 = scalar_lea.sflag [#allocation5], 1
    // Predicated region
    $region26: #{tpu_custom_call.1} parent=1 // pred_check
      _
    $region27: #{tpu_custom_call.1} parent=1 // pred_check_branch
      %128 = sbr.rel target = $region29
    $region28: #{tpu_custom_call.1} parent=1 // pred_region
      %129 = sst [smem:[#allocation16]] [#allocation29]
      %130 = sst [smem:[#allocation17]] [#allocation28]
    $region29: #{tpu_custom_call.1} parent=1 // pred_fallthru
      _
    %132 = shalt.err (0)
    %s134 = sshll.u32 %s125, 4
    %s135 = int_to_ptr.vmem [resolvable:$true] %s134
    %137 = dma.hbm_to_vmem [thread:$0]  %s124, 16, %s135, %s126
    %s138 = smul.addr %s122, 16
    %s139 = scalar_lea.hbm %s4, %s138
    %s140 = scalar_lea.vmem [#allocation3], 1
    %s141 = scalar_lea.sflag [#allocation6], 1
    // Predicated region
    $region30: #{tpu_custom_call.1} parent=1 // pred_check
      _
    $region31: #{tpu_custom_call.1} parent=1 // pred_check_branch
      %143 = sbr.rel target = $region33
    $region32: #{tpu_custom_call.1} parent=1 // pred_region
      %144 = sst [smem:[#allocation16]] [#allocation31]
      %145 = sst [smem:[#allocation17]] [#allocation30]
    $region33: #{tpu_custom_call.1} parent=1 // pred_fallthru
      _
    %147 = shalt.err (0)
    %s149 = sshll.u32 %s140, 4
    %s150 = int_to_ptr.vmem [resolvable:$true] %s149
    %152 = dma.hbm_to_vmem [thread:$0]  %s139, 16, %s150, %s141
    %s153 = smul.u32 %s120, 128
    %s154 = sld [smem:[#allocation11 + %s153]]
    %s155 = smul.addr %s154, 16
    %s156 = scalar_lea.hbm %s4, %s155
    %s157 = scalar_lea.vmem [#allocation4], 1
    %s158 = scalar_lea.sflag [#allocation7], 1
    // Predicated region
    $region34: #{tpu_custom_call.1} parent=1 // pred_check
      _
    $region35: #{tpu_custom_call.1} parent=1 // pred_check_branch
      %160 = sbr.rel target = $region37
    $region36: #{tpu_custom_call.1} parent=1 // pred_region
      %161 = sst [smem:[#allocation16]] [#allocation33]
      %162 = sst [smem:[#allocation17]] [#allocation32]
    $region37: #{tpu_custom_call.1} parent=1 // pred_fallthru
      _
    %164 = shalt.err (0)
    %s166 = sshll.u32 %s157, 4
    %s167 = int_to_ptr.vmem [resolvable:$true] %s166
    %169 = dma.hbm_to_vmem [thread:$0]  %s156, 16, %s167, %s158
    %s170 = sadd.s32 %s153, 1
    %s171 = sld [smem:[#allocation11 + %s170]]
    %s172 = smul.addr %s171, 16
    %s173 = scalar_lea.hbm %s4, %s172
    %s174 = scalar_lea.vmem [#allocation4], 9
    %s175 = scalar_lea.sflag [#allocation7], 9
    // Predicated region
    $region38: #{tpu_custom_call.1} parent=1 // pred_check
      _
    $region39: #{tpu_custom_call.1} parent=1 // pred_check_branch
      %177 = sbr.rel target = $region41
    $region40: #{tpu_custom_call.1} parent=1 // pred_region
      %178 = sst [smem:[#allocation16]] [#allocation35]
      %179 = sst [smem:[#allocation17]] [#allocation34]
    $region41: #{tpu_custom_call.1} parent=1 // pred_fallthru
      _
    %181 = shalt.err (0)
    %s183 = sshll.u32 %s174, 4
    %s184 = int_to_ptr.vmem [resolvable:$true] %s183
    %186 = dma.hbm_to_vmem [thread:$0]  %s173, 16, %s184, %s175
    %s187 = sadd.s32 %s153, 2
    %s188 = sld [smem:[#allocation11 + %s187]]
    %s189 = smul.addr %s188, 16
    %s190 = scalar_lea.hbm %s4, %s189
    %s191 = scalar_lea.vmem [#allocation4], 17
    %s192 = scalar_lea.sflag [#allocation7], 17
    // Predicated region
    $region42: #{tpu_custom_call.1} parent=1 // pred_check
      _
    $region43: #{tpu_custom_call.1} parent=1 // pred_check_branch
      %194 = sbr.rel target = $region45
    $region44: #{tpu_custom_call.1} parent=1 // pred_region
      %195 = sst [smem:[#allocation16]] [#allocation37]
      %196 = sst [smem:[#allocation17]] [#allocation36]
    $region45: #{tpu_custom_call.1} parent=1 // pred_fallthru
      _
    %198 = shalt.err (0)
    %s200 = sshll.u32 %s191, 4
    %s201 = int_to_ptr.vmem [resolvable:$true] %s200
    %203 = dma.hbm_to_vmem [thread:$0]  %s190, 16, %s201, %s192
    %s204 = sadd.s32 %s153, 3
    %s205 = sld [smem:[#allocation11 + %s204]]
    %s206 = smul.addr %s205, 16
    %s207 = scalar_lea.hbm %s4, %s206
    %s208 = scalar_lea.vmem [#allocation4], 25
    %s209 = scalar_lea.sflag [#allocation7], 25
    // Predicated region
    $region46: #{tpu_custom_call.1} parent=1 // pred_check
      _
    $region47: #{tpu_custom_call.1} parent=1 // pred_check_branch
      %211 = sbr.rel target = $region49
    $region48: #{tpu_custom_call.1} parent=1 // pred_region
      %212 = sst [smem:[#allocation16]] [#allocation39]
      %213 = sst [smem:[#allocation17]] [#allocation38]
    $region49: #{tpu_custom_call.1} parent=1 // pred_fallthru
      _
    %215 = shalt.err (0)
    %s217 = sshll.u32 %s208, 4
    %s218 = int_to_ptr.vmem [resolvable:$true] %s217
    %220 = dma.hbm_to_vmem [thread:$0]  %s207, 16, %s218, %s209
    %s221 = sadd.s32 %s25, 2
    %s222 = sld [smem:[#allocation9 + %s221]]
    %s223 = sld [smem:[#allocation10 + %s221]]
    %s224 = smul.addr %s222, 16
    %s225 = scalar_lea.hbm %s3, %s224
    %s226 = scalar_lea.vmem [#allocation2], 2
    %s227 = scalar_lea.sflag [#allocation5], 2
    // Predicated region
    $region50: #{tpu_custom_call.1} parent=1 // pred_check
      _
    $region51: #{tpu_custom_call.1} parent=1 // pred_check_branch
      %229 = sbr.rel target = $region53
    $region52: #{tpu_custom_call.1} parent=1 // pred_region
      %230 = sst [smem:[#allocation16]] [#allocation41]
      %231 = sst [smem:[#allocation17]] [#allocation40]
    $region53: #{tpu_custom_call.1} parent=1 // pred_fallthru
      _
    %233 = shalt.err (0)
    %s235 = sshll.u32 %s226, 4
    %s236 = int_to_ptr.vmem [resolvable:$true] %s235
    %238 = dma.hbm_to_vmem [thread:$0]  %s225, 16, %s236, %s227
    %s239 = smul.addr %s223, 16
    %s240 = scalar_lea.hbm %s4, %s239
    %s241 = scalar_lea.vmem [#allocation3], 2
    %s242 = scalar_lea.sflag [#allocation6], 2
    // Predicated region
    $region54: #{tpu_custom_call.1} parent=1 // pred_check
      _
    $region55: #{tpu_custom_call.1} parent=1 // pred_check_branch
      %244 = sbr.rel target = $region57
    $region56: #{tpu_custom_call.1} parent=1 // pred_region
      %245 = sst [smem:[#allocation16]] [#allocation43]
      %246 = sst [smem:[#allocation17]] [#allocation42]
    $region57: #{tpu_custom_call.1} parent=1 // pred_fallthru
      _
    %248 = shalt.err (0)
    %s250 = sshll.u32 %s241, 4
    %s251 = int_to_ptr.vmem [resolvable:$true] %s250
    %253 = dma.hbm_to_vmem [thread:$0]  %s240, 16, %s251, %s242
    %s254 = smul.u32 %s221, 128
    %s255 = sld [smem:[#allocation11 + %s254]]
    %s256 = smul.addr %s255, 16
    %s257 = scalar_lea.hbm %s4, %s256
    %s258 = scalar_lea.vmem [#allocation4], 2
    %s259 = scalar_lea.sflag [#allocation7], 2
    // Predicated region
    $region58: #{tpu_custom_call.1} parent=1 // pred_check
      _
    $region59: #{tpu_custom_call.1} parent=1 // pred_check_branch
      %261 = sbr.rel target = $region61
    $region60: #{tpu_custom_call.1} parent=1 // pred_region
      %262 = sst [smem:[#allocation16]] [#allocation45]
      %263 = sst [smem:[#allocation17]] [#allocation44]
    $region61: #{tpu_custom_call.1} parent=1 // pred_fallthru
      _
    %265 = shalt.err (0)
    %s267 = sshll.u32 %s258, 4
    %s268 = int_to_ptr.vmem [resolvable:$true] %s267
    %270 = dma.hbm_to_vmem [thread:$0]  %s257, 16, %s268, %s259
    %s271 = sadd.s32 %s254, 1
    %s272 = sld [smem:[#allocation11 + %s271]]
    %s273 = smul.addr %s272, 16
    %s274 = scalar_lea.hbm %s4, %s273
    %s275 = scalar_lea.vmem [#allocation4], 10
    %s276 = scalar_lea.sflag [#allocation7], 10
    // Predicated region
    $region62: #{tpu_custom_call.1} parent=1 // pred_check
      _
    $region63: #{tpu_custom_call.1} parent=1 // pred_check_branch
      %278 = sbr.rel target = $region65
    $region64: #{tpu_custom_call.1} parent=1 // pred_region
      %279 = sst [smem:[#allocation16]] [#allocation47]
      %280 = sst [smem:[#allocation17]] [#allocation46]
    $region65: #{tpu_custom_call.1} parent=1 // pred_fallthru
      _
    %282 = shalt.err (0)
    %s284 = sshll.u32 %s275, 4
    %s285 = int_to_ptr.vmem [resolvable:$true] %s284
    %287 = dma.hbm_to_vmem [thread:$0]  %s274, 16, %s285, %s276
    %s288 = sadd.s32 %s254, 2
    %s289 = sld [smem:[#allocation11 + %s288]]
    %s290 = smul.addr %s289, 16
    %s291 = scalar_lea.hbm %s4, %s290
    %s292 = scalar_lea.vmem [#allocation4], 18
    %s293 = scalar_lea.sflag [#allocation7], 18
    // Predicated region
    $region66: #{tpu_custom_call.1} parent=1 // pred_check
      _
    $region67: #{tpu_custom_call.1} parent=1 // pred_check_branch
      %295 = sbr.rel target = $region69
    $region68: #{tpu_custom_call.1} parent=1 // pred_region
      %296 = sst [smem:[#allocation16]] [#allocation49]
      %297 = sst [smem:[#allocation17]] [#allocation48]
    $region69: #{tpu_custom_call.1} parent=1 // pred_fallthru
      _
    %299 = shalt.err (0)
    %s301 = sshll.u32 %s292, 4
    %s302 = int_to_ptr.vmem [resolvable:$true] %s301
    %304 = dma.hbm_to_vmem [thread:$0]  %s291, 16, %s302, %s293
    %s305 = sadd.s32 %s254, 3
    %s306 = sld [smem:[#allocation11 + %s305]]
    %s307 = smul.addr %s306, 16
    %s308 = scalar_lea.hbm %s4, %s307
    %s309 = scalar_lea.vmem [#allocation4], 26
    %s310 = scalar_lea.sflag [#allocation7], 26
    // Predicated region
    $region70: #{tpu_custom_call.1} parent=1 // pred_check
      _
    $region71: #{tpu_custom_call.1} parent=1 // pred_check_branch
      %312 = sbr.rel target = $region73
    $region72: #{tpu_custom_call.1} parent=1 // pred_region
      %313 = sst [smem:[#allocation16]] [#allocation51]
      %314 = sst [smem:[#allocation17]] [#allocation50]
    $region73: #{tpu_custom_call.1} parent=1 // pred_fallthru
      _
    %316 = shalt.err (0)
    %s318 = sshll.u32 %s309, 4
    %s319 = int_to_ptr.vmem [resolvable:$true] %s318
    %321 = dma.hbm_to_vmem [thread:$0]  %s308, 16, %s319, %s310
    %s322 = sadd.s32 %s25, 3
    %s323 = sld [smem:[#allocation9 + %s322]]
    %s324 = sld [smem:[#allocation10 + %s322]]
    %s325 = smul.addr %s323, 16
    %s326 = scalar_lea.hbm %s3, %s325
    %s327 = scalar_lea.vmem [#allocation2], 3
    %s328 = scalar_lea.sflag [#allocation5], 3
    // Predicated region
    $region74: #{tpu_custom_call.1} parent=1 // pred_check
      _
    $region75: #{tpu_custom_call.1} parent=1 // pred_check_branch
      %330 = sbr.rel target = $region77
    $region76: #{tpu_custom_call.1} parent=1 // pred_region
      %331 = sst [smem:[#allocation16]] [#allocation53]
      %332 = sst [smem:[#allocation17]] [#allocation52]
    $region77: #{tpu_custom_call.1} parent=1 // pred_fallthru
      _
    %334 = shalt.err (0)
    %s336 = sshll.u32 %s327, 4
    %s337 = int_to_ptr.vmem [resolvable:$true] %s336
    %339 = dma.hbm_to_vmem [thread:$0]  %s326, 16, %s337, %s328
    %s340 = smul.addr %s324, 16
    %s341 = scalar_lea.hbm %s4, %s340
    %s342 = scalar_lea.vmem [#allocation3], 3
    %s343 = scalar_lea.sflag [#allocation6], 3
    // Predicated region
    $region78: #{tpu_custom_call.1} parent=1 // pred_check
      _
    $region79: #{tpu_custom_call.1} parent=1 // pred_check_branch
      %345 = sbr.rel target = $region81
    $region80: #{tpu_custom_call.1} parent=1 // pred_region
      %346 = sst [smem:[#allocation16]] [#allocation55]
      %347 = sst [smem:[#allocation17]] [#allocation54]
    $region81: #{tpu_custom_call.1} parent=1 // pred_fallthru
      _
    %349 = shalt.err (0)
    %s351 = sshll.u32 %s342, 4
    %s352 = int_to_ptr.vmem [resolvable:$true] %s351
    %354 = dma.hbm_to_vmem [thread:$0]  %s341, 16, %s352, %s343
    %s355 = smul.u32 %s322, 128
    %s356 = sld [smem:[#allocation11 + %s355]]
    %s357 = smul.addr %s356, 16
    %s358 = scalar_lea.hbm %s4, %s357
    %s359 = scalar_lea.vmem [#allocation4], 3
    %s360 = scalar_lea.sflag [#allocation7], 3
    // Predicated region
    $region82: #{tpu_custom_call.1} parent=1 // pred_check
      _
    $region83: #{tpu_custom_call.1} parent=1 // pred_check_branch
      %362 = sbr.rel target = $region85
    $region84: #{tpu_custom_call.1} parent=1 // pred_region
      %363 = sst [smem:[#allocation16]] [#allocation57]
      %364 = sst [smem:[#allocation17]] [#allocation56]
    $region85: #{tpu_custom_call.1} parent=1 // pred_fallthru
      _
    %366 = shalt.err (0)
    %s368 = sshll.u32 %s359, 4
    %s369 = int_to_ptr.vmem [resolvable:$true] %s368
    %371 = dma.hbm_to_vmem [thread:$0]  %s358, 16, %s369, %s360
    %s372 = sadd.s32 %s355, 1
    %s373 = sld [smem:[#allocation11 + %s372]]
    %s374 = smul.addr %s373, 16
    %s375 = scalar_lea.hbm %s4, %s374
    %s376 = scalar_lea.vmem [#allocation4], 11
    %s377 = scalar_lea.sflag [#allocation7], 11
    // Predicated region
    $region86: #{tpu_custom_call.1} parent=1 // pred_check
      _
    $region87: #{tpu_custom_call.1} parent=1 // pred_check_branch
      %379 = sbr.rel target = $region89
    $region88: #{tpu_custom_call.1} parent=1 // pred_region
      %380 = sst [smem:[#allocation16]] [#allocation59]
      %381 = sst [smem:[#allocation17]] [#allocation58]
    $region89: #{tpu_custom_call.1} parent=1 // pred_fallthru
      _
    %383 = shalt.err (0)
    %s385 = sshll.u32 %s376, 4
    %s386 = int_to_ptr.vmem [resolvable:$true] %s385
    %388 = dma.hbm_to_vmem [thread:$0]  %s375, 16, %s386, %s377
    %s389 = sadd.s32 %s355, 2
    %s390 = sld [smem:[#allocation11 + %s389]]
    %s391 = smul.addr %s390, 16
    %s392 = scalar_lea.hbm %s4, %s391
    %s393 = scalar_lea.vmem [#allocation4], 19
    %s394 = scalar_lea.sflag [#allocation7], 19
    // Predicated region
    $region90: #{tpu_custom_call.1} parent=1 // pred_check
      _
    $region91: #{tpu_custom_call.1} parent=1 // pred_check_branch
      %396 = sbr.rel target = $region93
    $region92: #{tpu_custom_call.1} parent=1 // pred_region
      %397 = sst [smem:[#allocation16]] [#allocation61]
      %398 = sst [smem:[#allocation17]] [#allocation60]
    $region93: #{tpu_custom_call.1} parent=1 // pred_fallthru
      _
    %400 = shalt.err (0)
    %s402 = sshll.u32 %s393, 4
    %s403 = int_to_ptr.vmem [resolvable:$true] %s402
    %405 = dma.hbm_to_vmem [thread:$0]  %s392, 16, %s403, %s394
    %s406 = sadd.s32 %s355, 3
    %s407 = sld [smem:[#allocation11 + %s406]]
    %s408 = smul.addr %s407, 16
    %s409 = scalar_lea.hbm %s4, %s408
    %s410 = scalar_lea.vmem [#allocation4], 27
    %s411 = scalar_lea.sflag [#allocation7], 27
    // Predicated region
    $region94: #{tpu_custom_call.1} parent=1 // pred_check
      _
    $region95: #{tpu_custom_call.1} parent=1 // pred_check_branch
      %413 = sbr.rel target = $region97
    $region96: #{tpu_custom_call.1} parent=1 // pred_region
      %414 = sst [smem:[#allocation16]] [#allocation63]
      %415 = sst [smem:[#allocation17]] [#allocation62]
    $region97: #{tpu_custom_call.1} parent=1 // pred_fallthru
      _
    %417 = shalt.err (0)
    %s419 = sshll.u32 %s410, 4
    %s420 = int_to_ptr.vmem [resolvable:$true] %s419
    %422 = dma.hbm_to_vmem [thread:$0]  %s409, 16, %s420, %s411
    %s423 = sadd.s32 %s25, 4
    %s424 = sld [smem:[#allocation9 + %s423]]
    %s425 = sld [smem:[#allocation10 + %s423]]
    %s426 = smul.addr %s424, 16
    %s427 = scalar_lea.hbm %s3, %s426
    %s428 = scalar_lea.vmem [#allocation2], 4
    %s429 = scalar_lea.sflag [#allocation5], 4
    // Predicated region
    $region98: #{tpu_custom_call.1} parent=1 // pred_check
      _
    $region99: #{tpu_custom_call.1} parent=1 // pred_check_branch
      %431 = sbr.rel target = $region101
    $region100: #{tpu_custom_call.1} parent=1 // pred_region
      %432 = sst [smem:[#allocation16]] [#allocation65]
      %433 = sst [smem:[#allocation17]] [#allocation64]
    $region101: #{tpu_custom_call.1} parent=1 // pred_fallthru
      _
    %435 = shalt.err (0)
    %s437 = sshll.u32 %s428, 4
    %s438 = int_to_ptr.vmem [resolvable:$true] %s437
    %440 = dma.hbm_to_vmem [thread:$0]  %s427, 16, %s438, %s429
    %s441 = smul.addr %s425, 16
    %s442 = scalar_lea.hbm %s4, %s441
    %s443 = scalar_lea.vmem [#allocation3], 4
    %s444 = scalar_lea.sflag [#allocation6], 4
    // Predicated region
    $region102: #{tpu_custom_call.1} parent=1 // pred_check
      _
    $region103: #{tpu_custom_call.1} parent=1 // pred_check_branch
      %446 = sbr.rel target = $region105
    $region104: #{tpu_custom_call.1} parent=1 // pred_region
      %447 = sst [smem:[#allocation16]] [#allocation67]
      %448 = sst [smem:[#allocation17]] [#allocation66]
    $region105: #{tpu_custom_call.1} parent=1 // pred_fallthru
      _
    %450 = shalt.err (0)
    %s452 = sshll.u32 %s443, 4
    %s453 = int_to_ptr.vmem [resolvable:$true] %s452
    %455 = dma.hbm_to_vmem [thread:$0]  %s442, 16, %s453, %s444
    %s456 = smul.u32 %s423, 128
    %s457 = sld [smem:[#allocation11 + %s456]]
    %s458 = smul.addr %s457, 16
    %s459 = scalar_lea.hbm %s4, %s458
    %s460 = scalar_lea.vmem [#allocation4], 4
    %s461 = scalar_lea.sflag [#allocation7], 4
    // Predicated region
    $region106: #{tpu_custom_call.1} parent=1 // pred_check
      _
    $region107: #{tpu_custom_call.1} parent=1 // pred_check_branch
      %463 = sbr.rel target = $region109
    $region108: #{tpu_custom_call.1} parent=1 // pred_region
      %464 = sst [smem:[#allocation16]] [#allocation69]
      %465 = sst [smem:[#allocation17]] [#allocation68]
    $region109: #{tpu_custom_call.1} parent=1 // pred_fallthru
      _
    %467 = shalt.err (0)
    %s469 = sshll.u32 %s460, 4
    %s470 = int_to_ptr.vmem [resolvable:$true] %s469
    %472 = dma.hbm_to_vmem [thread:$0]  %s459, 16, %s470, %s461
    %s473 = sadd.s32 %s456, 1
    %s474 = sld [smem:[#allocation11 + %s473]]
    %s475 = smul.addr %s474, 16
    %s476 = scalar_lea.hbm %s4, %s475
    %s477 = scalar_lea.vmem [#allocation4], 12
    %s478 = scalar_lea.sflag [#allocation7], 12
    // Predicated region
    $region110: #{tpu_custom_call.1} parent=1 // pred_check
      _
    $region111: #{tpu_custom_call.1} parent=1 // pred_check_branch
      %480 = sbr.rel target = $region113
    $region112: #{tpu_custom_call.1} parent=1 // pred_region
      %481 = sst [smem:[#allocation16]] [#allocation71]
      %482 = sst [smem:[#allocation17]] [#allocation70]
    $region113: #{tpu_custom_call.1} parent=1 // pred_fallthru
      _
    %484 = shalt.err (0)
    %s486 = sshll.u32 %s477, 4
    %s487 = int_to_ptr.vmem [resolvable:$true] %s486
    %489 = dma.hbm_to_vmem [thread:$0]  %s476, 16, %s487, %s478
    %s490 = sadd.s32 %s456, 2
    %s491 = sld [smem:[#allocation11 + %s490]]
    %s492 = smul.addr %s491, 16
    %s493 = scalar_lea.hbm %s4, %s492
    %s494 = scalar_lea.vmem [#allocation4], 20
    %s495 = scalar_lea.sflag [#allocation7], 20
    // Predicated region
    $region114: #{tpu_custom_call.1} parent=1 // pred_check
      _
    $region115: #{tpu_custom_call.1} parent=1 // pred_check_branch
      %497 = sbr.rel target = $region117
    $region116: #{tpu_custom_call.1} parent=1 // pred_region
      %498 = sst [smem:[#allocation16]] [#allocation73]
      %499 = sst [smem:[#allocation17]] [#allocation72]
    $region117: #{tpu_custom_call.1} parent=1 // pred_fallthru
      _
    %501 = shalt.err (0)
    %s503 = sshll.u32 %s494, 4
    %s504 = int_to_ptr.vmem [resolvable:$true] %s503
    %506 = dma.hbm_to_vmem [thread:$0]  %s493, 16, %s504, %s495
    %s507 = sadd.s32 %s456, 3
    %s508 = sld [smem:[#allocation11 + %s507]]
    %s509 = smul.addr %s508, 16
    %s510 = scalar_lea.hbm %s4, %s509
    %s511 = scalar_lea.vmem [#allocation4], 28
    %s512 = scalar_lea.sflag [#allocation7], 28
    // Predicated region
    $region118: #{tpu_custom_call.1} parent=1 // pred_check
      _
    $region119: #{tpu_custom_call.1} parent=1 // pred_check_branch
      %514 = sbr.rel target = $region121
    $region120: #{tpu_custom_call.1} parent=1 // pred_region
      %515 = sst [smem:[#allocation16]] [#allocation75]
      %516 = sst [smem:[#allocation17]] [#allocation74]
    $region121: #{tpu_custom_call.1} parent=1 // pred_fallthru
      _
    %518 = shalt.err (0)
    %s520 = sshll.u32 %s511, 4
    %s521 = int_to_ptr.vmem [resolvable:$true] %s520
    %523 = dma.hbm_to_vmem [thread:$0]  %s510, 16, %s521, %s512
    %s524 = sadd.s32 %s25, 5
    %s525 = sld [smem:[#allocation9 + %s524]]
    %s526 = sld [smem:[#allocation10 + %s524]]
    %s527 = smul.addr %s525, 16
    %s528 = scalar_lea.hbm %s3, %s527
    %s529 = scalar_lea.vmem [#allocation2], 5
    %s530 = scalar_lea.sflag [#allocation5], 5
    // Predicated region
    $region122: #{tpu_custom_call.1} parent=1 // pred_check
      _
    $region123: #{tpu_custom_call.1} parent=1 // pred_check_branch
      %532 = sbr.rel target = $region125
    $region124: #{tpu_custom_call.1} parent=1 // pred_region
      %533 = sst [smem:[#allocation16]] [#allocation77]
      %534 = sst [smem:[#allocation17]] [#allocation76]
    $region125: #{tpu_custom_call.1} parent=1 // pred_fallthru
      _
    %536 = shalt.err (0)
    %s538 = sshll.u32 %s529, 4
    %s539 = int_to_ptr.vmem [resolvable:$true] %s538
    %541 = dma.hbm_to_vmem [thread:$0]  %s528, 16, %s539, %s530
    %s542 = smul.addr %s526, 16
    %s543 = scalar_lea.hbm %s4, %s542
    %s544 = scalar_lea.vmem [#allocation3], 5
    %s545 = scalar_lea.sflag [#allocation6], 5
    // Predicated region
    $region126: #{tpu_custom_call.1} parent=1 // pred_check
      _
    $region127: #{tpu_custom_call.1} parent=1 // pred_check_branch
      %547 = sbr.rel target = $region129
    $region128: #{tpu_custom_call.1} parent=1 // pred_region
      %548 = sst [smem:[#allocation16]] [#allocation79]
      %549 = sst [smem:[#allocation17]] [#allocation78]
    $region129: #{tpu_custom_call.1} parent=1 // pred_fallthru
      _
    %551 = shalt.err (0)
    %s553 = sshll.u32 %s544, 4
    %s554 = int_to_ptr.vmem [resolvable:$true] %s553
    %556 = dma.hbm_to_vmem [thread:$0]  %s543, 16, %s554, %s545
    %s557 = smul.u32 %s524, 128
    %s558 = sld [smem:[#allocation11 + %s557]]
    %s559 = smul.addr %s558, 16
    %s560 = scalar_lea.hbm %s4, %s559
    %s561 = scalar_lea.vmem [#allocation4], 5
    %s562 = scalar_lea.sflag [#allocation7], 5
    // Predicated region
    $region130: #{tpu_custom_call.1} parent=1 // pred_check
      _
    $region131: #{tpu_custom_call.1} parent=1 // pred_check_branch
      %564 = sbr.rel target = $region133
    $region132: #{tpu_custom_call.1} parent=1 // pred_region
      %565 = sst [smem:[#allocation16]] [#allocation81]
      %566 = sst [smem:[#allocation17]] [#allocation80]
    $region133: #{tpu_custom_call.1} parent=1 // pred_fallthru
      _
    %568 = shalt.err (0)
    %s570 = sshll.u32 %s561, 4
    %s571 = int_to_ptr.vmem [resolvable:$true] %s570
    %573 = dma.hbm_to_vmem [thread:$0]  %s560, 16, %s571, %s562
    %s574 = sadd.s32 %s557, 1
    %s575 = sld [smem:[#allocation11 + %s574]]
    %s576 = smul.addr %s575, 16
    %s577 = scalar_lea.hbm %s4, %s576
    %s578 = scalar_lea.vmem [#allocation4], 13
    %s579 = scalar_lea.sflag [#allocation7], 13
    // Predicated region
    $region134: #{tpu_custom_call.1} parent=1 // pred_check
      _
    $region135: #{tpu_custom_call.1} parent=1 // pred_check_branch
      %581 = sbr.rel target = $region137
    $region136: #{tpu_custom_call.1} parent=1 // pred_region
      %582 = sst [smem:[#allocation16]] [#allocation83]
      %583 = sst [smem:[#allocation17]] [#allocation82]
    $region137: #{tpu_custom_call.1} parent=1 // pred_fallthru
      _
    %585 = shalt.err (0)
    %s587 = sshll.u32 %s578, 4
    %s588 = int_to_ptr.vmem [resolvable:$true] %s587
    %590 = dma.hbm_to_vmem [thread:$0]  %s577, 16, %s588, %s579
    %s591 = sadd.s32 %s557, 2
    %s592 = sld [smem:[#allocation11 + %s591]]
    %s593 = smul.addr %s592, 16
    %s594 = scalar_lea.hbm %s4, %s593
    %s595 = scalar_lea.vmem [#allocation4], 21
    %s596 = scalar_lea.sflag [#allocation7], 21
    // Predicated region
    $region138: #{tpu_custom_call.1} parent=1 // pred_check
      _
    $region139: #{tpu_custom_call.1} parent=1 // pred_check_branch
      %598 = sbr.rel target = $region141
    $region140: #{tpu_custom_call.1} parent=1 // pred_region
      %599 = sst [smem:[#allocation16]] [#allocation85]
      %600 = sst [smem:[#allocation17]] [#allocation84]
    $region141: #{tpu_custom_call.1} parent=1 // pred_fallthru
      _
    %602 = shalt.err (0)
    %s604 = sshll.u32 %s595, 4
    %s605 = int_to_ptr.vmem [resolvable:$true] %s604
    %607 = dma.hbm_to_vmem [thread:$0]  %s594, 16, %s605, %s596
    %s608 = sadd.s32 %s557, 3
    %s609 = sld [smem:[#allocation11 + %s608]]
    %s610 = smul.addr %s609, 16
    %s611 = scalar_lea.hbm %s4, %s610
    %s612 = scalar_lea.vmem [#allocation4], 29
    %s613 = scalar_lea.sflag [#allocation7], 29
    // Predicated region
    $region142: #{tpu_custom_call.1} parent=1 // pred_check
      _
    $region143: #{tpu_custom_call.1} parent=1 // pred_check_branch
      %615 = sbr.rel target = $region145
    $region144: #{tpu_custom_call.1} parent=1 // pred_region
      %616 = sst [smem:[#allocation16]] [#allocation87]
      %617 = sst [smem:[#allocation17]] [#allocation86]
    $region145: #{tpu_custom_call.1} parent=1 // pred_fallthru
      _
    %619 = shalt.err (0)
    %s621 = sshll.u32 %s612, 4
    %s622 = int_to_ptr.vmem [resolvable:$true] %s621
    %624 = dma.hbm_to_vmem [thread:$0]  %s611, 16, %s622, %s613
    %s625 = sadd.s32 %s25, 6
    %s626 = sld [smem:[#allocation9 + %s625]]
    %s627 = sld [smem:[#allocation10 + %s625]]
    %s628 = smul.addr %s626, 16
    %s629 = scalar_lea.hbm %s3, %s628
    %s630 = scalar_lea.vmem [#allocation2], 6
    %s631 = scalar_lea.sflag [#allocation5], 6
    // Predicated region
    $region146: #{tpu_custom_call.1} parent=1 // pred_check
      _
    $region147: #{tpu_custom_call.1} parent=1 // pred_check_branch
      %633 = sbr.rel target = $region149
    $region148: #{tpu_custom_call.1} parent=1 // pred_region
      %634 = sst [smem:[#allocation16]] [#allocation89]
      %635 = sst [smem:[#allocation17]] [#allocation88]
    $region149: #{tpu_custom_call.1} parent=1 // pred_fallthru
      _
    %637 = shalt.err (0)
    %s639 = sshll.u32 %s630, 4
    %s640 = int_to_ptr.vmem [resolvable:$true] %s639
    %642 = dma.hbm_to_vmem [thread:$0]  %s629, 16, %s640, %s631
    %s643 = smul.addr %s627, 16
    %s644 = scalar_lea.hbm %s4, %s643
    %s645 = scalar_lea.vmem [#allocation3], 6
    %s646 = scalar_lea.sflag [#allocation6], 6
    // Predicated region
    $region150: #{tpu_custom_call.1} parent=1 // pred_check
      _
    $region151: #{tpu_custom_call.1} parent=1 // pred_check_branch
      %648 = sbr.rel target = $region153
    $region152: #{tpu_custom_call.1} parent=1 // pred_region
      %649 = sst [smem:[#allocation16]] [#allocation91]
      %650 = sst [smem:[#allocation17]] [#allocation90]
    $region153: #{tpu_custom_call.1} parent=1 // pred_fallthru
      _
    %652 = shalt.err (0)
    %s654 = sshll.u32 %s645, 4
    %s655 = int_to_ptr.vmem [resolvable:$true] %s654
    %657 = dma.hbm_to_vmem [thread:$0]  %s644, 16, %s655, %s646
    %s658 = smul.u32 %s625, 128
    %s659 = sld [smem:[#allocation11 + %s658]]
    %s660 = smul.addr %s659, 16
    %s661 = scalar_lea.hbm %s4, %s660
    %s662 = scalar_lea.vmem [#allocation4], 6
    %s663 = scalar_lea.sflag [#allocation7], 6
    // Predicated region
    $region154: #{tpu_custom_call.1} parent=1 // pred_check
      _
    $region155: #{tpu_custom_call.1} parent=1 // pred_check_branch
      %665 = sbr.rel target = $region157
    $region156: #{tpu_custom_call.1} parent=1 // pred_region
      %666 = sst [smem:[#allocation16]] [#allocation93]
      %667 = sst [smem:[#allocation17]] [#allocation92]
    $region157: #{tpu_custom_call.1} parent=1 // pred_fallthru
      _
    %669 = shalt.err (0)
    %s671 = sshll.u32 %s662, 4
    %s672 = int_to_ptr.vmem [resolvable:$true] %s671
    %674 = dma.hbm_to_vmem [thread:$0]  %s661, 16, %s672, %s663
    %s675 = sadd.s32 %s658, 1
    %s676 = sld [smem:[#allocation11 + %s675]]
    %s677 = smul.addr %s676, 16
    %s678 = scalar_lea.hbm %s4, %s677
    %s679 = scalar_lea.vmem [#allocation4], 14
    %s680 = scalar_lea.sflag [#allocation7], 14
    // Predicated region
    $region158: #{tpu_custom_call.1} parent=1 // pred_check
      _
    $region159: #{tpu_custom_call.1} parent=1 // pred_check_branch
      %682 = sbr.rel target = $region161
    $region160: #{tpu_custom_call.1} parent=1 // pred_region
      %683 = sst [smem:[#allocation16]] [#allocation95]
      %684 = sst [smem:[#allocation17]] [#allocation94]
    $region161: #{tpu_custom_call.1} parent=1 // pred_fallthru
      _
    %686 = shalt.err (0)
    %s688 = sshll.u32 %s679, 4
    %s689 = int_to_ptr.vmem [resolvable:$true] %s688
    %691 = dma.hbm_to_vmem [thread:$0]  %s678, 16, %s689, %s680
    %s692 = sadd.s32 %s658, 2
    %s693 = sld [smem:[#allocation11 + %s692]]
    %s694 = smul.addr %s693, 16
    %s695 = scalar_lea.hbm %s4, %s694
    %s696 = scalar_lea.vmem [#allocation4], 22
    %s697 = scalar_lea.sflag [#allocation7], 22
    // Predicated region
    $region162: #{tpu_custom_call.1} parent=1 // pred_check
      _
    $region163: #{tpu_custom_call.1} parent=1 // pred_check_branch
      %699 = sbr.rel target = $region165
    $region164: #{tpu_custom_call.1} parent=1 // pred_region
      %700 = sst [smem:[#allocation16]] [#allocation97]
      %701 = sst [smem:[#allocation17]] [#allocation96]
    $region165: #{tpu_custom_call.1} parent=1 // pred_fallthru
      _
    %703 = shalt.err (0)
    %s705 = sshll.u32 %s696, 4
    %s706 = int_to_ptr.vmem [resolvable:$true] %s705
    %708 = dma.hbm_to_vmem [thread:$0]  %s695, 16, %s706, %s697
    %s709 = sadd.s32 %s658, 3
    %s710 = sld [smem:[#allocation11 + %s709]]
    %s711 = smul.addr %s710, 16
    %s712 = scalar_lea.hbm %s4, %s711
    %s713 = scalar_lea.vmem [#allocation4], 30
    %s714 = scalar_lea.sflag [#allocation7], 30
    // Predicated region
    $region166: #{tpu_custom_call.1} parent=1 // pred_check
      _
    $region167: #{tpu_custom_call.1} parent=1 // pred_check_branch
      %716 = sbr.rel target = $region169
    $region168: #{tpu_custom_call.1} parent=1 // pred_region
      %717 = sst [smem:[#allocation16]] [#allocation99]
      %718 = sst [smem:[#allocation17]] [#allocation98]
    $region169: #{tpu_custom_call.1} parent=1 // pred_fallthru
      _
    %720 = shalt.err (0)
    %s722 = sshll.u32 %s713, 4
    %s723 = int_to_ptr.vmem [resolvable:$true] %s722
    %725 = dma.hbm_to_vmem [thread:$0]  %s712, 16, %s723, %s714
    %s726 = sadd.s32 %s25, 7
    %s727 = sld [smem:[#allocation9 + %s726]]
    %s728 = sld [smem:[#allocation10 + %s726]]
    %s729 = smul.addr %s727, 16
    %s730 = scalar_lea.hbm %s3, %s729
    %s731 = scalar_lea.vmem [#allocation2], 7
    %s732 = scalar_lea.sflag [#allocation5], 7
    // Predicated region
    $region170: #{tpu_custom_call.1} parent=1 // pred_check
      _
    $region171: #{tpu_custom_call.1} parent=1 // pred_check_branch
      %734 = sbr.rel target = $region173
    $region172: #{tpu_custom_call.1} parent=1 // pred_region
      %735 = sst [smem:[#allocation16]] [#allocation101]
      %736 = sst [smem:[#allocation17]] [#allocation100]
    $region173: #{tpu_custom_call.1} parent=1 // pred_fallthru
      _
    %738 = shalt.err (0)
    %s740 = sshll.u32 %s731, 4
    %s741 = int_to_ptr.vmem [resolvable:$true] %s740
    %743 = dma.hbm_to_vmem [thread:$0]  %s730, 16, %s741, %s732
    %s744 = smul.addr %s728, 16
    %s745 = scalar_lea.hbm %s4, %s744
    %s746 = scalar_lea.vmem [#allocation3], 7
    %s747 = scalar_lea.sflag [#allocation6], 7
    // Predicated region
    $region174: #{tpu_custom_call.1} parent=1 // pred_check
      _
    $region175: #{tpu_custom_call.1} parent=1 // pred_check_branch
      %749 = sbr.rel target = $region177
    $region176: #{tpu_custom_call.1} parent=1 // pred_region
      %750 = sst [smem:[#allocation16]] [#allocation103]
      %751 = sst [smem:[#allocation17]] [#allocation102]
    $region177: #{tpu_custom_call.1} parent=1 // pred_fallthru
      _
    %753 = shalt.err (0)
    %s755 = sshll.u32 %s746, 4
    %s756 = int_to_ptr.vmem [resolvable:$true] %s755
    %758 = dma.hbm_to_vmem [thread:$0]  %s745, 16, %s756, %s747
    %s759 = smul.u32 %s726, 128
    %s760 = sld [smem:[#allocation11 + %s759]]
    %s761 = smul.addr %s760, 16
    %s762 = scalar_lea.hbm %s4, %s761
    %s763 = scalar_lea.vmem [#allocation4], 7
    %s764 = scalar_lea.sflag [#allocation7], 7
    // Predicated region
    $region178: #{tpu_custom_call.1} parent=1 // pred_check
      _
    $region179: #{tpu_custom_call.1} parent=1 // pred_check_branch
      %766 = sbr.rel target = $region181
    $region180: #{tpu_custom_call.1} parent=1 // pred_region
      %767 = sst [smem:[#allocation16]] [#allocation105]
      %768 = sst [smem:[#allocation17]] [#allocation104]
    $region181: #{tpu_custom_call.1} parent=1 // pred_fallthru
      _
    %770 = shalt.err (0)
    %s772 = sshll.u32 %s763, 4
    %s773 = int_to_ptr.vmem [resolvable:$true] %s772
    %775 = dma.hbm_to_vmem [thread:$0]  %s762, 16, %s773, %s764
    %s776 = sadd.s32 %s759, 1
    %s777 = sld [smem:[#allocation11 + %s776]]
    %s778 = smul.addr %s777, 16
    %s779 = scalar_lea.hbm %s4, %s778
    %s780 = scalar_lea.vmem [#allocation4], 15
    %s781 = scalar_lea.sflag [#allocation7], 15
    // Predicated region
    $region182: #{tpu_custom_call.1} parent=1 // pred_check
      _
    $region183: #{tpu_custom_call.1} parent=1 // pred_check_branch
      %783 = sbr.rel target = $region185
    $region184: #{tpu_custom_call.1} parent=1 // pred_region
      %784 = sst [smem:[#allocation16]] [#allocation107]
      %785 = sst [smem:[#allocation17]] [#allocation106]
    $region185: #{tpu_custom_call.1} parent=1 // pred_fallthru
      _
    %787 = shalt.err (0)
    %s789 = sshll.u32 %s780, 4
    %s790 = int_to_ptr.vmem [resolvable:$true] %s789
    %792 = dma.hbm_to_vmem [thread:$0]  %s779, 16, %s790, %s781
    %s793 = sadd.s32 %s759, 2
    %s794 = sld [smem:[#allocation11 + %s793]]
    %s795 = smul.addr %s794, 16
    %s796 = scalar_lea.hbm %s4, %s795
    %s797 = scalar_lea.vmem [#allocation4], 23
    %s798 = scalar_lea.sflag [#allocation7], 23
    // Predicated region
    $region186: #{tpu_custom_call.1} parent=1 // pred_check
      _
    $region187: #{tpu_custom_call.1} parent=1 // pred_check_branch
      %800 = sbr.rel target = $region189
    $region188: #{tpu_custom_call.1} parent=1 // pred_region
      %801 = sst [smem:[#allocation16]] [#allocation109]
      %802 = sst [smem:[#allocation17]] [#allocation108]
    $region189: #{tpu_custom_call.1} parent=1 // pred_fallthru
      _
    %804 = shalt.err (0)
    %s806 = sshll.u32 %s797, 4
    %s807 = int_to_ptr.vmem [resolvable:$true] %s806
    %809 = dma.hbm_to_vmem [thread:$0]  %s796, 16, %s807, %s798
    %s810 = sadd.s32 %s759, 3
    %s811 = sld [smem:[#allocation11 + %s810]]
    %s812 = smul.addr %s811, 16
    %s813 = scalar_lea.hbm %s4, %s812
    %s814 = scalar_lea.vmem [#allocation4], 31
    %s815 = scalar_lea.sflag [#allocation7], 31
    // Predicated region
    $region190: #{tpu_custom_call.1} parent=1 // pred_check
      _
    $region191: #{tpu_custom_call.1} parent=1 // pred_check_branch
      %817 = sbr.rel target = $region193
    $region192: #{tpu_custom_call.1} parent=1 // pred_region
      %818 = sst [smem:[#allocation16]] [#allocation111]
      %819 = sst [smem:[#allocation17]] [#allocation110]
    $region193: #{tpu_custom_call.1} parent=1 // pred_fallthru
      _
    %821 = shalt.err (0)
    %s823 = sshll.u32 %s814, 4
    %s824 = int_to_ptr.vmem [resolvable:$true] %s823
    %826 = dma.hbm_to_vmem [thread:$0]  %s813, 16, %s824, %s815
    %s827 = smul.u32 1, 1
    %s828 = sshll.u32 %s827, 4
    %829 = dma.done [#allocation5], %s828
    %s830 = sshll.u32 %s827, 4
    %831 = dma.done [#allocation6], %s830
    %s832 = sshll.u32 %s827, 4
    %833 = dma.done [#allocation7], %s832
    %s834 = sshll.u32 %s827, 4
    %835 = dma.done %s74, %s834
    %s836 = sshll.u32 %s827, 4
    %837 = dma.done %s91, %s836
    %s838 = sshll.u32 %s827, 4
    %839 = dma.done %s108, %s838
    %s840 = sshll.u32 %s827, 4
    %841 = dma.done %s126, %s840
    %s842 = sshll.u32 %s827, 4
    %843 = dma.done %s141, %s842
    %s844 = sshll.u32 %s827, 4
    %845 = dma.done %s158, %s844
    %s846 = sshll.u32 %s827, 4
    %847 = dma.done %s175, %s846
    %s848 = sshll.u32 %s827, 4
    %849 = dma.done %s192, %s848
    %s850 = sshll.u32 %s827, 4
    %851 = dma.done %s209, %s850
    %s852 = sshll.u32 %s827, 4
    %853 = dma.done %s227, %s852
    %s854 = sshll.u32 %s827, 4
    %855 = dma.done %s242, %s854
    %s856 = sshll.u32 %s827, 4
    %857 = dma.done %s259, %s856
    %s858 = sshll.u32 %s827, 4
    %859 = dma.done %s276, %s858
    %s860 = sshll.u32 %s827, 4
    %861 = dma.done %s293, %s860
    %s862 = sshll.u32 %s827, 4
    %863 = dma.done %s310, %s862
    %s864 = sshll.u32 %s827, 4
    %865 = dma.done %s328, %s864
    %s866 = sshll.u32 %s827, 4
    %867 = dma.done %s343, %s866
    %s868 = sshll.u32 %s827, 4
    %869 = dma.done %s360, %s868
    %s870 = sshll.u32 %s827, 4
    %871 = dma.done %s377, %s870
    %s872 = sshll.u32 %s827, 4
    %873 = dma.done %s394, %s872
    %s874 = sshll.u32 %s827, 4
    %875 = dma.done %s411, %s874
    %s876 = sshll.u32 %s827, 4
    %877 = dma.done %s429, %s876
    %s878 = sshll.u32 %s827, 4
    %879 = dma.done %s444, %s878
    %s880 = sshll.u32 %s827, 4
    %881 = dma.done %s461, %s880
    %s882 = sshll.u32 %s827, 4
    %883 = dma.done %s478, %s882
    %s884 = sshll.u32 %s827, 4
    %885 = dma.done %s495, %s884
    %s886 = sshll.u32 %s827, 4
    %887 = dma.done %s512, %s886
    %s888 = sshll.u32 %s827, 4
    %889 = dma.done %s530, %s888
    %s890 = sshll.u32 %s827, 4
    %891 = dma.done %s545, %s890
    %s892 = sshll.u32 %s827, 4
    %893 = dma.done %s562, %s892
    %s894 = sshll.u32 %s827, 4
    %895 = dma.done %s579, %s894
    %s896 = sshll.u32 %s827, 4
    %897 = dma.done %s596, %s896
    %s898 = sshll.u32 %s827, 4
    %899 = dma.done %s613, %s898
    %s900 = sshll.u32 %s827, 4
    %901 = dma.done %s631, %s900
    %s902 = sshll.u32 %s827, 4
    %903 = dma.done %s646, %s902
    %s904 = sshll.u32 %s827, 4
    %905 = dma.done %s663, %s904
    %s906 = sshll.u32 %s827, 4
    %907 = dma.done %s680, %s906
    %s908 = sshll.u32 %s827, 4
    %909 = dma.done %s697, %s908
    %s910 = sshll.u32 %s827, 4
    %911 = dma.done %s714, %s910
    %s912 = sshll.u32 %s827, 4
    %913 = dma.done %s732, %s912
    %s914 = sshll.u32 %s827, 4
    %915 = dma.done %s747, %s914
    %s916 = sshll.u32 %s827, 4
    %917 = dma.done %s764, %s916
    %s918 = sshll.u32 %s827, 4
    %919 = dma.done %s781, %s918
    %s920 = sshll.u32 %s827, 4
    %921 = dma.done %s798, %s920
    %s922 = sshll.u32 %s827, 4
    %923 = dma.done %s815, %s922
    %v924 = vld [vmem:[#allocation2] sm:$0xff]
    %v925 = vld [vmem:[#allocation3] sm:$0xff]
    %v926 = vld [vmem:[#allocation4] sm:$0xff]
    %v927 = vld [vmem:[#allocation4 + $0x8] sm:$0xff]
    %v928 = vld [vmem:[#allocation4 + $0x10] sm:$0xff]
    %v929 = vld [vmem:[#allocation4 + $0x18] sm:$0xff]
    %v930 = vadd.f32 %v926, %v927
    %v931 = vadd.f32 %v930, %v928
    %v932 = vadd.f32 %v931, %v929
    %v933 = vmul.f32 %v924, %v925
    %934 = vadd.xlane.f32.xlu0 %v933
    %v935 = vpop.xlane.xlu0 %934
    %v936 = vmul.f32 %v924, %v932
    %937 = vadd.xlane.f32.xlu0 %v936
    %v938 = vpop.xlane.xlu0 %937
    %v939 = vmin.f32 %v935, 0.0
    %v940 = vand.u32 2147483647, %v935
    %v941 = vsub.f32 0.0, %v940
    %v942 = vmul.f32 %v941, 1.442695
    %v943 = vpow.pop %v942
    %v944 = vadd.f32 %v943, 1.0
    %v945 = vlog2.pop %v944
    %v946 = vmul.f32 %v945, 0.6931472
    %v947 = vmul.f32 -0.5, %v943
    %v948 = vadd.f32 %v947, 1.0
    %v949 = vmul.f32 %v948, %v943
    %v950 = vand.u32 2147483647, %v943
    %vm951 = vcmp.lt.f32.partialorder %v950, 0.0004427343
    %v952 = vsel %vm951, %v949, %v946
    %v953 = vsub.f32 %v939, %v952
    %v954 = vsub.f32 0.0, %v938
    %v955 = vmin.f32 %v954, 0.0
    %v956 = vand.u32 2147483647, %v954
    %v957 = vsub.f32 0.0, %v956
    %v958 = vmul.f32 %v957, 1.442695
    %v959 = vpow.pop %v958
    %v960 = vadd.f32 %v959, 1.0
    %v961 = vlog2.pop %v960
    %v962 = vmul.f32 %v961, 0.6931472
    %v963 = vmul.f32 -0.5, %v959
    %v964 = vadd.f32 %v963, 1.0
    %v965 = vmul.f32 %v964, %v959
    %v966 = vand.u32 2147483647, %v959
    %vm967 = vcmp.lt.f32.partialorder %v966, 0.0004427343
    %v968 = vsel %vm967, %v965, %v962
    %v969 = vsub.f32 %v955, %v968
    %v970 = vadd.f32 %v953, %v969
    %v971 = vlaneseq
    %v972 = vshrl.u32 %v971, 7
    %v973 = vstv %s25
    %v974 = vadd.s32 %v973, %v972
    %vm975 = vcmp.lt.s32.totalorder %v974, 8
    %v976 = vsel %vm975, %v970, 0.0
    %v977 = vrot.slane %v976, 4
    %v978 = vadd.f32 %v976, %v977
    %v979 = vrot.slane %v978, 2
    %v980 = vadd.f32 %v978, %v979
    %v981 = vrot.slane %v980, 1
    %v982 = vadd.f32 %v980, %v981
    %v983 = vsub.f32 0.0, %v982
    %vm984 = vcmask 0
    %985 = vst.msk [vmem:[#allocation12] sm:$0x1] %vm984, %v983
    // Predicated region
    $region194: #{tpu_custom_call.1} parent=1 // pred_check
      _
    $region195: #{tpu_custom_call.1} parent=1 // pred_check_branch
      %987 = sbr.rel (0) target = $region197
    $region196: #{tpu_custom_call.1} parent=1 // pred_region
      %s989 = ssub.s32 16, 16
      %990 = vsyncadd [#allocation13], %s989
      %s992 = sshll.u32 [#allocation12], 4
      %s993 = int_to_ptr.vmem [resolvable:$true] %s992
      %995 = dma.vmem_to_hbm [thread:$0]  %s993, 16, %s5, [#allocation13]
    $region197: #{tpu_custom_call.1} parent=1 // pred_fallthru
      _
    // Predicated region
    $region198: #{tpu_custom_call.1} parent=1 // pred_check
      _
    $region199: #{tpu_custom_call.1} parent=1 // pred_check_branch
      %997 = sbr.rel (0) target = $region201
    $region200: #{tpu_custom_call.1} parent=1 // pred_region
      %998 = dma.done [#allocation13], 16
    $region201: #{tpu_custom_call.1} parent=1 // pred_fallthru
      _
    %999 = vsyncpa [#allocation13], 1
  %1000 = vsyncmov [#allocation5]
  %s1001 = vpop.sfrf %1000
  %p1002 = scmp.eq.s32.totalorder %s1001, 0
  %p1003 = pneg %p1002
  %1005 = shalt.err (%p1003)
  %s1006 = scalar_lea.sflag [#allocation5], 1
  %1007 = vsyncmov %s1006
  %s1008 = vpop.sfrf %1007
  %p1009 = scmp.eq.s32.totalorder %s1008, 0
  %p1010 = pneg %p1009
  %1012 = shalt.err (%p1010)
  %s1013 = scalar_lea.sflag [#allocation5], 2
  %1014 = vsyncmov %s1013
  %s1015 = vpop.sfrf %1014
  %p1016 = scmp.eq.s32.totalorder %s1015, 0
  %p1017 = pneg %p1016
  %1019 = shalt.err (%p1017)
  %s1020 = scalar_lea.sflag [#allocation5], 3
  %1021 = vsyncmov %s1020
  %s1022 = vpop.sfrf %1021
  %p1023 = scmp.eq.s32.totalorder %s1022, 0
  %p1024 = pneg %p1023
  %1026 = shalt.err (%p1024)
  %s1027 = scalar_lea.sflag [#allocation5], 4
  %1028 = vsyncmov %s1027
  %s1029 = vpop.sfrf %1028
  %p1030 = scmp.eq.s32.totalorder %s1029, 0
  %p1031 = pneg %p1030
  %1033 = shalt.err (%p1031)
  %s1034 = scalar_lea.sflag [#allocation5], 5
  %1035 = vsyncmov %s1034
  %s1036 = vpop.sfrf %1035
  %p1037 = scmp.eq.s32.totalorder %s1036, 0
  %p1038 = pneg %p1037
  %1040 = shalt.err (%p1038)
  %s1041 = scalar_lea.sflag [#allocation5], 6
  %1042 = vsyncmov %s1041
  %s1043 = vpop.sfrf %1042
  %p1044 = scmp.eq.s32.totalorder %s1043, 0
  %p1045 = pneg %p1044
  %1047 = shalt.err (%p1045)
  %s1048 = scalar_lea.sflag [#allocation5], 7
  %1049 = vsyncmov %s1048
  %s1050 = vpop.sfrf %1049
  %p1051 = scmp.eq.s32.totalorder %s1050, 0
  %p1052 = pneg %p1051
  %1054 = shalt.err (%p1052)
  %1055 = vsyncmov [#allocation6]
  %s1056 = vpop.sfrf %1055
  %p1057 = scmp.eq.s32.totalorder %s1056, 0
  %p1058 = pneg %p1057
  %1060 = shalt.err (%p1058)
  %s1061 = scalar_lea.sflag [#allocation6], 1
  %1062 = vsyncmov %s1061
  %s1063 = vpop.sfrf %1062
  %p1064 = scmp.eq.s32.totalorder %s1063, 0
  %p1065 = pneg %p1064
  %1067 = shalt.err (%p1065)
  %s1068 = scalar_lea.sflag [#allocation6], 2
  %1069 = vsyncmov %s1068
  %s1070 = vpop.sfrf %1069
  %p1071 = scmp.eq.s32.totalorder %s1070, 0
  %p1072 = pneg %p1071
  %1074 = shalt.err (%p1072)
  %s1075 = scalar_lea.sflag [#allocation6], 3
  %1076 = vsyncmov %s1075
  %s1077 = vpop.sfrf %1076
  %p1078 = scmp.eq.s32.totalorder %s1077, 0
  %p1079 = pneg %p1078
  %1081 = shalt.err (%p1079)
  %s1082 = scalar_lea.sflag [#allocation6], 4
  %1083 = vsyncmov %s1082
  %s1084 = vpop.sfrf %1083
  %p1085 = scmp.eq.s32.totalorder %s1084, 0
  %p1086 = pneg %p1085
  %1088 = shalt.err (%p1086)
  %s1089 = scalar_lea.sflag [#allocation6], 5
  %1090 = vsyncmov %s1089
  %s1091 = vpop.sfrf %1090
  %p1092 = scmp.eq.s32.totalorder %s1091, 0
  %p1093 = pneg %p1092
  %1095 = shalt.err (%p1093)
  %s1096 = scalar_lea.sflag [#allocation6], 6
  %1097 = vsyncmov %s1096
  %s1098 = vpop.sfrf %1097
  %p1099 = scmp.eq.s32.totalorder %s1098, 0
  %p1100 = pneg %p1099
  %1102 = shalt.err (%p1100)
  %s1103 = scalar_lea.sflag [#allocation6], 7
  %1104 = vsyncmov %s1103
  %s1105 = vpop.sfrf %1104
  %p1106 = scmp.eq.s32.totalorder %s1105, 0
  %p1107 = pneg %p1106
  %1109 = shalt.err (%p1107)
  %1110 = vsyncmov [#allocation7]
  %s1111 = vpop.sfrf %1110
  %p1112 = scmp.eq.s32.totalorder %s1111, 0
  %p1113 = pneg %p1112
  %1115 = shalt.err (%p1113)
  %s1116 = scalar_lea.sflag [#allocation7], 1
  %1117 = vsyncmov %s1116
  %s1118 = vpop.sfrf %1117
  %p1119 = scmp.eq.s32.totalorder %s1118, 0
  %p1120 = pneg %p1119
  %1122 = shalt.err (%p1120)
  %s1123 = scalar_lea.sflag [#allocation7], 2
  %1124 = vsyncmov %s1123
  %s1125 = vpop.sfrf %1124
  %p1126 = scmp.eq.s32.totalorder %s1125, 0
  %p1127 = pneg %p1126
  %1129 = shalt.err (%p1127)
  %s1130 = scalar_lea.sflag [#allocation7], 3
  %1131 = vsyncmov %s1130
  %s1132 = vpop.sfrf %1131
  %p1133 = scmp.eq.s32.totalorder %s1132, 0
  %p1134 = pneg %p1133
  %1136 = shalt.err (%p1134)
  %s1137 = scalar_lea.sflag [#allocation7], 4
  %1138 = vsyncmov %s1137
  %s1139 = vpop.sfrf %1138
  %p1140 = scmp.eq.s32.totalorder %s1139, 0
  %p1141 = pneg %p1140
  %1143 = shalt.err (%p1141)
  %s1144 = scalar_lea.sflag [#allocation7], 5
  %1145 = vsyncmov %s1144
  %s1146 = vpop.sfrf %1145
  %p1147 = scmp.eq.s32.totalorder %s1146, 0
  %p1148 = pneg %p1147
  %1150 = shalt.err (%p1148)
  %s1151 = scalar_lea.sflag [#allocation7], 6
  %1152 = vsyncmov %s1151
  %s1153 = vpop.sfrf %1152
  %p1154 = scmp.eq.s32.totalorder %s1153, 0
  %p1155 = pneg %p1154
  %1157 = shalt.err (%p1155)
  %s1158 = scalar_lea.sflag [#allocation7], 7
  %1159 = vsyncmov %s1158
  %s1160 = vpop.sfrf %1159
  %p1161 = scmp.eq.s32.totalorder %s1160, 0
  %p1162 = pneg %p1161
  %1164 = shalt.err (%p1162)
  %s1165 = scalar_lea.sflag [#allocation7], 8
  %1166 = vsyncmov %s1165
  %s1167 = vpop.sfrf %1166
  %p1168 = scmp.eq.s32.totalorder %s1167, 0
  %p1169 = pneg %p1168
  %1171 = shalt.err (%p1169)
  %s1172 = scalar_lea.sflag [#allocation7], 9
  %1173 = vsyncmov %s1172
  %s1174 = vpop.sfrf %1173
  %p1175 = scmp.eq.s32.totalorder %s1174, 0
  %p1176 = pneg %p1175
  %1178 = shalt.err (%p1176)
  %s1179 = scalar_lea.sflag [#allocation7], 10
  %1180 = vsyncmov %s1179
  %s1181 = vpop.sfrf %1180
  %p1182 = scmp.eq.s32.totalorder %s1181, 0
  %p1183 = pneg %p1182
  %1185 = shalt.err (%p1183)
  %s1186 = scalar_lea.sflag [#allocation7], 11
  %1187 = vsyncmov %s1186
  %s1188 = vpop.sfrf %1187
  %p1189 = scmp.eq.s32.totalorder %s1188, 0
  %p1190 = pneg %p1189
  %1192 = shalt.err (%p1190)
  %s1193 = scalar_lea.sflag [#allocation7], 12
  %1194 = vsyncmov %s1193
  %s1195 = vpop.sfrf %1194
  %p1196 = scmp.eq.s32.totalorder %s1195, 0
  %p1197 = pneg %p1196
  %1199 = shalt.err (%p1197)
  %s1200 = scalar_lea.sflag [#allocation7], 13
  %1201 = vsyncmov %s1200
  %s1202 = vpop.sfrf %1201
  %p1203 = scmp.eq.s32.totalorder %s1202, 0
  %p1204 = pneg %p1203
  %1206 = shalt.err (%p1204)
  %s1207 = scalar_lea.sflag [#allocation7], 14
  %1208 = vsyncmov %s1207
  %s1209 = vpop.sfrf %1208
  %p1210 = scmp.eq.s32.totalorder %s1209, 0
  %p1211 = pneg %p1210
  %1213 = shalt.err (%p1211)
  %s1214 = scalar_lea.sflag [#allocation7], 15
  %1215 = vsyncmov %s1214
  %s1216 = vpop.sfrf %1215
  %p1217 = scmp.eq.s32.totalorder %s1216, 0
  %p1218 = pneg %p1217
  %1220 = shalt.err (%p1218)
  %s1221 = scalar_lea.sflag [#allocation7], 16
  %1222 = vsyncmov %s1221
  %s1223 = vpop.sfrf %1222
  %p1224 = scmp.eq.s32.totalorder %s1223, 0
  %p1225 = pneg %p1224
  %1227 = shalt.err (%p1225)
  %s1228 = scalar_lea.sflag [#allocation7], 17
  %1229 = vsyncmov %s1228
  %s1230 = vpop.sfrf %1229
  %p1231 = scmp.eq.s32.totalorder %s1230, 0
  %p1232 = pneg %p1231
  %1234 = shalt.err (%p1232)
  %s1235 = scalar_lea.sflag [#allocation7], 18
  %1236 = vsyncmov %s1235
  %s1237 = vpop.sfrf %1236
  %p1238 = scmp.eq.s32.totalorder %s1237, 0
  %p1239 = pneg %p1238
  %1241 = shalt.err (%p1239)
  %s1242 = scalar_lea.sflag [#allocation7], 19
  %1243 = vsyncmov %s1242
  %s1244 = vpop.sfrf %1243
  %p1245 = scmp.eq.s32.totalorder %s1244, 0
  %p1246 = pneg %p1245
  %1248 = shalt.err (%p1246)
  %s1249 = scalar_lea.sflag [#allocation7], 20
  %1250 = vsyncmov %s1249
  %s1251 = vpop.sfrf %1250
  %p1252 = scmp.eq.s32.totalorder %s1251, 0
  %p1253 = pneg %p1252
  %1255 = shalt.err (%p1253)
  %s1256 = scalar_lea.sflag [#allocation7], 21
  %1257 = vsyncmov %s1256
  %s1258 = vpop.sfrf %1257
  %p1259 = scmp.eq.s32.totalorder %s1258, 0
  %p1260 = pneg %p1259
  %1262 = shalt.err (%p1260)
  %s1263 = scalar_lea.sflag [#allocation7], 22
  %1264 = vsyncmov %s1263
  %s1265 = vpop.sfrf %1264
  %p1266 = scmp.eq.s32.totalorder %s1265, 0
  %p1267 = pneg %p1266
  %1269 = shalt.err (%p1267)
  %s1270 = scalar_lea.sflag [#allocation7], 23
  %1271 = vsyncmov %s1270
  %s1272 = vpop.sfrf %1271
  %p1273 = scmp.eq.s32.totalorder %s1272, 0
  %p1274 = pneg %p1273
  %1276 = shalt.err (%p1274)
  %s1277 = scalar_lea.sflag [#allocation7], 24
  %1278 = vsyncmov %s1277
  %s1279 = vpop.sfrf %1278
  %p1280 = scmp.eq.s32.totalorder %s1279, 0
  %p1281 = pneg %p1280
  %1283 = shalt.err (%p1281)
  %s1284 = scalar_lea.sflag [#allocation7], 25
  %1285 = vsyncmov %s1284
  %s1286 = vpop.sfrf %1285
  %p1287 = scmp.eq.s32.totalorder %s1286, 0
  %p1288 = pneg %p1287
  %1290 = shalt.err (%p1288)
  %s1291 = scalar_lea.sflag [#allocation7], 26
  %1292 = vsyncmov %s1291
  %s1293 = vpop.sfrf %1292
  %p1294 = scmp.eq.s32.totalorder %s1293, 0
  %p1295 = pneg %p1294
  %1297 = shalt.err (%p1295)
  %s1298 = scalar_lea.sflag [#allocation7], 27
  %1299 = vsyncmov %s1298
  %s1300 = vpop.sfrf %1299
  %p1301 = scmp.eq.s32.totalorder %s1300, 0
  %p1302 = pneg %p1301
  %1304 = shalt.err (%p1302)
  %s1305 = scalar_lea.sflag [#allocation7], 28
  %1306 = vsyncmov %s1305
  %s1307 = vpop.sfrf %1306
  %p1308 = scmp.eq.s32.totalorder %s1307, 0
  %p1309 = pneg %p1308
  %1311 = shalt.err (%p1309)
  %s1312 = scalar_lea.sflag [#allocation7], 29
  %1313 = vsyncmov %s1312
  %s1314 = vpop.sfrf %1313
  %p1315 = scmp.eq.s32.totalorder %s1314, 0
  %p1316 = pneg %p1315
  %1318 = shalt.err (%p1316)
  %s1319 = scalar_lea.sflag [#allocation7], 30
  %1320 = vsyncmov %s1319
  %s1321 = vpop.sfrf %1320
  %p1322 = scmp.eq.s32.totalorder %s1321, 0
  %p1323 = pneg %p1322
  %1325 = shalt.err (%p1323)
  %s1326 = scalar_lea.sflag [#allocation7], 31
  %1327 = vsyncmov %s1326
  %s1328 = vpop.sfrf %1327
  %p1329 = scmp.eq.s32.totalorder %s1328, 0
  %p1330 = pneg %p1329
  %1332 = shalt.err (%p1330)

</llo_original>
